<compile_context>
chip_gen: v5e
topology: v5e:2x2
jax: 0.10.0
libtpu: 0.0.40
codegen_flags: <defaults>
</compile_context>

<pallas_src>
import math

import jax
import jax.numpy as jnp
from jax.experimental import pallas as pl
from jax.experimental.pallas import tpu as pltpu

BN_EPS = 1e-5
COMPUTE_DTYPE = jnp.bfloat16      # MXU operand dtype; accumulation / stats stay f32
OUT_DTYPE = jnp.bfloat16          # pass-2 HBM slab dtype (halves output traffic)
LANE = 128
SUBLANE_PACK = 16                 # bf16 native sublane tile -> keep all row offsets aligned
TILE_TARGET = 1024                # target rows per grid step
N_STATS_PARTS = 2                 # partial-stats shards for pass 1 (v7x: 2 TensorCores)
VMEM_LIMIT_BYTES = 48 * 1024 * 1024


def _make_kernels(wp):
    """Build kernel bodies, closing over the (static) padded row pitch wp."""

    def conv_tile(xb_ref, xh_ref, w_ref):
        """3x3 conv on one tile: three K=3*Cin GEMMs at sublane-aligned row shifts."""
        xb = xb_ref[...]                        # (tile_m, 3*Cin) bf16
        xh = xh_ref[...]                        # (halo = 2*wp, 3*Cin) bf16
        y = jnp.dot(xb, w_ref[0], preferred_element_type=jnp.float32)
        mid = jnp.concatenate([xb[wp:, :], xh[:wp, :]], axis=0)
        y = y + jnp.dot(mid, w_ref[1], preferred_element_type=jnp.float32)
        bot = jnp.concatenate([xb[2 * wp:, :], xh], axis=0)
        y = y + jnp.dot(bot, w_ref[2], preferred_element_type=jnp.float32)
        return y                                # (tile_m, cout_pad) f32

    def stats_kernel(mask_ref, xb_ref, xh_ref, w_ref, stats_ref):
        @pl.when(pl.program_id(1) == 0)
        def _init():
            stats_ref[...] = jnp.zeros_like(stats_ref)

        y = conv_tile(xb_ref, xh_ref, w_ref)
        m = mask_ref[...]                       # (1, tile_m) f32, lane-dense
        # Masked per-channel sums on the MXU: sum(valid y), sum(valid y^2).
        stats_ref[0:1, :] += jnp.dot(m, y, preferred_element_type=jnp.float32)
        stats_ref[1:2, :] += jnp.dot(m, y * y, preferred_element_type=jnp.float32)

    def apply_kernel(xb_ref, xh_ref, w_ref, scale_ref, shift_ref, o_ref):
        y = conv_tile(xb_ref, xh_ref, w_ref)
        o_ref[...] = jnp.maximum(
            y * scale_ref[...] + shift_ref[...], 0.0).astype(o_ref.dtype)

    return stats_kernel, apply_kernel


def convt_block(x, w_t, b, gamma, beta):
    """ConvTBlock forward. NCHW in / NCHW out (PyTorch convention).

    x:     (N, Cin, H, W) float32
    w_t:   (Cin, Cout, 3, 3) PyTorch ConvTranspose2d weight layout
    b:     (Cout,) conv-transpose bias (exactly cancelled by train-mode BN -> unused)
    gamma: (Cout,) BN weight
    beta:  (Cout,) BN bias
    """
    del b  # BN subtracts the batch mean, so a per-channel pre-BN constant is a no-op.
    N, Cin, H, W = x.shape
    Cout = w_t.shape[1]

    cout_pad = ((Cout + LANE - 1) // LANE) * LANE
    # Row pitch padded to the bf16 sublane tile so every tap offset (0, wp, 2*wp) and
    # every slice size inside the kernel is sublane-aligned (no vreg relayouts).
    wp = ((W + 2 + SUBLANE_PACK - 1) // SUBLANE_PACK) * SUBLANE_PACK
    halo = 2 * wp                                       # exact halo (covers max tap offset)
    step = halo * LANE // math.gcd(halo, LANE)          # tile_m divisible by halo and 128
    tile_m = step * max(1, TILE_TARGET // step)
    if tile_m == halo:                                  # keep the r=2 body slice non-empty
        tile_m *= 2
    ratio = tile_m // halo

    m2 = N * (H + 2) * wp
    n_tiles = pl.cdiv(m2, tile_m)
    n_parts = min(N_STATS_PARTS, n_tiles)
    tiles_per_part = pl.cdiv(n_tiles, n_parts)
    tiles_total = n_parts * tiles_per_part
    rows_total = tiles_total * tile_m

    # ---------------- layout prep (XLA glue; ~1x input slab, 3x lane width) ----------------
    x_nhwc = jnp.transpose(x, (0, 2, 3, 1))                              # (N, H, W, Cin)
    x_pad = jnp.pad(x_nhwc, ((0, 0), (1, 1), (1, wp - W - 1), (0, 0)))   # (N, H+2, wp, Cin)
    x2 = jnp.pad(x_pad.reshape(m2, Cin), ((0, rows_total + halo + 2 - m2), (0, 0)))
    # Width (s) taps folded into lanes once: x3[p] = [x2[p], x2[p+1], x2[p+2]].
    x3 = jnp.concatenate([x2[0:rows_total + halo],
                          x2[1:rows_total + halo + 1],
                          x2[2:rows_total + halo + 2]], axis=1).astype(COMPUTE_DTYPE)

    # ConvTranspose2d(k=3,s=1,p=1) == 3x3 "same" conv with spatially flipped, in/out
    # swapped weights.  Layout (r, s*Cin + ci, cout_pad) matches x3's lane order.
    wc = jnp.flip(w_t, axis=(2, 3)).transpose(2, 3, 0, 1)                # (r, s, ci, co)
    w3 = wc.reshape(3, 3 * Cin, Cout)
    w3 = jnp.pad(w3, ((0, 0), (0, 0), (0, cout_pad - Cout))).astype(COMPUTE_DTYPE)

    # Lane-dense validity mask over flattened padded positions (junk cols/rows/tail = 0).
    valid2d = jnp.zeros((H + 2, wp), jnp.float32).at[:H, :W].set(1.0)
    mask = jnp.pad(jnp.tile(valid2d.reshape(-1), N), (0, rows_total - m2))
    mask = mask.reshape(1, rows_total)

    stats_kernel, apply_kernel = _make_kernels(wp)
    cin3 = 3 * Cin

    # ---------------- pass 1: per-channel sum / sum-of-squares (per-part partials) ----------------
    body_spec1 = pl.BlockSpec((tile_m, cin3),
                              lambda c, t: (c * tiles_per_part + t, 0))
    halo_spec1 = pl.BlockSpec((halo, cin3),
                              lambda c, t: ((c * tiles_per_part + t + 1) * ratio, 0))
    mask_spec1 = pl.BlockSpec((1, tile_m),
                              lambda c, t: (0, c * tiles_per_part + t))
    w_spec1 = pl.BlockSpec((3, cin3, cout_pad), lambda c, t: (0, 0, 0))

    partials = pl.pallas_call(
        stats_kernel,
        out_shape=jax.ShapeDtypeStruct((n_parts, 2, cout_pad), jnp.float32),
        grid_spec=pltpu.PrefetchScalarGridSpec(
            num_scalar_prefetch=0,
            grid=(n_parts, tiles_per_part),
            in_specs=[mask_spec1, body_spec1, halo_spec1, w_spec1],
            out_specs=pl.BlockSpec((None, 2, cout_pad), lambda c, t: (c, 0, 0))),
        compiler_params=pltpu.CompilerParams(
            dimension_semantics=("parallel", "arbitrary"),
            vmem_limit_bytes=VMEM_LIMIT_BYTES),
    )(mask, x3, x3, w3)

    stats = jnp.sum(partials, axis=0)                    # (2, cout_pad)
    count = float(N * H * W)
    mean = stats[0] / count
    # NOTE: single-sweep E[y^2]-E[y]^2 in f32; fine at these scales (clamped >= 0).
    var = jnp.maximum(stats[1] / count - mean * mean, 0.0)
    gamma_p = jnp.pad(gamma.astype(jnp.float32), (0, cout_pad - Cout))
    beta_p = jnp.pad(beta.astype(jnp.float32), (0, cout_pad - Cout))
    scale_v = gamma_p * jax.lax.rsqrt(var + BN_EPS)
    shift_v = beta_p - scale_v * mean
    scale = scale_v.reshape(1, cout_pad)
    shift = shift_v.reshape(1, cout_pad)

    # ---------------- pass 2: recompute conv tile, fused scale/shift + ReLU, bf16 out ----------------
    out2 = pl.pallas_call(
        apply_kernel,
        out_shape=jax.ShapeDtypeStruct((n_tiles * tile_m, cout_pad), OUT_DTYPE),
        grid_spec=pltpu.PrefetchScalarGridSpec(
            num_scalar_prefetch=0,
            grid=(n_tiles,),
            in_specs=[pl.BlockSpec((tile_m, cin3), lambda g: (g, 0)),
                      pl.BlockSpec((halo, cin3), lambda g: ((g + 1) * ratio, 0)),
                      pl.BlockSpec((3, cin3, cout_pad), lambda g: (0, 0, 0)),
                      pl.BlockSpec((1, cout_pad), lambda g: (0, 0)),
                      pl.BlockSpec((1, cout_pad), lambda g: (0, 0))],
            out_specs=pl.BlockSpec((tile_m, cout_pad), lambda g: (g, 0))),
        compiler_params=pltpu.CompilerParams(
            dimension_semantics=("parallel",),
            vmem_limit_bytes=VMEM_LIMIT_BYTES),
    )(x3, x3, w3, scale, shift)

    out = out2[:m2].reshape(N, H + 2, wp, cout_pad)[:, :H, :W, :Cout]
    return jnp.transpose(out, (0, 3, 1, 2)).astype(x.dtype)


def convt_block_reference(x, w_t, b, gamma, beta):
    """Pure-JAX f32 reference (ConvTranspose2d -> BatchNorm2d(train) -> ReLU)."""
    w_conv = jnp.flip(w_t, axis=(2, 3)).transpose(1, 0, 2, 3)   # (Cout, Cin, 3, 3) OIHW
    y = jax.lax.conv_general_dilated(
        x, w_conv, window_strides=(1, 1), padding="SAME",
        dimension_numbers=("NCHW", "OIHW", "NCHW"))
    y = y + b[None, :, None, None]
    mean = jnp.mean(y, axis=(0, 2, 3), keepdims=True)
    var = jnp.mean((y - mean) ** 2, axis=(0, 2, 3), keepdims=True)
    y = (y - mean) * jax.lax.rsqrt(var + BN_EPS)
    y = y * gamma[None, :, None, None] + beta[None, :, None, None]
    return jnp.maximum(y, 0.0)


if __name__ == "__main__":
    N, Cin, Cout, H, W = 2, 4, 8, 16, 16
    key = jax.random.PRNGKey(0)
    kx, kw, kb, kg, kbeta = jax.random.split(key, 5)

    x = jax.random.normal(kx, (N, Cin, H, W), dtype=jnp.float32)
    # PyTorch ConvTranspose2d weight layout: (in_channels, out_channels, kH, kW)
    w_t = jax.random.normal(kw, (Cin, Cout, 3, 3), dtype=jnp.float32) * 0.1
    b = jax.random.normal(kb, (Cout,), dtype=jnp.float32) * 0.1
    gamma = 1.0 + 0.1 * jax.random.normal(kg, (Cout,), dtype=jnp.float32)
    beta = 0.1 * jax.random.normal(kbeta, (Cout,), dtype=jnp.float32)

    out = jax.jit(convt_block)(x, w_t, b, gamma, beta)
    jax.block_until_ready(out)

    assert out.shape == (N, Cout, H, W)
    assert bool(jnp.all(out >= 0.0))                 # ReLU sanity
    ref = convt_block_reference(x, w_t, b, gamma, beta)
    max_err = float(jnp.max(jnp.abs(out - ref)))     # bf16 GEMM + bf16 output tolerance
    assert max_err < 1e-1, f"max abs error vs reference: {max_err}"
    print("KERNEL_OK")
</pallas_src>

<mosaic_0001>
module attributes {stable_mosaic.version = 11 : i64} {
  func.func @stats_kernel(%arg0: i32, %arg1: i32, %arg2: memref<1x1024xf32, #tpu.memory_space<vmem>>, %arg3: memref<1024x12xbf16, #tpu.memory_space<vmem>>, %arg4: memref<64x12xbf16, #tpu.memory_space<vmem>>, %arg5: memref<3x12x128xbf16, #tpu.memory_space<vmem>>, %arg6: memref<1x2x128xf32, #tpu.memory_space<vmem>>) attributes {dimension_semantics = [#tpu.dimension_semantics<parallel>, #tpu.dimension_semantics<arbitrary>], iteration_bounds = array<i64: 2, 1>, scalar_prefetch = 0 : i64, scratch_operands = 0 : i64, tpu.core_type = #tpu.core_type<tc>, window_params = [{transform_indices = @transform_0, window_bounds = array<i64: 1, 1024>}, {transform_indices = @transform_1, window_bounds = array<i64: 1024, 12>}, {transform_indices = @transform_2, window_bounds = array<i64: 64, 12>}, {pipeline_mode = #tpu.pipeline_mode<synchronous>, transform_indices = @transform_3, window_bounds = array<i64: 3, 12, 128>}, {transform_indices = @transform_4, window_bounds = array<i64: 1, 2, 128>}]} {
    %c0_i32 = arith.constant 0 : i32
    %0 = arith.cmpi eq, %arg1, %c0_i32 : i32
    %1 = arith.extui %0 : i1 to i32
    %c0_i32_0 = arith.constant 0 : i32
    %2 = arith.cmpi ne, %1, %c0_i32_0 : i32
    scf.if %2 {
      %cst_29 = arith.constant 0.000000e+00 : f32
      %37 = vector.broadcast %cst_29 : f32 to vector<2x128xf32>
      %c0_30 = arith.constant 0 : index
      %c0_31 = arith.constant 0 : index
      %c0_32 = arith.constant 0 : index
      %38 = vector.load %arg6[%c0_30, %c0_31, %c0_32] : memref<1x2x128xf32, #tpu.memory_space<vmem>>, vector<1x2x128xf32>
      %39 = vector.shape_cast %38 : vector<1x2x128xf32> to vector<2x128xf32>
      %40 = vector.shape_cast %37 : vector<2x128xf32> to vector<1x2x128xf32>
      tpu.vector_store %arg6[%c0_30, %c0_31, %c0_32], %40 {strides = array<i32>} : memref<1x2x128xf32, #tpu.memory_space<vmem>>, vector<1x2x128xf32>,
    } else {
    }
    %c0 = arith.constant 0 : index
    %c0_1 = arith.constant 0 : index
    %3 = vector.load %arg3[%c0, %c0_1] : memref<1024x12xbf16, #tpu.memory_space<vmem>>, vector<1024x12xbf16>
    %c0_2 = arith.constant 0 : index
    %c0_3 = arith.constant 0 : index
    %4 = vector.load %arg4[%c0_2, %c0_3] : memref<64x12xbf16, #tpu.memory_space<vmem>>, vector<64x12xbf16>
    %c0_4 = arith.constant 0 : index
    %c0_5 = arith.constant 0 : index
    %c0_6 = arith.constant 0 : index
    %5 = vector.load %arg5[%c0_4, %c0_5, %c0_6] : memref<3x12x128xbf16, #tpu.memory_space<vmem>>, vector<1x12x128xbf16>
    %6 = vector.shape_cast %5 : vector<1x12x128xbf16> to vector<12x128xbf16>
    %cst = arith.constant dense<0.000000e+00> : vector<1024x128xf32>
    %7 = tpu.matmul %3, %6, %cst {dimension_numbers = #tpu.dot_dimension_numbers<[1], [0], [0], [1], [0, 0, 1, 1], [], []>} : vector<1024x12xbf16>, vector<12x128xbf16>, vector<1024x128xf32> -> vector<1024x128xf32>
    %8 = vector.extract_strided_slice %3 {offsets = [32, 0], sizes = [992, 12], strides = [1, 1]} : vector<1024x12xbf16> to vector<992x12xbf16>
    %9 = vector.extract_strided_slice %4 {offsets = [0, 0], sizes = [32, 12], strides = [1, 1]} : vector<64x12xbf16> to vector<32x12xbf16>
    %10 = tpu.concatenate %8, %9 in 0 : vector<992x12xbf16>, vector<32x12xbf16> -> vector<1024x12xbf16>
    %c1 = arith.constant 1 : index
    %c0_7 = arith.constant 0 : index
    %c0_8 = arith.constant 0 : index
    %11 = vector.load %arg5[%c1, %c0_7, %c0_8] : memref<3x12x128xbf16, #tpu.memory_space<vmem>>, vector<1x12x128xbf16>
    %12 = vector.shape_cast %11 : vector<1x12x128xbf16> to vector<12x128xbf16>
    %cst_9 = arith.constant dense<0.000000e+00> : vector<1024x128xf32>
    %13 = tpu.matmul %10, %12, %cst_9 {dimension_numbers = #tpu.dot_dimension_numbers<[1], [0], [0], [1], [0, 0, 1, 1], [], []>} : vector<1024x12xbf16>, vector<12x128xbf16>, vector<1024x128xf32> -> vector<1024x128xf32>
    %14 = arith.addf %7, %13 : vector<1024x128xf32>
    %15 = vector.extract_strided_slice %3 {offsets = [64, 0], sizes = [960, 12], strides = [1, 1]} : vector<1024x12xbf16> to vector<960x12xbf16>
    %16 = tpu.concatenate %15, %4 in 0 : vector<960x12xbf16>, vector<64x12xbf16> -> vector<1024x12xbf16>
    %c2 = arith.constant 2 : index
    %c0_10 = arith.constant 0 : index
    %c0_11 = arith.constant 0 : index
    %17 = vector.load %arg5[%c2, %c0_10, %c0_11] : memref<3x12x128xbf16, #tpu.memory_space<vmem>>, vector<1x12x128xbf16>
    %18 = vector.shape_cast %17 : vector<1x12x128xbf16> to vector<12x128xbf16>
    %cst_12 = arith.constant dense<0.000000e+00> : vector<1024x128xf32>
    %19 = tpu.matmul %16, %18, %cst_12 {dimension_numbers = #tpu.dot_dimension_numbers<[1], [0], [0], [1], [0, 0, 1, 1], [], []>} : vector<1024x12xbf16>, vector<12x128xbf16>, vector<1024x128xf32> -> vector<1024x128xf32>
    %20 = arith.addf %14, %19 : vector<1024x128xf32>
    %c0_13 = arith.constant 0 : index
    %c0_14 = arith.constant 0 : index
    %21 = vector.load %arg2[%c0_13, %c0_14] : memref<1x1024xf32, #tpu.memory_space<vmem>>, vector<1x1024xf32>
    %c0_15 = arith.constant 0 : index
    %c0_16 = arith.constant 0 : index
    %c0_17 = arith.constant 0 : index
    %22 = vector.load %arg6[%c0_15, %c0_16, %c0_17] : memref<1x2x128xf32, #tpu.memory_space<vmem>>, vector<1x1x128xf32>
    %23 = vector.shape_cast %22 : vector<1x1x128xf32> to vector<1x128xf32>
    %cst_18 = arith.constant dense<0.000000e+00> : vector<1x128xf32>
    %24 = tpu.matmul %21, %20, %cst_18 {dimension_numbers = #tpu.dot_dimension_numbers<[1], [0], [0], [1], [0, 0, 1, 1], [], []>} : vector<1x1024xf32>, vector<1024x128xf32>, vector<1x128xf32> -> vector<1x128xf32>
    %25 = arith.addf %23, %24 : vector<1x128xf32>
    %c0_19 = arith.constant 0 : index
    %c0_20 = arith.constant 0 : index
    %c0_21 = arith.constant 0 : index
    %26 = vector.load %arg6[%c0_19, %c0_20, %c0_21] : memref<1x2x128xf32, #tpu.memory_space<vmem>>, vector<1x1x128xf32>
    %27 = vector.shape_cast %26 : vector<1x1x128xf32> to vector<1x128xf32>
    %28 = vector.shape_cast %25 : vector<1x128xf32> to vector<1x1x128xf32>
    tpu.vector_store %arg6[%c0_19, %c0_20, %c0_21], %28 {strides = array<i32>} : memref<1x2x128xf32, #tpu.memory_space<vmem>>, vector<1x1x128xf32>,
    %c0_22 = arith.constant 0 : index
    %c1_23 = arith.constant 1 : index
    %c0_24 = arith.constant 0 : index
    %29 = vector.load %arg6[%c0_22, %c1_23, %c0_24] : memref<1x2x128xf32, #tpu.memory_space<vmem>>, vector<1x1x128xf32>
    %30 = vector.shape_cast %29 : vector<1x1x128xf32> to vector<1x128xf32>
    %31 = arith.mulf %20, %20 : vector<1024x128xf32>
    %cst_25 = arith.constant dense<0.000000e+00> : vector<1x128xf32>
    %32 = tpu.matmul %21, %31, %cst_25 {dimension_numbers = #tpu.dot_dimension_numbers<[1], [0], [0], [1], [0, 0, 1, 1], [], []>} : vector<1x1024xf32>, vector<1024x128xf32>, vector<1x128xf32> -> vector<1x128xf32>
    %33 = arith.addf %30, %32 : vector<1x128xf32>
    %c0_26 = arith.constant 0 : index
    %c1_27 = arith.constant 1 : index
    %c0_28 = arith.constant 0 : index
    %34 = vector.load %arg6[%c0_26, %c1_27, %c0_28] : memref<1x2x128xf32, #tpu.memory_space<vmem>>, vector<1x1x128xf32>
    %35 = vector.shape_cast %34 : vector<1x1x128xf32> to vector<1x128xf32>
    %36 = vector.shape_cast %33 : vector<1x128xf32> to vector<1x1x128xf32>
    tpu.vector_store %arg6[%c0_26, %c1_27, %c0_28], %36 {strides = array<i32>} : memref<1x2x128xf32, #tpu.memory_space<vmem>>, vector<1x1x128xf32>,
    return
  }
  func.func @transform_0(%arg0: i32, %arg1: i32) -> (i32, i32) {
    %c1_i32 = arith.constant 1 : i32
    %0 = arith.muli %arg0, %c1_i32 : i32
    %1 = arith.addi %0, %arg1 : i32
    %c0_i32 = arith.constant 0 : i32
    %c0_i32_0 = arith.constant 0 : i32
    return %c0_i32, %1 : i32, i32
  }
  func.func @transform_1(%arg0: i32, %arg1: i32) -> (i32, i32) {
    %c1_i32 = arith.constant 1 : i32
    %0 = arith.muli %arg0, %c1_i32 : i32
    %1 = arith.addi %0, %arg1 : i32
    %c0_i32 = arith.constant 0 : i32
    %c0_i32_0 = arith.constant 0 : i32
    return %1, %c0_i32 : i32, i32
  }
  func.func @transform_2(%arg0: i32, %arg1: i32) -> (i32, i32) {
    %c1_i32 = arith.constant 1 : i32
    %0 = arith.muli %arg0, %c1_i32 : i32
    %1 = arith.addi %0, %arg1 : i32
    %c1_i32_0 = arith.constant 1 : i32
    %2 = arith.addi %1, %c1_i32_0 : i32
    %c16_i32 = arith.constant 16 : i32
    %3 = arith.muli %2, %c16_i32 : i32
    %c0_i32 = arith.constant 0 : i32
    %c0_i32_1 = arith.constant 0 : i32
    return %3, %c0_i32 : i32, i32
  }
  func.func @transform_3(%arg0: i32, %arg1: i32) -> (i32, i32, i32) {
    %c0_i32 = arith.constant 0 : i32
    %c0_i32_0 = arith.constant 0 : i32
    %c0_i32_1 = arith.constant 0 : i32
    %c0_i32_2 = arith.constant 0 : i32
    return %c0_i32, %c0_i32_0, %c0_i32_1 : i32, i32, i32
  }
  func.func @transform_4(%arg0: i32, %arg1: i32) -> (i32, i32, i32) {
    %c0_i32 = arith.constant 0 : i32
    %c0_i32_0 = arith.constant 0 : i32
    %c0_i32_1 = arith.constant 0 : i32
    return %arg0, %c0_i32, %c0_i32_0 : i32, i32, i32
  }
}

module attributes {stable_mosaic.version = 11 : i64} {
  func.func @apply_kernel(%arg0: i32, %arg1: memref<1024x12xbf16, #tpu.memory_space<vmem>>, %arg2: memref<64x12xbf16, #tpu.memory_space<vmem>>, %arg3: memref<3x12x128xbf16, #tpu.memory_space<vmem>>, %arg4: memref<1x128xf32, #tpu.memory_space<vmem>>, %arg5: memref<1x128xf32, #tpu.memory_space<vmem>>, %arg6: memref<1024x128xbf16, #tpu.memory_space<vmem>>) attributes {dimension_semantics = [#tpu.dimension_semantics<parallel>], iteration_bounds = array<i64: 2>, scalar_prefetch = 0 : i64, scratch_operands = 0 : i64, tpu.core_type = #tpu.core_type<tc>, window_params = [{transform_indices = @transform_0, window_bounds = array<i64: 1024, 12>}, {transform_indices = @transform_1, window_bounds = array<i64: 64, 12>}, {pipeline_mode = #tpu.pipeline_mode<synchronous>, transform_indices = @transform_2, window_bounds = array<i64: 3, 12, 128>}, {pipeline_mode = #tpu.pipeline_mode<synchronous>, transform_indices = @transform_3, window_bounds = array<i64: 1, 128>}, {pipeline_mode = #tpu.pipeline_mode<synchronous>, transform_indices = @transform_4, window_bounds = array<i64: 1, 128>}, {transform_indices = @transform_5, window_bounds = array<i64: 1024, 128>}]} {
    %c0 = arith.constant 0 : index
    %c0_0 = arith.constant 0 : index
    %0 = vector.load %arg1[%c0, %c0_0] : memref<1024x12xbf16, #tpu.memory_space<vmem>>, vector<1024x12xbf16>
    %c0_1 = arith.constant 0 : index
    %c0_2 = arith.constant 0 : index
    %1 = vector.load %arg2[%c0_1, %c0_2] : memref<64x12xbf16, #tpu.memory_space<vmem>>, vector<64x12xbf16>
    %c0_3 = arith.constant 0 : index
    %c0_4 = arith.constant 0 : index
    %c0_5 = arith.constant 0 : index
    %2 = vector.load %arg3[%c0_3, %c0_4, %c0_5] : memref<3x12x128xbf16, #tpu.memory_space<vmem>>, vector<1x12x128xbf16>
    %3 = vector.shape_cast %2 : vector<1x12x128xbf16> to vector<12x128xbf16>
    %cst = arith.constant dense<0.000000e+00> : vector<1024x128xf32>
    %4 = tpu.matmul %0, %3, %cst {dimension_numbers = #tpu.dot_dimension_numbers<[1], [0], [0], [1], [0, 0, 1, 1], [], []>} : vector<1024x12xbf16>, vector<12x128xbf16>, vector<1024x128xf32> -> vector<1024x128xf32>
    %5 = vector.extract_strided_slice %0 {offsets = [32, 0], sizes = [992, 12], strides = [1, 1]} : vector<1024x12xbf16> to vector<992x12xbf16>
    %6 = vector.extract_strided_slice %1 {offsets = [0, 0], sizes = [32, 12], strides = [1, 1]} : vector<64x12xbf16> to vector<32x12xbf16>
    %7 = tpu.concatenate %5, %6 in 0 : vector<992x12xbf16>, vector<32x12xbf16> -> vector<1024x12xbf16>
    %c1 = arith.constant 1 : index
    %c0_6 = arith.constant 0 : index
    %c0_7 = arith.constant 0 : index
    %8 = vector.load %arg3[%c1, %c0_6, %c0_7] : memref<3x12x128xbf16, #tpu.memory_space<vmem>>, vector<1x12x128xbf16>
    %9 = vector.shape_cast %8 : vector<1x12x128xbf16> to vector<12x128xbf16>
    %cst_8 = arith.constant dense<0.000000e+00> : vector<1024x128xf32>
    %10 = tpu.matmul %7, %9, %cst_8 {dimension_numbers = #tpu.dot_dimension_numbers<[1], [0], [0], [1], [0, 0, 1, 1], [], []>} : vector<1024x12xbf16>, vector<12x128xbf16>, vector<1024x128xf32> -> vector<1024x128xf32>
    %11 = arith.addf %4, %10 : vector<1024x128xf32>
    %12 = vector.extract_strided_slice %0 {offsets = [64, 0], sizes = [960, 12], strides = [1, 1]} : vector<1024x12xbf16> to vector<960x12xbf16>
    %13 = tpu.concatenate %12, %1 in 0 : vector<960x12xbf16>, vector<64x12xbf16> -> vector<1024x12xbf16>
    %c2 = arith.constant 2 : index
    %c0_9 = arith.constant 0 : index
    %c0_10 = arith.constant 0 : index
    %14 = vector.load %arg3[%c2, %c0_9, %c0_10] : memref<3x12x128xbf16, #tpu.memory_space<vmem>>, vector<1x12x128xbf16>
    %15 = vector.shape_cast %14 : vector<1x12x128xbf16> to vector<12x128xbf16>
    %cst_11 = arith.constant dense<0.000000e+00> : vector<1024x128xf32>
    %16 = tpu.matmul %13, %15, %cst_11 {dimension_numbers = #tpu.dot_dimension_numbers<[1], [0], [0], [1], [0, 0, 1, 1], [], []>} : vector<1024x12xbf16>, vector<12x128xbf16>, vector<1024x128xf32> -> vector<1024x128xf32>
    %17 = arith.addf %11, %16 : vector<1024x128xf32>
    %c0_12 = arith.constant 0 : index
    %c0_13 = arith.constant 0 : index
    %18 = vector.load %arg4[%c0_12, %c0_13] : memref<1x128xf32, #tpu.memory_space<vmem>>, vector<1x128xf32>
    %19 = vector.broadcast %18 : vector<1x128xf32> to vector<1024x128xf32>
    %20 = arith.mulf %17, %19 : vector<1024x128xf32>
    %c0_14 = arith.constant 0 : index
    %c0_15 = arith.constant 0 : index
    %21 = vector.load %arg5[%c0_14, %c0_15] : memref<1x128xf32, #tpu.memory_space<vmem>>, vector<1x128xf32>
    %22 = vector.broadcast %21 : vector<1x128xf32> to vector<1024x128xf32>
    %23 = arith.addf %20, %22 : vector<1024x128xf32>
    %cst_16 = arith.constant 0.000000e+00 : f32
    %24 = vector.broadcast %cst_16 : f32 to vector<1024x128xf32>
    %25 = arith.maximumf %23, %24 : vector<1024x128xf32>
    %26 = arith.truncf %25 : vector<1024x128xf32> to vector<1024x128xbf16>
    %c0_17 = arith.constant 0 : index
    %c0_18 = arith.constant 0 : index
    %27 = vector.load %arg6[%c0_17, %c0_18] : memref<1024x128xbf16, #tpu.memory_space<vmem>>, vector<1024x128xbf16>
    tpu.vector_store %arg6[%c0_17, %c0_18], %26 {strides = array<i32>} : memref<1024x128xbf16, #tpu.memory_space<vmem>>, vector<1024x128xbf16>,
    return
  }
  func.func @transform_0(%arg0: i32) -> (i32, i32) {
    %c0_i32 = arith.constant 0 : i32
    %c0_i32_0 = arith.constant 0 : i32
    return %arg0, %c0_i32 : i32, i32
  }
  func.func @transform_1(%arg0: i32) -> (i32, i32) {
    %c1_i32 = arith.constant 1 : i32
    %0 = arith.addi %arg0, %c1_i32 : i32
    %c16_i32 = arith.constant 16 : i32
    %1 = arith.muli %0, %c16_i32 : i32
    %c0_i32 = arith.constant 0 : i32
    %c0_i32_0 = arith.constant 0 : i32
    return %1, %c0_i32 : i32, i32
  }
  func.func @transform_2(%arg0: i32) -> (i32, i32, i32) {
    %c0_i32 = arith.constant 0 : i32
    %c0_i32_0 = arith.constant 0 : i32
    %c0_i32_1 = arith.constant 0 : i32
    %c0_i32_2 = arith.constant 0 : i32
    return %c0_i32, %c0_i32_0, %c0_i32_1 : i32, i32, i32
  }
  func.func @transform_3(%arg0: i32) -> (i32, i32) {
    %c0_i32 = arith.constant 0 : i32
    %c0_i32_0 = arith.constant 0 : i32
    %c0_i32_1 = arith.constant 0 : i32
    return %c0_i32, %c0_i32_0 : i32, i32
  }
  func.func @transform_4(%arg0: i32) -> (i32, i32) {
    %c0_i32 = arith.constant 0 : i32
    %c0_i32_0 = arith.constant 0 : i32
    %c0_i32_1 = arith.constant 0 : i32
    return %c0_i32, %c0_i32_0 : i32, i32
  }
  func.func @transform_5(%arg0: i32) -> (i32, i32) {
    %c0_i32 = arith.constant 0 : i32
    %c0_i32_0 = arith.constant 0 : i32
    return %arg0, %c0_i32 : i32, i32
  }
}

</mosaic_0001>

<llo_original>
// kernel: tile.5
$region0: #{tile.5}
  %s0 = inlined_call_operand.vmem [shape: f32[18,32], index: 0, kind: input, shape index: {}]
  %s1 = inlined_call_operand.vmem [shape: f32[576], index: 1, kind: output, shape index: {}]
  %v2 = vld [vmem:[%s0] ss:$4 sm:$0x1f]
  %vm3 = vcmask 261120
  %4 = vst.msk [vmem:[%s1] sm:$0x1f] %vm3, %v2
  %s5 = scalar_lea.vmem %s0, 3
  %v6 = vld [vmem:[%s5] ss:$4 sm:$0xf]
  %7 = vrot.lane.b32.xlu0 %v6, 96
  %v8 = vpop.permute.xlu0 %7
  %vm9 = vcmask 1048320
  %10 = vst.msk [vmem:[%s1] sm:$0xf] %vm9, %v8
  %s11 = scalar_lea.vmem %s0, 2
  %v12 = vld [vmem:[%s11] ss:$4 sm:$0xf]
  %13 = vrot.lane.b32.xlu0 %v12, 64
  %v14 = vpop.permute.xlu0 %13
  %vm15 = vcmask 785920
  %16 = vst.msk [vmem:[%s1] sm:$0xf] %vm15, %v14
  %s17 = scalar_lea.vmem %s0, 1
  %v18 = vld [vmem:[%s17] ss:$4 sm:$0x1f]
  %19 = vrot.lane.b32.xlu0 %v18, 32
  %v20 = vpop.permute.xlu0 %19
  %vm21 = vcmask 523520
  %22 = vst.msk [vmem:[%s1] sm:$0x1f] %vm21, %v20

// kernel: tile.6
$region0: #{tile.6}
  #allocation0 [shape = 's32[1]{0}', space=sflag, size = 0x4, scoped, tag = 'scoped memory for tile.6']
  %s0 = inlined_call_operand.vmem [shape: f32[576], index: 0, kind: input, shape index: {}]
  %s1 = inlined_call_operand.vmem [shape: f32[2,576], index: 1, kind: output, shape index: {}]
  // Predicated region
  $region2: #{tile.6} parent=0 // pred_check
    _
  $region3: #{tile.6} parent=0 // pred_check_branch
    %3 = sbr.rel (0) target = $region5
  $region4: #{tile.6} parent=0 // pred_region
    _
  $region5: #{tile.6} parent=0 // pred_fallthru
    _
  %v4 = vld [vmem:[%s0] ss:$0 sm:$0xff]
  %5 = vst [vmem:[%s1] sm:$0x3] %v4
  %s6 = scalar_lea.vmem %s0, 1
  %v7 = vld [vmem:[%s6] ss:$0 sm:$0xff]
  %s8 = scalar_lea.vmem %s1, 2
  %9 = vst [vmem:[%s8] sm:$0x3] %v7
  %s10 = scalar_lea.vmem %s0, 2
  %v11 = vld [vmem:[%s10] ss:$0 sm:$0xff]
  %s12 = scalar_lea.vmem %s1, 4
  %13 = vst [vmem:[%s12] sm:$0x3] %v11
  %s14 = scalar_lea.vmem %s0, 3
  %v15 = vld [vmem:[%s14] ss:$0 sm:$0xff]
  %s16 = scalar_lea.vmem %s1, 6
  %17 = vst [vmem:[%s16] sm:$0x3] %v15
  %s18 = scalar_lea.vmem %s0, 4
  %v19 = vld [vmem:[%s18] ss:$0 sm:$0xff]
  %s20 = scalar_lea.vmem %s1, 8
  %21 = vst [vmem:[%s20] sm:$0x3] %v19

// kernel: tile.7
$region0: #{tile.7}
  %s0 = inlined_call_operand.vmem [shape: f32[2,576], index: 0, kind: input, shape index: {}]
  %s1 = inlined_call_operand.vmem [shape: f32[1152], index: 1, kind: output, shape index: {}]
  $region1: #{tile.7} parent=0
    #allocation0 [shape = 'u8[20480]{0}', space=vmem, size = 0x5000, scoped, tag = 'scoped mem for input reshape']
    %s3 = ssub.s32 4, 1
    %s4 = scalar_lea.vmem %s0, 8
    %v5 = vld [vmem:[%s4] sm:%s3]
    %s6 = scalar_lea.vmem [#allocation0], 32
    %7 = vst [vmem:[%s6] sm:%s3] %v5
    %s8 = scalar_lea.vmem %s0, 6
    %v9 = vld [vmem:[%s8] sm:%s3]
    %s10 = scalar_lea.vmem [#allocation0], 24
    %11 = vst [vmem:[%s10] sm:%s3] %v9
    %s12 = scalar_lea.vmem %s0, 4
    %v13 = vld [vmem:[%s12] sm:%s3]
    %s14 = scalar_lea.vmem [#allocation0], 16
    %15 = vst [vmem:[%s14] sm:%s3] %v13
    %s16 = scalar_lea.vmem %s0, 2
    %v17 = vld [vmem:[%s16] sm:%s3]
    %s18 = scalar_lea.vmem [#allocation0], 8
    %19 = vst [vmem:[%s18] sm:%s3] %v17
    %v20 = vld [vmem:[%s0] sm:%s3]
    %21 = vst [vmem:[#allocation0] sm:%s3] %v20
    %s22 = scalar_lea.vmem [#allocation0], 32
    %v23 = vld [vmem:[%s22] sm:$0x1]
    %vm24 = vcmask 523264
    %s25 = scalar_lea.vmem %s1, 4
    %26 = vst.msk [vmem:[%s25] sm:$0x1] %vm24, %v23
    %v27 = vld [vmem:[#allocation0] ss:$8 sm:$0xf]
    %28 = vst [vmem:[%s1] sm:$0xf] %v27
    %s29 = scalar_lea.vmem [#allocation0], 1
    %v30 = vld [vmem:[%s29] ss:$8 sm:$0xf]
    %s31 = scalar_lea.vmem [#allocation0], 1
    %v32 = vld [vmem:[%s31] ss:$8 sm:$0xf]
    %s33 = scalar_lea.vmem [#allocation0], 29
    %v34 = vld [vmem:[%s33] sm:$0x10]
    %vm35 = vcmask 1044484
    %v36 = vsel %vm35, %v34, %v32
    %vm37 = vcmask 523264
    %v38 = vsel %vm37, %v36, %v30
    %39 = vrot.lane.b32.xlu0 %v38, 64
    %v40 = vpop.permute.xlu0 %39
    %vm41 = vcmask 523264
    %s42 = scalar_lea.vmem %s1, 5
    %43 = vst.msk [vmem:[%s42] sm:$0xf] %vm41, %v40
    %vm44 = vcmask 1048064
    %s45 = scalar_lea.vmem %s1, 4
    %46 = vst.msk [vmem:[%s45] sm:$0x1f] %vm44, %v40

// kernel: convt_block.2
$region0: #{convt_block.2}
  #allocation0 [shape = 'u32[]', space=smem, size = 0x4, offset = 0x4, fixed_abs, tag = 'smem constant byte address 0x4 - core index']
  #allocation1 [shape = 'u32[72,128]{1,0:T(1,128)}', space=vmem, size = 0x9000, scoped, tag = 'internal scratch']
  %s0 = inlined_call_operand.vmem [shape: f32[1,2048], index: 0, kind: input, shape index: {}]
  %s1 = inlined_call_operand.vmem [shape: bf16[2112,12], index: 1, kind: input, shape index: {}, may-alias: {1,2}]
  %s2 = inlined_call_operand.vmem [shape: bf16[2112,12], index: 2, kind: input, shape index: {}, may-alias: {1,2}]
  %s3 = inlined_call_operand.vmem [shape: bf16[3,12,128], index: 3, kind: input, shape index: {}]
  %s4 = inlined_call_operand.vmem [shape: f32[2,2,128], index: 4, kind: output, shape index: {}]
  %s5 = sld [smem:[#allocation0]]
  $region53: #{convt_block.2} parent=0
    _
  %s7 = ssub.s32 1, %s5
  %s8 = scalar_select 0, %s7, %s5
  loop: start=0, step=1, limit=4
  $region2: #{convt_block.2} parent=0 // loop_pre_header
    _
  $region3: #{convt_block.2} parent=0 // loop_header
    %s10 = sphi 0, %s14
    %p11 = scmp.ge.s32.totalorder %s10, 4
    %s17 = sphi 0, %s29
    %s18 = sphi 0, %s25
    %s19 = sphi 0, %s17
    %s20 = sphi 0, %s18
    %s21 = sphi 0, %s19
    %s22 = sphi 0, %s20
    %s34 = sphi 0, %s36
    %s37 = sphi 0, %s34
    %s38 = sphi 0, %s37
    %s54 = sphi 0, %s38
    %s62 = sphi 0, %s64
    %s65 = sphi 0, %s62
    %s66 = sphi 0, %s65
    %s82 = sphi 0, %s66
    %s94 = sphi 0, %s96
    %s97 = sphi 0, %s94
    %s98 = sphi 0, %s97
    %s114 = sphi 0, %s98
    %s118 = sphi 0, %s118
    %s120 = sphi 0, %s118
    %s121 = sphi 0, %s120
    %s135 = sphi 0, %s121
    %s141 = sphi 0, %s143
    %s144 = sphi 0, %s141
    %s145 = sphi 0, %s144
    %s161 = sphi 0, %s145
  $region4: #{convt_block.2} parent=0 // loop_header_branch
    %13 = sbr.rel (%p11) target = $region8
  $region5: #{convt_block.2} parent=0 // loop_body
    %s15 = ssub.s32 %s10, 1
    %s16 = ssub.s32 %s10, 2
    %s23 = sadd.s32 1, %s18
    %p24 = scmp.ge.s32.totalorder %s23, 1
    %s25 = scalar_select %p24, 0, %s23
    %s26 = sadd.s32 1, %s17
    %s27 = scalar_select %p24, %s26, %s17
    %p28 = scmp.ge.s32.totalorder %s27, 2
    %s29 = scalar_select %p28, 0, %s27
    %s30 = sadd.s32 %s17, %s18
    %s31 = sadd.s32 %s29, %s25
    %s32 = ssub.s32 %s30, %s31
    %p33 = scmp.eq.s32.totalorder %s32, 0
    %s35 = sadd.s32 %s34, 1
    %s36 = scalar_select %p33, %s34, %s35
    %p39 = pneg %p33
    %p40 = scmp.eq.s32.totalorder %s10, 1
    %p41 = por %p39, %p40
    %p42 = scmp.ne.s32.totalorder %s34, %s37
    %p43 = scmp.eq.s32.totalorder %s10, 0
    %p44 = por %p42, %p43
    %p45 = scmp.ne.s32.totalorder %s34, %s37
    %p46 = scmp.eq.s32.totalorder %s15, 1
    %p47 = por %p45, %p46
    %p48 = scmp.ne.s32.totalorder %s37, %s38
    %p49 = scmp.eq.s32.totalorder %s15, 0
    %p50 = por %p48, %p49
    %p51 = scmp.ne.s32.totalorder %s37, %s38
    %p52 = scmp.eq.s32.totalorder %s16, 1
    %p53 = por %p51, %p52
    %p55 = scmp.ne.s32.totalorder %s38, %s54
    %p56 = scmp.eq.s32.totalorder %s16, 0
    %p57 = por %p55, %p56
    %s58 = sadd.s32 %s17, %s18
    %s59 = sadd.s32 %s29, %s25
    %s60 = ssub.s32 %s58, %s59
    %p61 = scmp.eq.s32.totalorder %s60, 0
    %s63 = sadd.s32 %s62, 1
    %s64 = scalar_select %p61, %s62, %s63
    %p67 = pneg %p61
    %p68 = scmp.eq.s32.totalorder %s10, 1
    %p69 = por %p67, %p68
    %p70 = scmp.ne.s32.totalorder %s62, %s65
    %p71 = scmp.eq.s32.totalorder %s10, 0
    %p72 = por %p70, %p71
    %p73 = scmp.ne.s32.totalorder %s62, %s65
    %p74 = scmp.eq.s32.totalorder %s15, 1
    %p75 = por %p73, %p74
    %p76 = scmp.ne.s32.totalorder %s65, %s66
    %p77 = scmp.eq.s32.totalorder %s15, 0
    %p78 = por %p76, %p77
    %p79 = scmp.ne.s32.totalorder %s65, %s66
    %p80 = scmp.eq.s32.totalorder %s16, 1
    %p81 = por %p79, %p80
    %p83 = scmp.ne.s32.totalorder %s66, %s82
    %p84 = scmp.eq.s32.totalorder %s16, 0
    %p85 = por %p83, %p84
    %s86 = sadd.s32 %s17, %s18
    %s87 = sadd.s32 %s86, 1
    %s88 = smul.u32 %s87, 16
    %s89 = sadd.s32 %s29, %s25
    %s90 = sadd.s32 %s89, 1
    %s91 = smul.u32 %s90, 16
    %s92 = ssub.s32 %s88, %s91
    %p93 = scmp.eq.s32.totalorder %s92, 0
    %s95 = sadd.s32 %s94, 1
    %s96 = scalar_select %p93, %s94, %s95
    %p99 = pneg %p93
    %p100 = scmp.eq.s32.totalorder %s10, 1
    %p101 = por %p99, %p100
    %p102 = scmp.ne.s32.totalorder %s94, %s97
    %p103 = scmp.eq.s32.totalorder %s10, 0
    %p104 = por %p102, %p103
    %p105 = scmp.ne.s32.totalorder %s94, %s97
    %p106 = scmp.eq.s32.totalorder %s15, 1
    %p107 = por %p105, %p106
    %p108 = scmp.ne.s32.totalorder %s97, %s98
    %p109 = scmp.eq.s32.totalorder %s15, 0
    %p110 = por %p108, %p109
    %p111 = scmp.ne.s32.totalorder %s97, %s98
    %p112 = scmp.eq.s32.totalorder %s16, 1
    %p113 = por %p111, %p112
    %p115 = scmp.ne.s32.totalorder %s98, %s114
    %p116 = scmp.eq.s32.totalorder %s16, 0
    %p117 = por %p115, %p116
    %s119 = sadd.s32 %s118, 1
    %p122 = scmp.eq.s32.totalorder %s10, 1
    %p123 = scmp.ne.s32.totalorder %s118, %s120
    %p124 = scmp.eq.s32.totalorder %s10, 0
    %p125 = por %p123, %p124
    %p126 = scmp.ne.s32.totalorder %s118, %s120
    %p127 = scmp.eq.s32.totalorder %s15, 1
    %p128 = por %p126, %p127
    %p129 = scmp.ne.s32.totalorder %s120, %s121
    %p130 = scmp.eq.s32.totalorder %s15, 0
    %p131 = por %p129, %p130
    %p132 = scmp.ne.s32.totalorder %s120, %s121
    %p133 = scmp.eq.s32.totalorder %s16, 1
    %p134 = por %p132, %p133
    %p136 = scmp.ne.s32.totalorder %s121, %s135
    %p137 = scmp.eq.s32.totalorder %s16, 0
    %p138 = por %p136, %p137
    %s139 = ssub.s32 %s17, %s29
    %p140 = scmp.eq.s32.totalorder %s139, 0
    %s142 = sadd.s32 %s141, 1
    %s143 = scalar_select %p140, %s141, %s142
    %p146 = pneg %p140
    %p147 = scmp.eq.s32.totalorder %s10, 1
    %p148 = por %p146, %p147
    %p149 = scmp.ne.s32.totalorder %s141, %s144
    %p150 = scmp.eq.s32.totalorder %s10, 0
    %p151 = por %p149, %p150
    %p152 = scmp.ne.s32.totalorder %s141, %s144
    %p153 = scmp.eq.s32.totalorder %s15, 1
    %p154 = por %p152, %p153
    %p155 = scmp.ne.s32.totalorder %s144, %s145
    %p156 = scmp.eq.s32.totalorder %s15, 0
    %p157 = por %p155, %p156
    %p158 = scmp.ne.s32.totalorder %s144, %s145
    %p159 = scmp.eq.s32.totalorder %s16, 1
    %p160 = por %p158, %p159
    %p162 = scmp.ne.s32.totalorder %s145, %s161
    %p163 = scmp.eq.s32.totalorder %s16, 0
    %p164 = por %p162, %p163
    %p165 = scmp.le.s32.totalorder 1, %s10
    %p166 = scmp.lt.s32.totalorder %s10, 3
    %p167 = pnand %p165, %p166
    %p168 = pneg %p167
    // Predicated region
    $region9: #{convt_block.2} parent=5 // pred_check
      _
    $region10: #{convt_block.2} parent=5 // pred_check_branch
      %170 = sbr.rel (%p167) target = $region12
    $region11: #{convt_block.2} parent=5 // pred_region
      %s171 = ssub.s32 %s10, 1
      // Predicated region
      $region13: #{convt_block.2} parent=11 // pred_check
        %p172 = pneg %p131
      $region14: #{convt_block.2} parent=11 // pred_check_branch
        %174 = sbr.rel (%p172) target = $region16
      $region15: #{convt_block.2} parent=11 // pred_region
        _
      $region16: #{convt_block.2} parent=11 // pred_fallthru
        _
    $region12: #{convt_block.2} parent=5 // pred_fallthru
      _
    %p175 = scmp.lt.s32.totalorder %s10, 2
    // Predicated region
    $region17: #{convt_block.2} parent=5 // pred_check
      %p176 = pneg %p175
    $region18: #{convt_block.2} parent=5 // pred_check_branch
      %178 = sbr.rel (%p176) target = $region20
    $region19: #{convt_block.2} parent=5 // pred_region
      // Predicated region
      $region21: #{convt_block.2} parent=19 // pred_check
        %p179 = pneg %p44
      $region22: #{convt_block.2} parent=19 // pred_check_branch
        %181 = sbr.rel (%p179) target = $region24
      $region23: #{convt_block.2} parent=19 // pred_region
        %s182 = sadd.s32 %s17, %s18
        %s183 = smul.u32 8, %s182
        %p184 = scmp.lt.s32.totalorder %s183, 15
        %s185 = scalar_select %p184, %s183, 15
        %s186 = scalar_lea.vmem %s0, %s185
        %s187 = sadd.s32 %s17, %s18
        %s188 = smul.u32 8, %s187
      $region24: #{convt_block.2} parent=19 // pred_fallthru
        _
      // Predicated region
      $region25: #{convt_block.2} parent=19 // pred_check
        %p189 = pneg %p72
      $region26: #{convt_block.2} parent=19 // pred_check_branch
        %191 = sbr.rel (%p189) target = $region28
      $region27: #{convt_block.2} parent=19 // pred_region
        %s192 = sadd.s32 %s17, %s18
        %s193 = smul.u32 128, %s192
        %s194 = ssub.s32 264, %s193
        %p195 = scmp.lt.s32.totalorder %s194, 128
        %s196 = scalar_select %p195, %s194, 128
        %s197 = smul.u32 4, %s196
        %p198 = scmp.lt.s32.totalorder %s193, 263
        %s199 = scalar_select %p198, %s193, 263
        %s200 = smul.addr %s199, 4
        %s201 = scalar_lea.vmem %s1, %s200
        %s202 = sadd.s32 %s17, %s18
        %s203 = smul.u32 128, %s202
        %s204 = ssub.s32 264, %s203
        %p205 = scmp.lt.s32.totalorder %s204, 128
        %s206 = scalar_select %p205, %s204, 128
        %s207 = smul.u32 4, %s206
      $region28: #{convt_block.2} parent=19 // pred_fallthru
        _
      // Predicated region
      $region29: #{convt_block.2} parent=19 // pred_check
        %p208 = pneg %p104
      $region30: #{convt_block.2} parent=19 // pred_check_branch
        %210 = sbr.rel (%p208) target = $region32
      $region31: #{convt_block.2} parent=19 // pred_region
        %s211 = sadd.s32 %s17, %s18
        %s212 = sadd.s32 %s211, 1
        %s213 = smul.u32 %s212, 16
        %s214 = smul.u32 8, %s213
        %p215 = scmp.lt.s32.totalorder %s214, 263
        %s216 = scalar_select %p215, %s214, 263
        %s217 = smul.addr %s216, 4
        %s218 = scalar_lea.vmem %s2, %s217
        %s219 = sadd.s32 %s17, %s18
        %s220 = sadd.s32 %s219, 1
        %s221 = smul.u32 %s220, 16
        %s222 = smul.u32 8, %s221
      $region32: #{convt_block.2} parent=19 // pred_fallthru
        _
    $region20: #{convt_block.2} parent=5 // pred_fallthru
      _
    %p223 = scmp.le.s32.totalorder 1, %s10
    %p224 = scmp.lt.s32.totalorder %s10, 3
    %p225 = pnand %p223, %p224
    %p226 = pneg %p225
    // Predicated region
    $region33: #{convt_block.2} parent=5 // pred_check
      _
    $region34: #{convt_block.2} parent=5 // pred_check_branch
      %228 = sbr.rel (%p225) target = $region36
    $region35: #{convt_block.2} parent=5 // pred_region
      %s229 = ssub.s32 %s10, 1
      %s230 = sadd.s32 %s19, %s20
      %s231 = smul.u32 8, %s230
      %p232 = scmp.lt.s32.totalorder %s231, 15
      %s233 = scalar_select %p232, %s231, 15
      %s234 = scalar_lea.vmem %s0, %s233
      %p235 = pneg %p50
      %p236 = pneg %p47
      %s237 = sadd.s32 %s19, %s20
      %s238 = smul.u32 128, %s237
      %s239 = ssub.s32 264, %s238
      %p240 = scmp.lt.s32.totalorder %s239, 128
      %s241 = scalar_select %p240, %s239, 128
      %s242 = smul.u32 4, %s241
      %p243 = scmp.lt.s32.totalorder %s238, 263
      %s244 = scalar_select %p243, %s238, 263
      %s245 = smul.addr %s244, 4
      %s246 = scalar_lea.vmem %s1, %s245
      %p247 = pneg %p78
      %p248 = pneg %p75
      %s249 = sadd.s32 %s19, %s20
      %s250 = sadd.s32 %s249, 1
      %s251 = smul.u32 %s250, 16
      %s252 = smul.u32 8, %s251
      %p253 = scmp.lt.s32.totalorder %s252, 263
      %s254 = scalar_select %p253, %s252, 263
      %s255 = smul.addr %s254, 4
      %s256 = scalar_lea.vmem %s2, %s255
      %p257 = pneg %p110
      %p258 = pneg %p107
      %p259 = pneg %p131
      %p260 = pneg %p128
      %p261 = pneg %p157
      %p262 = pneg %p154
      %p263 = scmp.lt.s32.totalorder %s19, 1
      %s264 = scalar_select %p263, %s19, 1
      %s265 = smul.addr %s264, 2
      %s266 = scalar_lea.vmem %s4, %s265
      %s267 = sadd.s32 %s19, %s20
      %s268 = smul.u32 8, %s267
      %p269 = scmp.lt.s32.totalorder %s268, 15
      %s270 = scalar_select %p269, %s268, 15
      %s271 = scalar_lea.vmem %s0, %s270
      %s272 = sadd.s32 %s19, %s20
      %s273 = smul.u32 8, %s272
      %s274 = sadd.s32 %s19, %s20
      %s275 = smul.u32 128, %s274
      %s276 = ssub.s32 264, %s275
      %p277 = scmp.lt.s32.totalorder %s276, 128
      %s278 = scalar_select %p277, %s276, 128
      %s279 = smul.u32 4, %s278
      %p280 = scmp.lt.s32.totalorder %s275, 263
      %s281 = scalar_select %p280, %s275, 263
      %s282 = smul.addr %s281, 4
      %s283 = scalar_lea.vmem %s1, %s282
      %s284 = sadd.s32 %s19, %s20
      %s285 = smul.u32 128, %s284
      %s286 = ssub.s32 264, %s285
      %p287 = scmp.lt.s32.totalorder %s286, 128
      %s288 = scalar_select %p287, %s286, 128
      %s289 = smul.u32 4, %s288
      %s290 = sadd.s32 %s19, %s20
      %s291 = sadd.s32 %s290, 1
      %s292 = smul.u32 %s291, 16
      %s293 = smul.u32 8, %s292
      %p294 = scmp.lt.s32.totalorder %s293, 263
      %s295 = scalar_select %p294, %s293, 263
      %s296 = smul.addr %s295, 4
      %s297 = scalar_lea.vmem %s2, %s296
      %s298 = sadd.s32 %s19, %s20
      %s299 = sadd.s32 %s298, 1
      %s300 = smul.u32 %s299, 16
      %s301 = smul.u32 8, %s300
      %p302 = scmp.lt.s32.totalorder %s19, 1
      %s303 = scalar_select %p302, %s19, 1
      %s304 = smul.addr %s303, 2
      %s305 = scalar_lea.vmem %s4, %s304
      %p307 = scmp.eq.s32.totalorder %s20, 0
      // Predicated region
      $region37: #{convt_block.2} parent=35 // pred_check
        %p308 = pneg %p307
      $region38: #{convt_block.2} parent=35 // pred_check_branch
        %310 = sbr.rel (%p308) target = $region40
      $region39: #{convt_block.2} parent=35 // pred_region
        %311 = vst [vmem:[%s305] sm:$0x3] 0.0
      $region40: #{convt_block.2} parent=35 // pred_fallthru
        _
      %v312 = vld [vmem:[%s283] sm:$0xf]
      %v313 = vld [vmem:[%s283 + $0x4] sm:$0xf]
      %v314 = vld [vmem:[%s283 + $0x8] sm:$0xf]
      %v315 = vld [vmem:[%s283 + $0xc] sm:$0xf]
      %v316 = vld [vmem:[%s283 + $0x10] sm:$0xf]
      %v317 = vld [vmem:[%s283 + $0x14] sm:$0xf]
      %v318 = vld [vmem:[%s283 + $0x18] sm:$0xf]
      %v319 = vld [vmem:[%s283 + $0x1c] sm:$0xf]
      %v320 = vld [vmem:[%s283 + $0x20] sm:$0xf]
      %v321 = vld [vmem:[%s283 + $0x24] sm:$0xf]
      %v322 = vld [vmem:[%s283 + $0x28] sm:$0xf]
      %v323 = vld [vmem:[%s283 + $0x2c] sm:$0xf]
      %v324 = vld [vmem:[%s283 + $0x30] sm:$0xf]
      %v325 = vld [vmem:[%s283 + $0x34] sm:$0xf]
      %v326 = vld [vmem:[%s283 + $0x38] sm:$0xf]
      %v327 = vld [vmem:[%s283 + $0x3c] sm:$0xf]
      %v328 = vld [vmem:[%s283 + $0x40] sm:$0xf]
      %v329 = vld [vmem:[%s283 + $0x44] sm:$0xf]
      %v330 = vld [vmem:[%s283 + $0x48] sm:$0xf]
      %v331 = vld [vmem:[%s283 + $0x4c] sm:$0xf]
      %v332 = vld [vmem:[%s283 + $0x50] sm:$0xf]
      %v333 = vld [vmem:[%s283 + $0x54] sm:$0xf]
      %v334 = vld [vmem:[%s283 + $0x58] sm:$0xf]
      %v335 = vld [vmem:[%s283 + $0x5c] sm:$0xf]
      %v336 = vld [vmem:[%s283 + $0x60] sm:$0xf]
      %v337 = vld [vmem:[%s283 + $0x64] sm:$0xf]
      %v338 = vld [vmem:[%s283 + $0x68] sm:$0xf]
      %v339 = vld [vmem:[%s283 + $0x6c] sm:$0xf]
      %v340 = vld [vmem:[%s283 + $0x70] sm:$0xf]
      %v341 = vld [vmem:[%s283 + $0x74] sm:$0xf]
      %v342 = vld [vmem:[%s283 + $0x78] sm:$0xf]
      %v343 = vld [vmem:[%s283 + $0x7c] sm:$0xf]
      %v344 = vld [vmem:[%s283 + $0x80] sm:$0xf]
      %v345 = vld [vmem:[%s283 + $0x84] sm:$0xf]
      %v346 = vld [vmem:[%s283 + $0x88] sm:$0xf]
      %v347 = vld [vmem:[%s283 + $0x8c] sm:$0xf]
      %v348 = vld [vmem:[%s283 + $0x90] sm:$0xf]
      %v349 = vld [vmem:[%s283 + $0x94] sm:$0xf]
      %v350 = vld [vmem:[%s283 + $0x98] sm:$0xf]
      %v351 = vld [vmem:[%s283 + $0x9c] sm:$0xf]
      %v352 = vld [vmem:[%s283 + $0xa0] sm:$0xf]
      %v353 = vld [vmem:[%s283 + $0xa4] sm:$0xf]
      %v354 = vld [vmem:[%s283 + $0xa8] sm:$0xf]
      %v355 = vld [vmem:[%s283 + $0xac] sm:$0xf]
      %v356 = vld [vmem:[%s283 + $0xb0] sm:$0xf]
      %v357 = vld [vmem:[%s283 + $0xb4] sm:$0xf]
      %v358 = vld [vmem:[%s283 + $0xb8] sm:$0xf]
      %v359 = vld [vmem:[%s283 + $0xbc] sm:$0xf]
      %v360 = vld [vmem:[%s283 + $0xc0] sm:$0xf]
      %v361 = vld [vmem:[%s283 + $0xc4] sm:$0xf]
      %v362 = vld [vmem:[%s283 + $0xc8] sm:$0xf]
      %v363 = vld [vmem:[%s283 + $0xcc] sm:$0xf]
      %v364 = vld [vmem:[%s283 + $0xd0] sm:$0xf]
      %v365 = vld [vmem:[%s283 + $0xd4] sm:$0xf]
      %v366 = vld [vmem:[%s283 + $0xd8] sm:$0xf]
      %v367 = vld [vmem:[%s283 + $0xdc] sm:$0xf]
      %v368 = vld [vmem:[%s283 + $0xe0] sm:$0xf]
      %v369 = vld [vmem:[%s283 + $0xe4] sm:$0xf]
      %v370 = vld [vmem:[%s283 + $0xe8] sm:$0xf]
      %v371 = vld [vmem:[%s283 + $0xec] sm:$0xf]
      %v372 = vld [vmem:[%s283 + $0xf0] sm:$0xf]
      %v373 = vld [vmem:[%s283 + $0xf4] sm:$0xf]
      %v374 = vld [vmem:[%s283 + $0xf8] sm:$0xf]
      %v375 = vld [vmem:[%s283 + $0xfc] sm:$0xf]
      %v376 = vld [vmem:[%s283 + $0x100] sm:$0xf]
      %v377 = vld [vmem:[%s283 + $0x104] sm:$0xf]
      %v378 = vld [vmem:[%s283 + $0x108] sm:$0xf]
      %v379 = vld [vmem:[%s283 + $0x10c] sm:$0xf]
      %v380 = vld [vmem:[%s283 + $0x110] sm:$0xf]
      %v381 = vld [vmem:[%s283 + $0x114] sm:$0xf]
      %v382 = vld [vmem:[%s283 + $0x118] sm:$0xf]
      %v383 = vld [vmem:[%s283 + $0x11c] sm:$0xf]
      %v384 = vld [vmem:[%s283 + $0x120] sm:$0xf]
      %v385 = vld [vmem:[%s283 + $0x124] sm:$0xf]
      %v386 = vld [vmem:[%s283 + $0x128] sm:$0xf]
      %v387 = vld [vmem:[%s283 + $0x12c] sm:$0xf]
      %v388 = vld [vmem:[%s283 + $0x130] sm:$0xf]
      %v389 = vld [vmem:[%s283 + $0x134] sm:$0xf]
      %v390 = vld [vmem:[%s283 + $0x138] sm:$0xf]
      %v391 = vld [vmem:[%s283 + $0x13c] sm:$0xf]
      %v392 = vld [vmem:[%s283 + $0x140] sm:$0xf]
      %v393 = vld [vmem:[%s283 + $0x144] sm:$0xf]
      %v394 = vld [vmem:[%s283 + $0x148] sm:$0xf]
      %v395 = vld [vmem:[%s283 + $0x14c] sm:$0xf]
      %v396 = vld [vmem:[%s283 + $0x150] sm:$0xf]
      %v397 = vld [vmem:[%s283 + $0x154] sm:$0xf]
      %v398 = vld [vmem:[%s283 + $0x158] sm:$0xf]
      %v399 = vld [vmem:[%s283 + $0x15c] sm:$0xf]
      %v400 = vld [vmem:[%s283 + $0x160] sm:$0xf]
      %v401 = vld [vmem:[%s283 + $0x164] sm:$0xf]
      %v402 = vld [vmem:[%s283 + $0x168] sm:$0xf]
      %v403 = vld [vmem:[%s283 + $0x16c] sm:$0xf]
      %v404 = vld [vmem:[%s283 + $0x170] sm:$0xf]
      %v405 = vld [vmem:[%s283 + $0x174] sm:$0xf]
      %v406 = vld [vmem:[%s283 + $0x178] sm:$0xf]
      %v407 = vld [vmem:[%s283 + $0x17c] sm:$0xf]
      %v408 = vld [vmem:[%s283 + $0x180] sm:$0xf]
      %v409 = vld [vmem:[%s283 + $0x184] sm:$0xf]
      %v410 = vld [vmem:[%s283 + $0x188] sm:$0xf]
      %v411 = vld [vmem:[%s283 + $0x18c] sm:$0xf]
      %v412 = vld [vmem:[%s283 + $0x190] sm:$0xf]
      %v413 = vld [vmem:[%s283 + $0x194] sm:$0xf]
      %v414 = vld [vmem:[%s283 + $0x198] sm:$0xf]
      %v415 = vld [vmem:[%s283 + $0x19c] sm:$0xf]
      %v416 = vld [vmem:[%s283 + $0x1a0] sm:$0xf]
      %v417 = vld [vmem:[%s283 + $0x1a4] sm:$0xf]
      %v418 = vld [vmem:[%s283 + $0x1a8] sm:$0xf]
      %v419 = vld [vmem:[%s283 + $0x1ac] sm:$0xf]
      %v420 = vld [vmem:[%s283 + $0x1b0] sm:$0xf]
      %v421 = vld [vmem:[%s283 + $0x1b4] sm:$0xf]
      %v422 = vld [vmem:[%s283 + $0x1b8] sm:$0xf]
      %v423 = vld [vmem:[%s283 + $0x1bc] sm:$0xf]
      %v424 = vld [vmem:[%s283 + $0x1c0] sm:$0xf]
      %v425 = vld [vmem:[%s283 + $0x1c4] sm:$0xf]
      %v426 = vld [vmem:[%s283 + $0x1c8] sm:$0xf]
      %v427 = vld [vmem:[%s283 + $0x1cc] sm:$0xf]
      %v428 = vld [vmem:[%s283 + $0x1d0] sm:$0xf]
      %v429 = vld [vmem:[%s283 + $0x1d4] sm:$0xf]
      %v430 = vld [vmem:[%s283 + $0x1d8] sm:$0xf]
      %v431 = vld [vmem:[%s283 + $0x1dc] sm:$0xf]
      %v432 = vld [vmem:[%s283 + $0x1e0] sm:$0xf]
      %v433 = vld [vmem:[%s283 + $0x1e4] sm:$0xf]
      %v434 = vld [vmem:[%s283 + $0x1e8] sm:$0xf]
      %v435 = vld [vmem:[%s283 + $0x1ec] sm:$0xf]
      %v436 = vld [vmem:[%s283 + $0x1f0] sm:$0xf]
      %v437 = vld [vmem:[%s283 + $0x1f4] sm:$0xf]
      %v438 = vld [vmem:[%s283 + $0x1f8] sm:$0xf]
      %v439 = vld [vmem:[%s283 + $0x1fc] sm:$0xf]
      %v440 = vld [vmem:[%s297] sm:$0xf]
      %v441 = vld [vmem:[%s297 + $0x4] sm:$0xf]
      %v442 = vld [vmem:[%s297 + $0x8] sm:$0xf]
      %v443 = vld [vmem:[%s297 + $0xc] sm:$0xf]
      %v444 = vld [vmem:[%s297 + $0x10] sm:$0xf]
      %v445 = vld [vmem:[%s297 + $0x14] sm:$0xf]
      %v446 = vld [vmem:[%s297 + $0x18] sm:$0xf]
      %v447 = vld [vmem:[%s297 + $0x1c] sm:$0xf]
      %v448 = vld [vmem:[%s3] sm:$0xf]
      %v449 = vld [vmem:[%s3 + $0x4] sm:$0x3]
      %v574 = vunpack.c.l.b16 %v316
      %v575 = vunpack.c.l.b16 %v317
      %v576 = vunpack.c.l.b16 %v318
      %v577 = vunpack.c.l.b16 %v319
      %v578 = vunpack.c.l.b16 %v320
      %v579 = vunpack.c.l.b16 %v321
      %v580 = vunpack.c.l.b16 %v322
      %v581 = vunpack.c.l.b16 %v323
      %v582 = vunpack.c.l.b16 %v324
      %v583 = vunpack.c.l.b16 %v325
      %v584 = vunpack.c.l.b16 %v326
      %v585 = vunpack.c.l.b16 %v327
      %v586 = vunpack.c.l.b16 %v328
      %v587 = vunpack.c.l.b16 %v329
      %v588 = vunpack.c.l.b16 %v330
      %v589 = vunpack.c.l.b16 %v331
      %v590 = vunpack.c.l.b16 %v332
      %v591 = vunpack.c.l.b16 %v333
      %v592 = vunpack.c.l.b16 %v334
      %v593 = vunpack.c.l.b16 %v335
      %v594 = vunpack.c.l.b16 %v336
      %v595 = vunpack.c.l.b16 %v337
      %v596 = vunpack.c.l.b16 %v338
      %v597 = vunpack.c.l.b16 %v339
      %v598 = vunpack.c.l.b16 %v340
      %v599 = vunpack.c.l.b16 %v341
      %v600 = vunpack.c.l.b16 %v342
      %v601 = vunpack.c.l.b16 %v343
      %v602 = vunpack.c.l.b16 %v344
      %v603 = vunpack.c.l.b16 %v345
      %v604 = vunpack.c.l.b16 %v346
      %v605 = vunpack.c.l.b16 %v347
      %v606 = vunpack.c.l.b16 %v348
      %v607 = vunpack.c.l.b16 %v349
      %v608 = vunpack.c.l.b16 %v350
      %v609 = vunpack.c.l.b16 %v351
      %v610 = vunpack.c.l.b16 %v352
      %v611 = vunpack.c.l.b16 %v353
      %v612 = vunpack.c.l.b16 %v354
      %v613 = vunpack.c.l.b16 %v355
      %v614 = vunpack.c.l.b16 %v356
      %v615 = vunpack.c.l.b16 %v357
      %v616 = vunpack.c.l.b16 %v358
      %v617 = vunpack.c.l.b16 %v359
      %v618 = vunpack.c.l.b16 %v360
      %v619 = vunpack.c.l.b16 %v361
      %v620 = vunpack.c.l.b16 %v362
      %v621 = vunpack.c.l.b16 %v363
      %v622 = vunpack.c.l.b16 %v364
      %v623 = vunpack.c.l.b16 %v365
      %v624 = vunpack.c.l.b16 %v366
      %v625 = vunpack.c.l.b16 %v367
      %v626 = vunpack.c.l.b16 %v368
      %v627 = vunpack.c.l.b16 %v369
      %v628 = vunpack.c.l.b16 %v370
      %v629 = vunpack.c.l.b16 %v371
      %v630 = vunpack.c.l.b16 %v372
      %v631 = vunpack.c.l.b16 %v373
      %v632 = vunpack.c.l.b16 %v374
      %v633 = vunpack.c.l.b16 %v375
      %v634 = vunpack.c.l.b16 %v376
      %v635 = vunpack.c.l.b16 %v377
      %v636 = vunpack.c.l.b16 %v378
      %v637 = vunpack.c.l.b16 %v379
      %v638 = vunpack.c.l.b16 %v380
      %v639 = vunpack.c.l.b16 %v381
      %v640 = vunpack.c.l.b16 %v382
      %v641 = vunpack.c.l.b16 %v383
      %v642 = vunpack.c.l.b16 %v384
      %v643 = vunpack.c.l.b16 %v385
      %v644 = vunpack.c.l.b16 %v386
      %v645 = vunpack.c.l.b16 %v387
      %v646 = vunpack.c.l.b16 %v388
      %v647 = vunpack.c.l.b16 %v389
      %v648 = vunpack.c.l.b16 %v390
      %v649 = vunpack.c.l.b16 %v391
      %v650 = vunpack.c.l.b16 %v392
      %v651 = vunpack.c.l.b16 %v393
      %v652 = vunpack.c.l.b16 %v394
      %v653 = vunpack.c.l.b16 %v395
      %v654 = vunpack.c.l.b16 %v396
      %v655 = vunpack.c.l.b16 %v397
      %v656 = vunpack.c.l.b16 %v398
      %v657 = vunpack.c.l.b16 %v399
      %v658 = vunpack.c.l.b16 %v400
      %v659 = vunpack.c.l.b16 %v401
      %v660 = vunpack.c.l.b16 %v402
      %v661 = vunpack.c.l.b16 %v403
      %v662 = vunpack.c.l.b16 %v404
      %v663 = vunpack.c.l.b16 %v405
      %v664 = vunpack.c.l.b16 %v406
      %v665 = vunpack.c.l.b16 %v407
      %v666 = vunpack.c.l.b16 %v408
      %v667 = vunpack.c.l.b16 %v409
      %v668 = vunpack.c.l.b16 %v410
      %v669 = vunpack.c.l.b16 %v411
      %v670 = vunpack.c.l.b16 %v412
      %v671 = vunpack.c.l.b16 %v413
      %v672 = vunpack.c.l.b16 %v414
      %v673 = vunpack.c.l.b16 %v415
      %v674 = vunpack.c.l.b16 %v416
      %v675 = vunpack.c.l.b16 %v417
      %v676 = vunpack.c.l.b16 %v418
      %v677 = vunpack.c.l.b16 %v419
      %v678 = vunpack.c.l.b16 %v420
      %v679 = vunpack.c.l.b16 %v421
      %v680 = vunpack.c.l.b16 %v422
      %v681 = vunpack.c.l.b16 %v423
      %v682 = vunpack.c.l.b16 %v424
      %v683 = vunpack.c.l.b16 %v425
      %v684 = vunpack.c.l.b16 %v426
      %v685 = vunpack.c.l.b16 %v427
      %v686 = vunpack.c.l.b16 %v428
      %v687 = vunpack.c.l.b16 %v429
      %v688 = vunpack.c.l.b16 %v430
      %v689 = vunpack.c.l.b16 %v431
      %v690 = vunpack.c.l.b16 %v432
      %v691 = vunpack.c.l.b16 %v433
      %v692 = vunpack.c.l.b16 %v434
      %v693 = vunpack.c.l.b16 %v435
      %v694 = vunpack.c.l.b16 %v436
      %v695 = vunpack.c.l.b16 %v437
      %v696 = vunpack.c.l.b16 %v438
      %v697 = vunpack.c.l.b16 %v439
      %v698 = vpack.c.b16 %v575, %v574
      %v699 = vpack.c.b16 %v577, %v576
      %v700 = vpack.c.b16 %v579, %v578
      %v701 = vpack.c.b16 %v581, %v580
      %v702 = vpack.c.b16 %v583, %v582
      %v703 = vpack.c.b16 %v585, %v584
      %v704 = vpack.c.b16 %v587, %v586
      %v705 = vpack.c.b16 %v589, %v588
      %v706 = vpack.c.b16 %v591, %v590
      %v707 = vpack.c.b16 %v593, %v592
      %v708 = vpack.c.b16 %v595, %v594
      %v709 = vpack.c.b16 %v597, %v596
      %v710 = vpack.c.b16 %v599, %v598
      %v711 = vpack.c.b16 %v601, %v600
      %v712 = vpack.c.b16 %v603, %v602
      %v713 = vpack.c.b16 %v605, %v604
      %v714 = vpack.c.b16 %v607, %v606
      %v715 = vpack.c.b16 %v609, %v608
      %v716 = vpack.c.b16 %v611, %v610
      %v717 = vpack.c.b16 %v613, %v612
      %v718 = vpack.c.b16 %v615, %v614
      %v719 = vpack.c.b16 %v617, %v616
      %v720 = vpack.c.b16 %v619, %v618
      %v721 = vpack.c.b16 %v621, %v620
      %v722 = vpack.c.b16 %v623, %v622
      %v723 = vpack.c.b16 %v625, %v624
      %v724 = vpack.c.b16 %v627, %v626
      %v725 = vpack.c.b16 %v629, %v628
      %v726 = vpack.c.b16 %v631, %v630
      %v727 = vpack.c.b16 %v633, %v632
      %v728 = vpack.c.b16 %v635, %v634
      %v729 = vpack.c.b16 %v637, %v636
      %v730 = vpack.c.b16 %v639, %v638
      %v731 = vpack.c.b16 %v641, %v640
      %v732 = vpack.c.b16 %v643, %v642
      %v733 = vpack.c.b16 %v645, %v644
      %v734 = vpack.c.b16 %v647, %v646
      %v735 = vpack.c.b16 %v649, %v648
      %v736 = vpack.c.b16 %v651, %v650
      %v737 = vpack.c.b16 %v653, %v652
      %v738 = vpack.c.b16 %v655, %v654
      %v739 = vpack.c.b16 %v657, %v656
      %v740 = vpack.c.b16 %v659, %v658
      %v741 = vpack.c.b16 %v661, %v660
      %v742 = vpack.c.b16 %v663, %v662
      %v743 = vpack.c.b16 %v665, %v664
      %v744 = vpack.c.b16 %v667, %v666
      %v745 = vpack.c.b16 %v669, %v668
      %v746 = vpack.c.b16 %v671, %v670
      %v747 = vpack.c.b16 %v673, %v672
      %v748 = vpack.c.b16 %v675, %v674
      %v749 = vpack.c.b16 %v677, %v676
      %v750 = vpack.c.b16 %v679, %v678
      %v751 = vpack.c.b16 %v681, %v680
      %v752 = vpack.c.b16 %v683, %v682
      %v753 = vpack.c.b16 %v685, %v684
      %v754 = vpack.c.b16 %v687, %v686
      %v755 = vpack.c.b16 %v689, %v688
      %v756 = vpack.c.b16 %v691, %v690
      %v757 = vpack.c.b16 %v693, %v692
      %v758 = vpack.c.b16 %v695, %v694
      %v759 = vpack.c.b16 %v697, %v696
      %v764 = vunpack.c.l.b16 %v440
      %v765 = vunpack.c.l.b16 %v441
      %v766 = vunpack.c.l.b16 %v442
      %v767 = vunpack.c.l.b16 %v443
      %v768 = vpack.c.b16 %v765, %v764
      %v769 = vpack.c.b16 %v767, %v766
      %s770 = scalar_lea.vmem %s3, 8
      %v771 = vld [vmem:[%s770] sm:$0xf]
      %v772 = vld [vmem:[%s770 + $0x4] sm:$0x3]
      %v775 = vunpack.c.l.b16 %v771
      %v776 = vunpack.c.l.b16 %v772
      %v777 = vpack.c.b16 %v776, %v775
      %vm778 = vcmask 97280
      %v780 = vsel %vm778, %v698, 0
      %v783 = vsel %vm778, %v699, 0
      %v786 = vsel %vm778, %v700, 0
      %v789 = vsel %vm778, %v701, 0
      %v792 = vsel %vm778, %v702, 0
      %v795 = vsel %vm778, %v703, 0
      %v798 = vsel %vm778, %v704, 0
      %v801 = vsel %vm778, %v705, 0
      %v804 = vsel %vm778, %v706, 0
      %v807 = vsel %vm778, %v707, 0
      %v810 = vsel %vm778, %v708, 0
      %v813 = vsel %vm778, %v709, 0
      %v816 = vsel %vm778, %v710, 0
      %v819 = vsel %vm778, %v711, 0
      %v822 = vsel %vm778, %v712, 0
      %v825 = vsel %vm778, %v713, 0
      %v828 = vsel %vm778, %v714, 0
      %v831 = vsel %vm778, %v715, 0
      %v834 = vsel %vm778, %v716, 0
      %v837 = vsel %vm778, %v717, 0
      %v840 = vsel %vm778, %v718, 0
      %v843 = vsel %vm778, %v719, 0
      %v846 = vsel %vm778, %v720, 0
      %v849 = vsel %vm778, %v721, 0
      %v852 = vsel %vm778, %v722, 0
      %v855 = vsel %vm778, %v723, 0
      %v858 = vsel %vm778, %v724, 0
      %v861 = vsel %vm778, %v725, 0
      %v864 = vsel %vm778, %v726, 0
      %v867 = vsel %vm778, %v727, 0
      %v870 = vsel %vm778, %v728, 0
      %v873 = vsel %vm778, %v729, 0
      %v876 = vsel %vm778, %v730, 0
      %v879 = vsel %vm778, %v731, 0
      %v882 = vsel %vm778, %v732, 0
      %v885 = vsel %vm778, %v733, 0
      %v888 = vsel %vm778, %v734, 0
      %v891 = vsel %vm778, %v735, 0
      %v894 = vsel %vm778, %v736, 0
      %v897 = vsel %vm778, %v737, 0
      %v900 = vsel %vm778, %v738, 0
      %v903 = vsel %vm778, %v739, 0
      %v906 = vsel %vm778, %v740, 0
      %v909 = vsel %vm778, %v741, 0
      %v912 = vsel %vm778, %v742, 0
      %v915 = vsel %vm778, %v743, 0
      %v918 = vsel %vm778, %v744, 0
      %v921 = vsel %vm778, %v745, 0
      %v924 = vsel %vm778, %v746, 0
      %v927 = vsel %vm778, %v747, 0
      %v930 = vsel %vm778, %v748, 0
      %v933 = vsel %vm778, %v749, 0
      %v936 = vsel %vm778, %v750, 0
      %v939 = vsel %vm778, %v751, 0
      %v942 = vsel %vm778, %v752, 0
      %v945 = vsel %vm778, %v753, 0
      %v948 = vsel %vm778, %v754, 0
      %v951 = vsel %vm778, %v755, 0
      %v954 = vsel %vm778, %v756, 0
      %v957 = vsel %vm778, %v757, 0
      %v960 = vsel %vm778, %v758, 0
      %v963 = vsel %vm778, %v759, 0
      %v966 = vsel %vm778, %v768, 0
      %v969 = vsel %vm778, %v769, 0
      %vm971 = vcmask 1045504
      %v973 = vsel %vm971, %v777, 0
      %975 = vmatpush.bf16.msra.mxu0 0
      %976 = vmatpush.bf16.msra.mxu0 0
      %977 = vmatpush.bf16.msra.mxu0 0
      %978 = vmatpush.bf16.msra.mxu0 0
      %979 = vmatpush.bf16.msra.mxu0 0
      %980 = vmatpush.bf16.msra.mxu0 0
      %981 = vmatpush.bf16.msra.mxu0 0
      %982 = vmatpush.bf16.msra.mxu0 %v973
      %983 = vmatmul.bf16.gmra.mxu0 %v780
      %v984 = vpop.f32.mrf.mxu0
      %v985 = vadd.f32 0.0, %v984
      %v986 = vpop.f32.mrf.mxu0
      %v987 = vadd.f32 0.0, %v986
      %988 = vmatmul.bf16.gmra.mxu0 %v783
      %v989 = vpop.f32.mrf.mxu0
      %v990 = vadd.f32 0.0, %v989
      %v991 = vpop.f32.mrf.mxu0
      %v992 = vadd.f32 0.0, %v991
      %993 = vmatmul.bf16.gmra.mxu0 %v786
      %v994 = vpop.f32.mrf.mxu0
      %v995 = vadd.f32 0.0, %v994
      %v996 = vpop.f32.mrf.mxu0
      %v997 = vadd.f32 0.0, %v996
      %998 = vmatmul.bf16.gmra.mxu0 %v789
      %v999 = vpop.f32.mrf.mxu0
      %v1000 = vadd.f32 0.0, %v999
      %v1001 = vpop.f32.mrf.mxu0
      %v1002 = vadd.f32 0.0, %v1001
      %1003 = vmatmul.bf16.gmra.mxu0 %v792
      %v1004 = vpop.f32.mrf.mxu0
      %v1005 = vadd.f32 0.0, %v1004
      %v1006 = vpop.f32.mrf.mxu0
      %v1007 = vadd.f32 0.0, %v1006
      %1008 = vmatmul.bf16.gmra.mxu0 %v795
      %v1009 = vpop.f32.mrf.mxu0
      %v1010 = vadd.f32 0.0, %v1009
      %v1011 = vpop.f32.mrf.mxu0
      %v1012 = vadd.f32 0.0, %v1011
      %1013 = vmatmul.bf16.gmra.mxu0 %v798
      %v1014 = vpop.f32.mrf.mxu0
      %v1015 = vadd.f32 0.0, %v1014
      %v1016 = vpop.f32.mrf.mxu0
      %v1017 = vadd.f32 0.0, %v1016
      %1018 = vmatmul.bf16.gmra.mxu0 %v801
      %v1019 = vpop.f32.mrf.mxu0
      %v1020 = vadd.f32 0.0, %v1019
      %v1021 = vpop.f32.mrf.mxu0
      %v1022 = vadd.f32 0.0, %v1021
      %1023 = vmatmul.bf16.gmra.mxu0 %v804
      %v1024 = vpop.f32.mrf.mxu0
      %v1025 = vadd.f32 0.0, %v1024
      %v1026 = vpop.f32.mrf.mxu0
      %v1027 = vadd.f32 0.0, %v1026
      %1028 = vmatmul.bf16.gmra.mxu0 %v807
      %v1029 = vpop.f32.mrf.mxu0
      %v1030 = vadd.f32 0.0, %v1029
      %v1031 = vpop.f32.mrf.mxu0
      %v1032 = vadd.f32 0.0, %v1031
      %1033 = vmatmul.bf16.gmra.mxu0 %v810
      %v1034 = vpop.f32.mrf.mxu0
      %v1035 = vadd.f32 0.0, %v1034
      %v1036 = vpop.f32.mrf.mxu0
      %v1037 = vadd.f32 0.0, %v1036
      %1038 = vmatmul.bf16.gmra.mxu0 %v813
      %v1039 = vpop.f32.mrf.mxu0
      %v1040 = vadd.f32 0.0, %v1039
      %v1041 = vpop.f32.mrf.mxu0
      %v1042 = vadd.f32 0.0, %v1041
      %1043 = vmatmul.bf16.gmra.mxu0 %v816
      %v1044 = vpop.f32.mrf.mxu0
      %v1045 = vadd.f32 0.0, %v1044
      %v1046 = vpop.f32.mrf.mxu0
      %v1047 = vadd.f32 0.0, %v1046
      %1048 = vmatmul.bf16.gmra.mxu0 %v819
      %v1049 = vpop.f32.mrf.mxu0
      %v1050 = vadd.f32 0.0, %v1049
      %v1051 = vpop.f32.mrf.mxu0
      %v1052 = vadd.f32 0.0, %v1051
      %1053 = vmatmul.bf16.gmra.mxu0 %v822
      %v1054 = vpop.f32.mrf.mxu0
      %v1055 = vadd.f32 0.0, %v1054
      %v1056 = vpop.f32.mrf.mxu0
      %v1057 = vadd.f32 0.0, %v1056
      %1058 = vmatmul.bf16.gmra.mxu0 %v825
      %v1059 = vpop.f32.mrf.mxu0
      %v1060 = vadd.f32 0.0, %v1059
      %v1061 = vpop.f32.mrf.mxu0
      %v1062 = vadd.f32 0.0, %v1061
      %1063 = vmatmul.bf16.gmra.mxu0 %v828
      %v1064 = vpop.f32.mrf.mxu0
      %v1065 = vadd.f32 0.0, %v1064
      %v1066 = vpop.f32.mrf.mxu0
      %v1067 = vadd.f32 0.0, %v1066
      %1068 = vmatmul.bf16.gmra.mxu0 %v831
      %v1069 = vpop.f32.mrf.mxu0
      %v1070 = vadd.f32 0.0, %v1069
      %v1071 = vpop.f32.mrf.mxu0
      %v1072 = vadd.f32 0.0, %v1071
      %1073 = vmatmul.bf16.gmra.mxu0 %v834
      %v1074 = vpop.f32.mrf.mxu0
      %v1075 = vadd.f32 0.0, %v1074
      %v1076 = vpop.f32.mrf.mxu0
      %v1077 = vadd.f32 0.0, %v1076
      %1078 = vmatmul.bf16.gmra.mxu0 %v837
      %v1079 = vpop.f32.mrf.mxu0
      %v1080 = vadd.f32 0.0, %v1079
      %v1081 = vpop.f32.mrf.mxu0
      %v1082 = vadd.f32 0.0, %v1081
      %1083 = vmatmul.bf16.gmra.mxu0 %v840
      %v1084 = vpop.f32.mrf.mxu0
      %v1085 = vadd.f32 0.0, %v1084
      %v1086 = vpop.f32.mrf.mxu0
      %v1087 = vadd.f32 0.0, %v1086
      %1088 = vmatmul.bf16.gmra.mxu0 %v843
      %v1089 = vpop.f32.mrf.mxu0
      %v1090 = vadd.f32 0.0, %v1089
      %v1091 = vpop.f32.mrf.mxu0
      %v1092 = vadd.f32 0.0, %v1091
      %1093 = vmatmul.bf16.gmra.mxu0 %v846
      %v1094 = vpop.f32.mrf.mxu0
      %v1095 = vadd.f32 0.0, %v1094
      %v1096 = vpop.f32.mrf.mxu0
      %v1097 = vadd.f32 0.0, %v1096
      %1098 = vmatmul.bf16.gmra.mxu0 %v849
      %v1099 = vpop.f32.mrf.mxu0
      %v1100 = vadd.f32 0.0, %v1099
      %v1101 = vpop.f32.mrf.mxu0
      %v1102 = vadd.f32 0.0, %v1101
      %1103 = vmatmul.bf16.gmra.mxu0 %v852
      %v1104 = vpop.f32.mrf.mxu0
      %v1105 = vadd.f32 0.0, %v1104
      %v1106 = vpop.f32.mrf.mxu0
      %v1107 = vadd.f32 0.0, %v1106
      %1108 = vmatmul.bf16.gmra.mxu0 %v855
      %v1109 = vpop.f32.mrf.mxu0
      %v1110 = vadd.f32 0.0, %v1109
      %v1111 = vpop.f32.mrf.mxu0
      %v1112 = vadd.f32 0.0, %v1111
      %1113 = vmatmul.bf16.gmra.mxu0 %v858
      %v1114 = vpop.f32.mrf.mxu0
      %v1115 = vadd.f32 0.0, %v1114
      %v1116 = vpop.f32.mrf.mxu0
      %v1117 = vadd.f32 0.0, %v1116
      %1118 = vmatmul.bf16.gmra.mxu0 %v861
      %v1119 = vpop.f32.mrf.mxu0
      %v1120 = vadd.f32 0.0, %v1119
      %v1121 = vpop.f32.mrf.mxu0
      %v1122 = vadd.f32 0.0, %v1121
      %1123 = vmatmul.bf16.gmra.mxu0 %v864
      %v1124 = vpop.f32.mrf.mxu0
      %v1125 = vadd.f32 0.0, %v1124
      %v1126 = vpop.f32.mrf.mxu0
      %v1127 = vadd.f32 0.0, %v1126
      %1128 = vmatmul.bf16.gmra.mxu0 %v867
      %v1129 = vpop.f32.mrf.mxu0
      %v1130 = vadd.f32 0.0, %v1129
      %v1131 = vpop.f32.mrf.mxu0
      %v1132 = vadd.f32 0.0, %v1131
      %1133 = vmatmul.bf16.gmra.mxu0 %v870
      %v1134 = vpop.f32.mrf.mxu0
      %v1135 = vadd.f32 0.0, %v1134
      %v1136 = vpop.f32.mrf.mxu0
      %v1137 = vadd.f32 0.0, %v1136
      %1138 = vmatmul.bf16.gmra.mxu0 %v873
      %v1139 = vpop.f32.mrf.mxu0
      %v1140 = vadd.f32 0.0, %v1139
      %v1141 = vpop.f32.mrf.mxu0
      %v1142 = vadd.f32 0.0, %v1141
      %1143 = vmatmul.bf16.gmra.mxu0 %v876
      %v1144 = vpop.f32.mrf.mxu0
      %v1145 = vadd.f32 0.0, %v1144
      %v1146 = vpop.f32.mrf.mxu0
      %v1147 = vadd.f32 0.0, %v1146
      %1148 = vmatmul.bf16.gmra.mxu0 %v879
      %v1149 = vpop.f32.mrf.mxu0
      %v1150 = vadd.f32 0.0, %v1149
      %v1151 = vpop.f32.mrf.mxu0
      %v1152 = vadd.f32 0.0, %v1151
      %1153 = vmatmul.bf16.gmra.mxu0 %v882
      %v1154 = vpop.f32.mrf.mxu0
      %v1155 = vadd.f32 0.0, %v1154
      %v1156 = vpop.f32.mrf.mxu0
      %v1157 = vadd.f32 0.0, %v1156
      %1158 = vmatmul.bf16.gmra.mxu0 %v885
      %v1159 = vpop.f32.mrf.mxu0
      %v1160 = vadd.f32 0.0, %v1159
      %v1161 = vpop.f32.mrf.mxu0
      %v1162 = vadd.f32 0.0, %v1161
      %1163 = vmatmul.bf16.gmra.mxu0 %v888
      %v1164 = vpop.f32.mrf.mxu0
      %v1165 = vadd.f32 0.0, %v1164
      %v1166 = vpop.f32.mrf.mxu0
      %v1167 = vadd.f32 0.0, %v1166
      %1168 = vmatmul.bf16.gmra.mxu0 %v891
      %v1169 = vpop.f32.mrf.mxu0
      %v1170 = vadd.f32 0.0, %v1169
      %v1171 = vpop.f32.mrf.mxu0
      %v1172 = vadd.f32 0.0, %v1171
      %1173 = vmatmul.bf16.gmra.mxu0 %v894
      %v1174 = vpop.f32.mrf.mxu0
      %v1175 = vadd.f32 0.0, %v1174
      %v1176 = vpop.f32.mrf.mxu0
      %v1177 = vadd.f32 0.0, %v1176
      %1178 = vmatmul.bf16.gmra.mxu0 %v897
      %v1179 = vpop.f32.mrf.mxu0
      %v1180 = vadd.f32 0.0, %v1179
      %v1181 = vpop.f32.mrf.mxu0
      %v1182 = vadd.f32 0.0, %v1181
      %1183 = vmatmul.bf16.gmra.mxu0 %v900
      %v1184 = vpop.f32.mrf.mxu0
      %v1185 = vadd.f32 0.0, %v1184
      %v1186 = vpop.f32.mrf.mxu0
      %v1187 = vadd.f32 0.0, %v1186
      %1188 = vmatmul.bf16.gmra.mxu0 %v903
      %v1189 = vpop.f32.mrf.mxu0
      %v1190 = vadd.f32 0.0, %v1189
      %v1191 = vpop.f32.mrf.mxu0
      %v1192 = vadd.f32 0.0, %v1191
      %1193 = vmatmul.bf16.gmra.mxu0 %v906
      %v1194 = vpop.f32.mrf.mxu0
      %v1195 = vadd.f32 0.0, %v1194
      %v1196 = vpop.f32.mrf.mxu0
      %v1197 = vadd.f32 0.0, %v1196
      %1198 = vmatmul.bf16.gmra.mxu0 %v909
      %v1199 = vpop.f32.mrf.mxu0
      %v1200 = vadd.f32 0.0, %v1199
      %v1201 = vpop.f32.mrf.mxu0
      %v1202 = vadd.f32 0.0, %v1201
      %1203 = vmatmul.bf16.gmra.mxu0 %v912
      %v1204 = vpop.f32.mrf.mxu0
      %v1205 = vadd.f32 0.0, %v1204
      %v1206 = vpop.f32.mrf.mxu0
      %v1207 = vadd.f32 0.0, %v1206
      %1208 = vmatmul.bf16.gmra.mxu0 %v915
      %v1209 = vpop.f32.mrf.mxu0
      %v1210 = vadd.f32 0.0, %v1209
      %v1211 = vpop.f32.mrf.mxu0
      %v1212 = vadd.f32 0.0, %v1211
      %1213 = vmatmul.bf16.gmra.mxu0 %v918
      %v1214 = vpop.f32.mrf.mxu0
      %v1215 = vadd.f32 0.0, %v1214
      %v1216 = vpop.f32.mrf.mxu0
      %v1217 = vadd.f32 0.0, %v1216
      %1218 = vmatmul.bf16.gmra.mxu0 %v921
      %v1219 = vpop.f32.mrf.mxu0
      %v1220 = vadd.f32 0.0, %v1219
      %v1221 = vpop.f32.mrf.mxu0
      %v1222 = vadd.f32 0.0, %v1221
      %1223 = vmatmul.bf16.gmra.mxu0 %v924
      %v1224 = vpop.f32.mrf.mxu0
      %v1225 = vadd.f32 0.0, %v1224
      %v1226 = vpop.f32.mrf.mxu0
      %v1227 = vadd.f32 0.0, %v1226
      %1228 = vmatmul.bf16.gmra.mxu0 %v927
      %v1229 = vpop.f32.mrf.mxu0
      %v1230 = vadd.f32 0.0, %v1229
      %v1231 = vpop.f32.mrf.mxu0
      %v1232 = vadd.f32 0.0, %v1231
      %1233 = vmatmul.bf16.gmra.mxu0 %v930
      %v1234 = vpop.f32.mrf.mxu0
      %v1235 = vadd.f32 0.0, %v1234
      %v1236 = vpop.f32.mrf.mxu0
      %v1237 = vadd.f32 0.0, %v1236
      %1238 = vmatmul.bf16.gmra.mxu0 %v933
      %v1239 = vpop.f32.mrf.mxu0
      %v1240 = vadd.f32 0.0, %v1239
      %v1241 = vpop.f32.mrf.mxu0
      %v1242 = vadd.f32 0.0, %v1241
      %1243 = vmatmul.bf16.gmra.mxu0 %v936
      %v1244 = vpop.f32.mrf.mxu0
      %v1245 = vadd.f32 0.0, %v1244
      %v1246 = vpop.f32.mrf.mxu0
      %v1247 = vadd.f32 0.0, %v1246
      %1248 = vmatmul.bf16.gmra.mxu0 %v939
      %v1249 = vpop.f32.mrf.mxu0
      %v1250 = vadd.f32 0.0, %v1249
      %v1251 = vpop.f32.mrf.mxu0
      %v1252 = vadd.f32 0.0, %v1251
      %1253 = vmatmul.bf16.gmra.mxu0 %v942
      %v1254 = vpop.f32.mrf.mxu0
      %v1255 = vadd.f32 0.0, %v1254
      %v1256 = vpop.f32.mrf.mxu0
      %v1257 = vadd.f32 0.0, %v1256
      %1258 = vmatmul.bf16.gmra.mxu0 %v945
      %v1259 = vpop.f32.mrf.mxu0
      %v1260 = vadd.f32 0.0, %v1259
      %v1261 = vpop.f32.mrf.mxu0
      %v1262 = vadd.f32 0.0, %v1261
      %1263 = vmatmul.bf16.gmra.mxu0 %v948
      %v1264 = vpop.f32.mrf.mxu0
      %v1265 = vadd.f32 0.0, %v1264
      %v1266 = vpop.f32.mrf.mxu0
      %v1267 = vadd.f32 0.0, %v1266
      %1268 = vmatmul.bf16.gmra.mxu0 %v951
      %v1269 = vpop.f32.mrf.mxu0
      %v1270 = vadd.f32 0.0, %v1269
      %v1271 = vpop.f32.mrf.mxu0
      %v1272 = vadd.f32 0.0, %v1271
      %1273 = vmatmul.bf16.gmra.mxu0 %v954
      %v1274 = vpop.f32.mrf.mxu0
      %v1275 = vadd.f32 0.0, %v1274
      %v1276 = vpop.f32.mrf.mxu0
      %v1277 = vadd.f32 0.0, %v1276
      %1278 = vmatmul.bf16.gmra.mxu0 %v957
      %v1279 = vpop.f32.mrf.mxu0
      %v1280 = vadd.f32 0.0, %v1279
      %v1281 = vpop.f32.mrf.mxu0
      %v1282 = vadd.f32 0.0, %v1281
      %1283 = vmatmul.bf16.gmra.mxu0 %v960
      %v1284 = vpop.f32.mrf.mxu0
      %v1285 = vadd.f32 0.0, %v1284
      %v1286 = vpop.f32.mrf.mxu0
      %v1287 = vadd.f32 0.0, %v1286
      %1288 = vmatmul.bf16.gmra.mxu0 %v963
      %v1289 = vpop.f32.mrf.mxu0
      %v1290 = vadd.f32 0.0, %v1289
      %v1291 = vpop.f32.mrf.mxu0
      %v1292 = vadd.f32 0.0, %v1291
      %1293 = vmatmul.bf16.gmra.mxu0 %v966
      %v1294 = vpop.f32.mrf.mxu0
      %v1295 = vadd.f32 0.0, %v1294
      %v1296 = vpop.f32.mrf.mxu0
      %v1297 = vadd.f32 0.0, %v1296
      %1298 = vmatmul.bf16.gmra.mxu0 %v969
      %v1299 = vpop.f32.mrf.mxu0
      %v1300 = vadd.f32 0.0, %v1299
      %v1301 = vpop.f32.mrf.mxu0
      %v1302 = vadd.f32 0.0, %v1301
      %1303 = vdwg.mxu0
      %v1308 = vunpack.c.l.b16 %v312
      %v1309 = vunpack.c.l.b16 %v313
      %v1310 = vunpack.c.l.b16 %v314
      %v1311 = vunpack.c.l.b16 %v315
      %v1312 = vpack.c.b16 %v1309, %v1308
      %v1313 = vpack.c.b16 %v1311, %v1310
      %v1316 = vunpack.c.l.b16 %v448
      %v1317 = vunpack.c.l.b16 %v449
      %v1318 = vpack.c.b16 %v1317, %v1316
      %v1320 = vsel %vm778, %v1312, 0
      %v1323 = vsel %vm778, %v1313, 0
      %v1326 = vsel %vm971, %v1318, 0
      %1328 = vmatpush.bf16.msra.mxu0 0
      %1329 = vmatpush.bf16.msra.mxu0 0
      %1330 = vmatpush.bf16.msra.mxu0 0
      %1331 = vmatpush.bf16.msra.mxu0 0
      %1332 = vmatpush.bf16.msra.mxu0 0
      %1333 = vmatpush.bf16.msra.mxu0 0
      %1334 = vmatpush.bf16.msra.mxu0 0
      %1335 = vmatpush.bf16.msra.mxu0 %v1326
      %1336 = vmatmul.bf16.gmra.mxu0 %v1320
      %v1337 = vpop.f32.mrf.mxu0
      %v1338 = vadd.f32 %v985, %v1337
      %v1339 = vpop.f32.mrf.mxu0
      %v1340 = vadd.f32 %v987, %v1339
      %1341 = vmatmul.bf16.gmra.mxu0 %v1323
      %v1342 = vpop.f32.mrf.mxu0
      %v1343 = vadd.f32 %v990, %v1342
      %v1344 = vpop.f32.mrf.mxu0
      %v1345 = vadd.f32 %v992, %v1344
      %1346 = vmatmul.bf16.gmra.mxu0 %v780
      %v1347 = vpop.f32.mrf.mxu0
      %v1348 = vadd.f32 %v995, %v1347
      %v1349 = vpop.f32.mrf.mxu0
      %v1350 = vadd.f32 %v997, %v1349
      %1351 = vmatmul.bf16.gmra.mxu0 %v783
      %v1352 = vpop.f32.mrf.mxu0
      %v1353 = vadd.f32 %v1000, %v1352
      %v1354 = vpop.f32.mrf.mxu0
      %v1355 = vadd.f32 %v1002, %v1354
      %1356 = vmatmul.bf16.gmra.mxu0 %v786
      %v1357 = vpop.f32.mrf.mxu0
      %v1358 = vadd.f32 %v1005, %v1357
      %v1359 = vpop.f32.mrf.mxu0
      %v1360 = vadd.f32 %v1007, %v1359
      %1361 = vmatmul.bf16.gmra.mxu0 %v789
      %v1362 = vpop.f32.mrf.mxu0
      %v1363 = vadd.f32 %v1010, %v1362
      %v1364 = vpop.f32.mrf.mxu0
      %v1365 = vadd.f32 %v1012, %v1364
      %1366 = vmatmul.bf16.gmra.mxu0 %v792
      %v1367 = vpop.f32.mrf.mxu0
      %v1368 = vadd.f32 %v1015, %v1367
      %v1369 = vpop.f32.mrf.mxu0
      %v1370 = vadd.f32 %v1017, %v1369
      %1371 = vmatmul.bf16.gmra.mxu0 %v795
      %v1372 = vpop.f32.mrf.mxu0
      %v1373 = vadd.f32 %v1020, %v1372
      %v1374 = vpop.f32.mrf.mxu0
      %v1375 = vadd.f32 %v1022, %v1374
      %1376 = vmatmul.bf16.gmra.mxu0 %v798
      %v1377 = vpop.f32.mrf.mxu0
      %v1378 = vadd.f32 %v1025, %v1377
      %v1379 = vpop.f32.mrf.mxu0
      %v1380 = vadd.f32 %v1027, %v1379
      %1381 = vmatmul.bf16.gmra.mxu0 %v801
      %v1382 = vpop.f32.mrf.mxu0
      %v1383 = vadd.f32 %v1030, %v1382
      %v1384 = vpop.f32.mrf.mxu0
      %v1385 = vadd.f32 %v1032, %v1384
      %1386 = vmatmul.bf16.gmra.mxu0 %v804
      %v1387 = vpop.f32.mrf.mxu0
      %v1388 = vadd.f32 %v1035, %v1387
      %v1389 = vpop.f32.mrf.mxu0
      %v1390 = vadd.f32 %v1037, %v1389
      %1391 = vmatmul.bf16.gmra.mxu0 %v807
      %v1392 = vpop.f32.mrf.mxu0
      %v1393 = vadd.f32 %v1040, %v1392
      %v1394 = vpop.f32.mrf.mxu0
      %v1395 = vadd.f32 %v1042, %v1394
      %1396 = vmatmul.bf16.gmra.mxu0 %v810
      %v1397 = vpop.f32.mrf.mxu0
      %v1398 = vadd.f32 %v1045, %v1397
      %v1399 = vpop.f32.mrf.mxu0
      %v1400 = vadd.f32 %v1047, %v1399
      %1401 = vmatmul.bf16.gmra.mxu0 %v813
      %v1402 = vpop.f32.mrf.mxu0
      %v1403 = vadd.f32 %v1050, %v1402
      %v1404 = vpop.f32.mrf.mxu0
      %v1405 = vadd.f32 %v1052, %v1404
      %1406 = vmatmul.bf16.gmra.mxu0 %v816
      %v1407 = vpop.f32.mrf.mxu0
      %v1408 = vadd.f32 %v1055, %v1407
      %v1409 = vpop.f32.mrf.mxu0
      %v1410 = vadd.f32 %v1057, %v1409
      %1411 = vmatmul.bf16.gmra.mxu0 %v819
      %v1412 = vpop.f32.mrf.mxu0
      %v1413 = vadd.f32 %v1060, %v1412
      %v1414 = vpop.f32.mrf.mxu0
      %v1415 = vadd.f32 %v1062, %v1414
      %1416 = vmatmul.bf16.gmra.mxu0 %v822
      %v1417 = vpop.f32.mrf.mxu0
      %v1418 = vadd.f32 %v1065, %v1417
      %v1419 = vpop.f32.mrf.mxu0
      %v1420 = vadd.f32 %v1067, %v1419
      %1421 = vmatmul.bf16.gmra.mxu0 %v825
      %v1422 = vpop.f32.mrf.mxu0
      %v1423 = vadd.f32 %v1070, %v1422
      %v1424 = vpop.f32.mrf.mxu0
      %v1425 = vadd.f32 %v1072, %v1424
      %1426 = vmatmul.bf16.gmra.mxu0 %v828
      %v1427 = vpop.f32.mrf.mxu0
      %v1428 = vadd.f32 %v1075, %v1427
      %v1429 = vpop.f32.mrf.mxu0
      %v1430 = vadd.f32 %v1077, %v1429
      %1431 = vmatmul.bf16.gmra.mxu0 %v831
      %v1432 = vpop.f32.mrf.mxu0
      %v1433 = vadd.f32 %v1080, %v1432
      %v1434 = vpop.f32.mrf.mxu0
      %v1435 = vadd.f32 %v1082, %v1434
      %1436 = vmatmul.bf16.gmra.mxu0 %v834
      %v1437 = vpop.f32.mrf.mxu0
      %v1438 = vadd.f32 %v1085, %v1437
      %v1439 = vpop.f32.mrf.mxu0
      %v1440 = vadd.f32 %v1087, %v1439
      %1441 = vmatmul.bf16.gmra.mxu0 %v837
      %v1442 = vpop.f32.mrf.mxu0
      %v1443 = vadd.f32 %v1090, %v1442
      %v1444 = vpop.f32.mrf.mxu0
      %v1445 = vadd.f32 %v1092, %v1444
      %1446 = vmatmul.bf16.gmra.mxu0 %v840
      %v1447 = vpop.f32.mrf.mxu0
      %v1448 = vadd.f32 %v1095, %v1447
      %v1449 = vpop.f32.mrf.mxu0
      %v1450 = vadd.f32 %v1097, %v1449
      %1451 = vmatmul.bf16.gmra.mxu0 %v843
      %v1452 = vpop.f32.mrf.mxu0
      %v1453 = vadd.f32 %v1100, %v1452
      %v1454 = vpop.f32.mrf.mxu0
      %v1455 = vadd.f32 %v1102, %v1454
      %1456 = vmatmul.bf16.gmra.mxu0 %v846
      %v1457 = vpop.f32.mrf.mxu0
      %v1458 = vadd.f32 %v1105, %v1457
      %v1459 = vpop.f32.mrf.mxu0
      %v1460 = vadd.f32 %v1107, %v1459
      %1461 = vmatmul.bf16.gmra.mxu0 %v849
      %v1462 = vpop.f32.mrf.mxu0
      %v1463 = vadd.f32 %v1110, %v1462
      %v1464 = vpop.f32.mrf.mxu0
      %v1465 = vadd.f32 %v1112, %v1464
      %1466 = vmatmul.bf16.gmra.mxu0 %v852
      %v1467 = vpop.f32.mrf.mxu0
      %v1468 = vadd.f32 %v1115, %v1467
      %v1469 = vpop.f32.mrf.mxu0
      %v1470 = vadd.f32 %v1117, %v1469
      %1471 = vmatmul.bf16.gmra.mxu0 %v855
      %v1472 = vpop.f32.mrf.mxu0
      %v1473 = vadd.f32 %v1120, %v1472
      %v1474 = vpop.f32.mrf.mxu0
      %v1475 = vadd.f32 %v1122, %v1474
      %1476 = vmatmul.bf16.gmra.mxu0 %v858
      %v1477 = vpop.f32.mrf.mxu0
      %v1478 = vadd.f32 %v1125, %v1477
      %v1479 = vpop.f32.mrf.mxu0
      %v1480 = vadd.f32 %v1127, %v1479
      %1481 = vmatmul.bf16.gmra.mxu0 %v861
      %v1482 = vpop.f32.mrf.mxu0
      %v1483 = vadd.f32 %v1130, %v1482
      %v1484 = vpop.f32.mrf.mxu0
      %v1485 = vadd.f32 %v1132, %v1484
      %1486 = vmatmul.bf16.gmra.mxu0 %v864
      %v1487 = vpop.f32.mrf.mxu0
      %v1488 = vadd.f32 %v1135, %v1487
      %v1489 = vpop.f32.mrf.mxu0
      %v1490 = vadd.f32 %v1137, %v1489
      %1491 = vmatmul.bf16.gmra.mxu0 %v867
      %v1492 = vpop.f32.mrf.mxu0
      %v1493 = vadd.f32 %v1140, %v1492
      %v1494 = vpop.f32.mrf.mxu0
      %v1495 = vadd.f32 %v1142, %v1494
      %1496 = vmatmul.bf16.gmra.mxu0 %v870
      %v1497 = vpop.f32.mrf.mxu0
      %v1498 = vadd.f32 %v1145, %v1497
      %v1499 = vpop.f32.mrf.mxu0
      %v1500 = vadd.f32 %v1147, %v1499
      %1501 = vmatmul.bf16.gmra.mxu0 %v873
      %v1502 = vpop.f32.mrf.mxu0
      %v1503 = vadd.f32 %v1150, %v1502
      %v1504 = vpop.f32.mrf.mxu0
      %v1505 = vadd.f32 %v1152, %v1504
      %1506 = vmatmul.bf16.gmra.mxu0 %v876
      %v1507 = vpop.f32.mrf.mxu0
      %v1508 = vadd.f32 %v1155, %v1507
      %v1509 = vpop.f32.mrf.mxu0
      %v1510 = vadd.f32 %v1157, %v1509
      %1511 = vmatmul.bf16.gmra.mxu0 %v879
      %v1512 = vpop.f32.mrf.mxu0
      %v1513 = vadd.f32 %v1160, %v1512
      %v1514 = vpop.f32.mrf.mxu0
      %v1515 = vadd.f32 %v1162, %v1514
      %1516 = vmatmul.bf16.gmra.mxu0 %v882
      %v1517 = vpop.f32.mrf.mxu0
      %v1518 = vadd.f32 %v1165, %v1517
      %v1519 = vpop.f32.mrf.mxu0
      %v1520 = vadd.f32 %v1167, %v1519
      %1521 = vmatmul.bf16.gmra.mxu0 %v885
      %v1522 = vpop.f32.mrf.mxu0
      %v1523 = vadd.f32 %v1170, %v1522
      %v1524 = vpop.f32.mrf.mxu0
      %v1525 = vadd.f32 %v1172, %v1524
      %1526 = vmatmul.bf16.gmra.mxu0 %v888
      %v1527 = vpop.f32.mrf.mxu0
      %v1528 = vadd.f32 %v1175, %v1527
      %v1529 = vpop.f32.mrf.mxu0
      %v1530 = vadd.f32 %v1177, %v1529
      %1531 = vmatmul.bf16.gmra.mxu0 %v891
      %v1532 = vpop.f32.mrf.mxu0
      %v1533 = vadd.f32 %v1180, %v1532
      %v1534 = vpop.f32.mrf.mxu0
      %v1535 = vadd.f32 %v1182, %v1534
      %1536 = vmatmul.bf16.gmra.mxu0 %v894
      %v1537 = vpop.f32.mrf.mxu0
      %v1538 = vadd.f32 %v1185, %v1537
      %v1539 = vpop.f32.mrf.mxu0
      %v1540 = vadd.f32 %v1187, %v1539
      %1541 = vmatmul.bf16.gmra.mxu0 %v897
      %v1542 = vpop.f32.mrf.mxu0
      %v1543 = vadd.f32 %v1190, %v1542
      %v1544 = vpop.f32.mrf.mxu0
      %v1545 = vadd.f32 %v1192, %v1544
      %1546 = vmatmul.bf16.gmra.mxu0 %v900
      %v1547 = vpop.f32.mrf.mxu0
      %v1548 = vadd.f32 %v1195, %v1547
      %v1549 = vpop.f32.mrf.mxu0
      %v1550 = vadd.f32 %v1197, %v1549
      %1551 = vmatmul.bf16.gmra.mxu0 %v903
      %v1552 = vpop.f32.mrf.mxu0
      %v1553 = vadd.f32 %v1200, %v1552
      %v1554 = vpop.f32.mrf.mxu0
      %v1555 = vadd.f32 %v1202, %v1554
      %1556 = vmatmul.bf16.gmra.mxu0 %v906
      %v1557 = vpop.f32.mrf.mxu0
      %v1558 = vadd.f32 %v1205, %v1557
      %v1559 = vpop.f32.mrf.mxu0
      %v1560 = vadd.f32 %v1207, %v1559
      %1561 = vmatmul.bf16.gmra.mxu0 %v909
      %v1562 = vpop.f32.mrf.mxu0
      %v1563 = vadd.f32 %v1210, %v1562
      %v1564 = vpop.f32.mrf.mxu0
      %v1565 = vadd.f32 %v1212, %v1564
      %1566 = vmatmul.bf16.gmra.mxu0 %v912
      %v1567 = vpop.f32.mrf.mxu0
      %v1568 = vadd.f32 %v1215, %v1567
      %v1569 = vpop.f32.mrf.mxu0
      %v1570 = vadd.f32 %v1217, %v1569
      %1571 = vmatmul.bf16.gmra.mxu0 %v915
      %v1572 = vpop.f32.mrf.mxu0
      %v1573 = vadd.f32 %v1220, %v1572
      %v1574 = vpop.f32.mrf.mxu0
      %v1575 = vadd.f32 %v1222, %v1574
      %1576 = vmatmul.bf16.gmra.mxu0 %v918
      %v1577 = vpop.f32.mrf.mxu0
      %v1578 = vadd.f32 %v1225, %v1577
      %v1579 = vpop.f32.mrf.mxu0
      %v1580 = vadd.f32 %v1227, %v1579
      %1581 = vmatmul.bf16.gmra.mxu0 %v921
      %v1582 = vpop.f32.mrf.mxu0
      %v1583 = vadd.f32 %v1230, %v1582
      %v1584 = vpop.f32.mrf.mxu0
      %v1585 = vadd.f32 %v1232, %v1584
      %1586 = vmatmul.bf16.gmra.mxu0 %v924
      %v1587 = vpop.f32.mrf.mxu0
      %v1588 = vadd.f32 %v1235, %v1587
      %v1589 = vpop.f32.mrf.mxu0
      %v1590 = vadd.f32 %v1237, %v1589
      %1591 = vmatmul.bf16.gmra.mxu0 %v927
      %v1592 = vpop.f32.mrf.mxu0
      %v1593 = vadd.f32 %v1240, %v1592
      %v1594 = vpop.f32.mrf.mxu0
      %v1595 = vadd.f32 %v1242, %v1594
      %1596 = vmatmul.bf16.gmra.mxu0 %v930
      %v1597 = vpop.f32.mrf.mxu0
      %v1598 = vadd.f32 %v1245, %v1597
      %v1599 = vpop.f32.mrf.mxu0
      %v1600 = vadd.f32 %v1247, %v1599
      %1601 = vmatmul.bf16.gmra.mxu0 %v933
      %v1602 = vpop.f32.mrf.mxu0
      %v1603 = vadd.f32 %v1250, %v1602
      %v1604 = vpop.f32.mrf.mxu0
      %v1605 = vadd.f32 %v1252, %v1604
      %1606 = vmatmul.bf16.gmra.mxu0 %v936
      %v1607 = vpop.f32.mrf.mxu0
      %v1608 = vadd.f32 %v1255, %v1607
      %v1609 = vpop.f32.mrf.mxu0
      %v1610 = vadd.f32 %v1257, %v1609
      %1611 = vmatmul.bf16.gmra.mxu0 %v939
      %v1612 = vpop.f32.mrf.mxu0
      %v1613 = vadd.f32 %v1260, %v1612
      %v1614 = vpop.f32.mrf.mxu0
      %v1615 = vadd.f32 %v1262, %v1614
      %1616 = vmatmul.bf16.gmra.mxu0 %v942
      %v1617 = vpop.f32.mrf.mxu0
      %v1618 = vadd.f32 %v1265, %v1617
      %v1619 = vpop.f32.mrf.mxu0
      %v1620 = vadd.f32 %v1267, %v1619
      %1621 = vmatmul.bf16.gmra.mxu0 %v945
      %v1622 = vpop.f32.mrf.mxu0
      %v1623 = vadd.f32 %v1270, %v1622
      %v1624 = vpop.f32.mrf.mxu0
      %v1625 = vadd.f32 %v1272, %v1624
      %1626 = vmatmul.bf16.gmra.mxu0 %v948
      %v1627 = vpop.f32.mrf.mxu0
      %v1628 = vadd.f32 %v1275, %v1627
      %v1629 = vpop.f32.mrf.mxu0
      %v1630 = vadd.f32 %v1277, %v1629
      %1631 = vmatmul.bf16.gmra.mxu0 %v951
      %v1632 = vpop.f32.mrf.mxu0
      %v1633 = vadd.f32 %v1280, %v1632
      %v1634 = vpop.f32.mrf.mxu0
      %v1635 = vadd.f32 %v1282, %v1634
      %1636 = vmatmul.bf16.gmra.mxu0 %v954
      %v1637 = vpop.f32.mrf.mxu0
      %v1638 = vadd.f32 %v1285, %v1637
      %v1639 = vpop.f32.mrf.mxu0
      %v1640 = vadd.f32 %v1287, %v1639
      %1641 = vmatmul.bf16.gmra.mxu0 %v957
      %v1642 = vpop.f32.mrf.mxu0
      %v1643 = vadd.f32 %v1290, %v1642
      %v1644 = vpop.f32.mrf.mxu0
      %v1645 = vadd.f32 %v1292, %v1644
      %1646 = vmatmul.bf16.gmra.mxu0 %v960
      %v1647 = vpop.f32.mrf.mxu0
      %v1648 = vadd.f32 %v1295, %v1647
      %v1649 = vpop.f32.mrf.mxu0
      %v1650 = vadd.f32 %v1297, %v1649
      %1651 = vmatmul.bf16.gmra.mxu0 %v963
      %v1652 = vpop.f32.mrf.mxu0
      %v1653 = vadd.f32 %v1300, %v1652
      %v1654 = vpop.f32.mrf.mxu0
      %v1655 = vadd.f32 %v1302, %v1654
      %1656 = vdwg.mxu0
      %v1661 = vunpack.c.l.b16 %v444
      %v1662 = vunpack.c.l.b16 %v445
      %v1663 = vunpack.c.l.b16 %v446
      %v1664 = vunpack.c.l.b16 %v447
      %v1665 = vpack.c.b16 %v1662, %v1661
      %v1666 = vpack.c.b16 %v1664, %v1663
      %s1667 = scalar_lea.vmem %s3, 16
      %v1668 = vld [vmem:[%s1667] sm:$0xf]
      %v1669 = vld [vmem:[%s1667 + $0x4] sm:$0x3]
      %v1672 = vunpack.c.l.b16 %v1668
      %v1673 = vunpack.c.l.b16 %v1669
      %v1674 = vpack.c.b16 %v1673, %v1672
      %v1676 = vsel %vm778, %v1665, 0
      %v1679 = vsel %vm778, %v1666, 0
      %v1682 = vsel %vm971, %v1674, 0
      %1684 = vmatpush.bf16.msra.mxu0 0
      %1685 = vmatpush.bf16.msra.mxu0 0
      %1686 = vmatpush.bf16.msra.mxu0 0
      %1687 = vmatpush.bf16.msra.mxu0 0
      %1688 = vmatpush.bf16.msra.mxu0 0
      %1689 = vmatpush.bf16.msra.mxu0 0
      %1690 = vmatpush.bf16.msra.mxu0 0
      %1691 = vmatpush.bf16.msra.mxu0 %v1682
      %1692 = vmatmul.bf16.gmra.mxu0 %v786
      %v1693 = vpop.f32.mrf.mxu0
      %v1694 = vadd.f32 0.0, %v1693
      %v1695 = vpop.f32.mrf.mxu0
      %v1696 = vadd.f32 0.0, %v1695
      %1697 = vmatmul.bf16.gmra.mxu0 %v789
      %v1698 = vpop.f32.mrf.mxu0
      %v1699 = vadd.f32 0.0, %v1698
      %v1700 = vpop.f32.mrf.mxu0
      %v1701 = vadd.f32 0.0, %v1700
      %1702 = vmatmul.bf16.gmra.mxu0 %v792
      %v1703 = vpop.f32.mrf.mxu0
      %v1704 = vadd.f32 0.0, %v1703
      %v1705 = vpop.f32.mrf.mxu0
      %v1706 = vadd.f32 0.0, %v1705
      %1707 = vmatmul.bf16.gmra.mxu0 %v795
      %v1708 = vpop.f32.mrf.mxu0
      %v1709 = vadd.f32 0.0, %v1708
      %v1710 = vpop.f32.mrf.mxu0
      %v1711 = vadd.f32 0.0, %v1710
      %1712 = vmatmul.bf16.gmra.mxu0 %v798
      %v1713 = vpop.f32.mrf.mxu0
      %v1714 = vadd.f32 0.0, %v1713
      %v1715 = vpop.f32.mrf.mxu0
      %v1716 = vadd.f32 0.0, %v1715
      %1717 = vmatmul.bf16.gmra.mxu0 %v801
      %v1718 = vpop.f32.mrf.mxu0
      %v1719 = vadd.f32 0.0, %v1718
      %v1720 = vpop.f32.mrf.mxu0
      %v1721 = vadd.f32 0.0, %v1720
      %1722 = vmatmul.bf16.gmra.mxu0 %v804
      %v1723 = vpop.f32.mrf.mxu0
      %v1724 = vadd.f32 0.0, %v1723
      %v1725 = vpop.f32.mrf.mxu0
      %v1726 = vadd.f32 0.0, %v1725
      %1727 = vmatmul.bf16.gmra.mxu0 %v807
      %v1728 = vpop.f32.mrf.mxu0
      %v1729 = vadd.f32 0.0, %v1728
      %v1730 = vpop.f32.mrf.mxu0
      %v1731 = vadd.f32 0.0, %v1730
      %1732 = vmatmul.bf16.gmra.mxu0 %v810
      %v1733 = vpop.f32.mrf.mxu0
      %v1734 = vadd.f32 0.0, %v1733
      %v1735 = vpop.f32.mrf.mxu0
      %v1736 = vadd.f32 0.0, %v1735
      %1737 = vmatmul.bf16.gmra.mxu0 %v813
      %v1738 = vpop.f32.mrf.mxu0
      %v1739 = vadd.f32 0.0, %v1738
      %v1740 = vpop.f32.mrf.mxu0
      %v1741 = vadd.f32 0.0, %v1740
      %1742 = vmatmul.bf16.gmra.mxu0 %v816
      %v1743 = vpop.f32.mrf.mxu0
      %v1744 = vadd.f32 0.0, %v1743
      %v1745 = vpop.f32.mrf.mxu0
      %v1746 = vadd.f32 0.0, %v1745
      %1747 = vmatmul.bf16.gmra.mxu0 %v819
      %v1748 = vpop.f32.mrf.mxu0
      %v1749 = vadd.f32 0.0, %v1748
      %v1750 = vpop.f32.mrf.mxu0
      %v1751 = vadd.f32 0.0, %v1750
      %1752 = vmatmul.bf16.gmra.mxu0 %v822
      %v1753 = vpop.f32.mrf.mxu0
      %v1754 = vadd.f32 0.0, %v1753
      %v1755 = vpop.f32.mrf.mxu0
      %v1756 = vadd.f32 0.0, %v1755
      %1757 = vmatmul.bf16.gmra.mxu0 %v825
      %v1758 = vpop.f32.mrf.mxu0
      %v1759 = vadd.f32 0.0, %v1758
      %v1760 = vpop.f32.mrf.mxu0
      %v1761 = vadd.f32 0.0, %v1760
      %1762 = vmatmul.bf16.gmra.mxu0 %v828
      %v1763 = vpop.f32.mrf.mxu0
      %v1764 = vadd.f32 0.0, %v1763
      %v1765 = vpop.f32.mrf.mxu0
      %v1766 = vadd.f32 0.0, %v1765
      %1767 = vmatmul.bf16.gmra.mxu0 %v831
      %v1768 = vpop.f32.mrf.mxu0
      %v1769 = vadd.f32 0.0, %v1768
      %v1770 = vpop.f32.mrf.mxu0
      %v1771 = vadd.f32 0.0, %v1770
      %1772 = vmatmul.bf16.gmra.mxu0 %v834
      %v1773 = vpop.f32.mrf.mxu0
      %v1774 = vadd.f32 0.0, %v1773
      %v1775 = vpop.f32.mrf.mxu0
      %v1776 = vadd.f32 0.0, %v1775
      %1777 = vmatmul.bf16.gmra.mxu0 %v837
      %v1778 = vpop.f32.mrf.mxu0
      %v1779 = vadd.f32 0.0, %v1778
      %v1780 = vpop.f32.mrf.mxu0
      %v1781 = vadd.f32 0.0, %v1780
      %1782 = vmatmul.bf16.gmra.mxu0 %v840
      %v1783 = vpop.f32.mrf.mxu0
      %v1784 = vadd.f32 0.0, %v1783
      %v1785 = vpop.f32.mrf.mxu0
      %v1786 = vadd.f32 0.0, %v1785
      %1787 = vmatmul.bf16.gmra.mxu0 %v843
      %v1788 = vpop.f32.mrf.mxu0
      %v1789 = vadd.f32 0.0, %v1788
      %v1790 = vpop.f32.mrf.mxu0
      %v1791 = vadd.f32 0.0, %v1790
      %1792 = vmatmul.bf16.gmra.mxu0 %v846
      %v1793 = vpop.f32.mrf.mxu0
      %v1794 = vadd.f32 0.0, %v1793
      %v1795 = vpop.f32.mrf.mxu0
      %v1796 = vadd.f32 0.0, %v1795
      %1797 = vmatmul.bf16.gmra.mxu0 %v849
      %v1798 = vpop.f32.mrf.mxu0
      %v1799 = vadd.f32 0.0, %v1798
      %v1800 = vpop.f32.mrf.mxu0
      %v1801 = vadd.f32 0.0, %v1800
      %1802 = vmatmul.bf16.gmra.mxu0 %v852
      %v1803 = vpop.f32.mrf.mxu0
      %v1804 = vadd.f32 0.0, %v1803
      %v1805 = vpop.f32.mrf.mxu0
      %v1806 = vadd.f32 0.0, %v1805
      %1807 = vmatmul.bf16.gmra.mxu0 %v855
      %v1808 = vpop.f32.mrf.mxu0
      %v1809 = vadd.f32 0.0, %v1808
      %v1810 = vpop.f32.mrf.mxu0
      %v1811 = vadd.f32 0.0, %v1810
      %1812 = vmatmul.bf16.gmra.mxu0 %v858
      %v1813 = vpop.f32.mrf.mxu0
      %v1814 = vadd.f32 0.0, %v1813
      %v1815 = vpop.f32.mrf.mxu0
      %v1816 = vadd.f32 0.0, %v1815
      %1817 = vmatmul.bf16.gmra.mxu0 %v861
      %v1818 = vpop.f32.mrf.mxu0
      %v1819 = vadd.f32 0.0, %v1818
      %v1820 = vpop.f32.mrf.mxu0
      %v1821 = vadd.f32 0.0, %v1820
      %1822 = vmatmul.bf16.gmra.mxu0 %v864
      %v1823 = vpop.f32.mrf.mxu0
      %v1824 = vadd.f32 0.0, %v1823
      %v1825 = vpop.f32.mrf.mxu0
      %v1826 = vadd.f32 0.0, %v1825
      %1827 = vmatmul.bf16.gmra.mxu0 %v867
      %v1828 = vpop.f32.mrf.mxu0
      %v1829 = vadd.f32 0.0, %v1828
      %v1830 = vpop.f32.mrf.mxu0
      %v1831 = vadd.f32 0.0, %v1830
      %1832 = vmatmul.bf16.gmra.mxu0 %v870
      %v1833 = vpop.f32.mrf.mxu0
      %v1834 = vadd.f32 0.0, %v1833
      %v1835 = vpop.f32.mrf.mxu0
      %v1836 = vadd.f32 0.0, %v1835
      %1837 = vmatmul.bf16.gmra.mxu0 %v873
      %v1838 = vpop.f32.mrf.mxu0
      %v1839 = vadd.f32 0.0, %v1838
      %v1840 = vpop.f32.mrf.mxu0
      %v1841 = vadd.f32 0.0, %v1840
      %1842 = vmatmul.bf16.gmra.mxu0 %v876
      %v1843 = vpop.f32.mrf.mxu0
      %v1844 = vadd.f32 0.0, %v1843
      %v1845 = vpop.f32.mrf.mxu0
      %v1846 = vadd.f32 0.0, %v1845
      %1847 = vmatmul.bf16.gmra.mxu0 %v879
      %v1848 = vpop.f32.mrf.mxu0
      %v1849 = vadd.f32 0.0, %v1848
      %v1850 = vpop.f32.mrf.mxu0
      %v1851 = vadd.f32 0.0, %v1850
      %1852 = vmatmul.bf16.gmra.mxu0 %v882
      %v1853 = vpop.f32.mrf.mxu0
      %v1854 = vadd.f32 0.0, %v1853
      %v1855 = vpop.f32.mrf.mxu0
      %v1856 = vadd.f32 0.0, %v1855
      %1857 = vmatmul.bf16.gmra.mxu0 %v885
      %v1858 = vpop.f32.mrf.mxu0
      %v1859 = vadd.f32 0.0, %v1858
      %v1860 = vpop.f32.mrf.mxu0
      %v1861 = vadd.f32 0.0, %v1860
      %1862 = vmatmul.bf16.gmra.mxu0 %v888
      %v1863 = vpop.f32.mrf.mxu0
      %v1864 = vadd.f32 0.0, %v1863
      %v1865 = vpop.f32.mrf.mxu0
      %v1866 = vadd.f32 0.0, %v1865
      %1867 = vmatmul.bf16.gmra.mxu0 %v891
      %v1868 = vpop.f32.mrf.mxu0
      %v1869 = vadd.f32 0.0, %v1868
      %v1870 = vpop.f32.mrf.mxu0
      %v1871 = vadd.f32 0.0, %v1870
      %1872 = vmatmul.bf16.gmra.mxu0 %v894
      %v1873 = vpop.f32.mrf.mxu0
      %v1874 = vadd.f32 0.0, %v1873
      %v1875 = vpop.f32.mrf.mxu0
      %v1876 = vadd.f32 0.0, %v1875
      %1877 = vmatmul.bf16.gmra.mxu0 %v897
      %v1878 = vpop.f32.mrf.mxu0
      %v1879 = vadd.f32 0.0, %v1878
      %v1880 = vpop.f32.mrf.mxu0
      %v1881 = vadd.f32 0.0, %v1880
      %1882 = vmatmul.bf16.gmra.mxu0 %v900
      %v1883 = vpop.f32.mrf.mxu0
      %v1884 = vadd.f32 0.0, %v1883
      %v1885 = vpop.f32.mrf.mxu0
      %v1886 = vadd.f32 0.0, %v1885
      %1887 = vmatmul.bf16.gmra.mxu0 %v903
      %v1888 = vpop.f32.mrf.mxu0
      %v1889 = vadd.f32 0.0, %v1888
      %v1890 = vpop.f32.mrf.mxu0
      %v1891 = vadd.f32 0.0, %v1890
      %1892 = vmatmul.bf16.gmra.mxu0 %v906
      %v1893 = vpop.f32.mrf.mxu0
      %v1894 = vadd.f32 0.0, %v1893
      %v1895 = vpop.f32.mrf.mxu0
      %v1896 = vadd.f32 0.0, %v1895
      %1897 = vmatmul.bf16.gmra.mxu0 %v909
      %v1898 = vpop.f32.mrf.mxu0
      %v1899 = vadd.f32 0.0, %v1898
      %v1900 = vpop.f32.mrf.mxu0
      %v1901 = vadd.f32 0.0, %v1900
      %1902 = vmatmul.bf16.gmra.mxu0 %v912
      %v1903 = vpop.f32.mrf.mxu0
      %v1904 = vadd.f32 0.0, %v1903
      %v1905 = vpop.f32.mrf.mxu0
      %v1906 = vadd.f32 0.0, %v1905
      %1907 = vmatmul.bf16.gmra.mxu0 %v915
      %v1908 = vpop.f32.mrf.mxu0
      %v1909 = vadd.f32 0.0, %v1908
      %v1910 = vpop.f32.mrf.mxu0
      %v1911 = vadd.f32 0.0, %v1910
      %1912 = vmatmul.bf16.gmra.mxu0 %v918
      %v1913 = vpop.f32.mrf.mxu0
      %v1914 = vadd.f32 0.0, %v1913
      %v1915 = vpop.f32.mrf.mxu0
      %v1916 = vadd.f32 0.0, %v1915
      %1917 = vmatmul.bf16.gmra.mxu0 %v921
      %v1918 = vpop.f32.mrf.mxu0
      %v1919 = vadd.f32 0.0, %v1918
      %v1920 = vpop.f32.mrf.mxu0
      %v1921 = vadd.f32 0.0, %v1920
      %1922 = vmatmul.bf16.gmra.mxu0 %v924
      %v1923 = vpop.f32.mrf.mxu0
      %v1924 = vadd.f32 0.0, %v1923
      %v1925 = vpop.f32.mrf.mxu0
      %v1926 = vadd.f32 0.0, %v1925
      %1927 = vmatmul.bf16.gmra.mxu0 %v927
      %v1928 = vpop.f32.mrf.mxu0
      %v1929 = vadd.f32 0.0, %v1928
      %v1930 = vpop.f32.mrf.mxu0
      %v1931 = vadd.f32 0.0, %v1930
      %1932 = vmatmul.bf16.gmra.mxu0 %v930
      %v1933 = vpop.f32.mrf.mxu0
      %v1934 = vadd.f32 0.0, %v1933
      %v1935 = vpop.f32.mrf.mxu0
      %v1936 = vadd.f32 0.0, %v1935
      %1937 = vmatmul.bf16.gmra.mxu0 %v933
      %v1938 = vpop.f32.mrf.mxu0
      %v1939 = vadd.f32 0.0, %v1938
      %v1940 = vpop.f32.mrf.mxu0
      %v1941 = vadd.f32 0.0, %v1940
      %1942 = vmatmul.bf16.gmra.mxu0 %v936
      %v1943 = vpop.f32.mrf.mxu0
      %v1944 = vadd.f32 0.0, %v1943
      %v1945 = vpop.f32.mrf.mxu0
      %v1946 = vadd.f32 0.0, %v1945
      %1947 = vmatmul.bf16.gmra.mxu0 %v939
      %v1948 = vpop.f32.mrf.mxu0
      %v1949 = vadd.f32 0.0, %v1948
      %v1950 = vpop.f32.mrf.mxu0
      %v1951 = vadd.f32 0.0, %v1950
      %1952 = vmatmul.bf16.gmra.mxu0 %v942
      %v1953 = vpop.f32.mrf.mxu0
      %v1954 = vadd.f32 0.0, %v1953
      %v1955 = vpop.f32.mrf.mxu0
      %v1956 = vadd.f32 0.0, %v1955
      %1957 = vmatmul.bf16.gmra.mxu0 %v945
      %v1958 = vpop.f32.mrf.mxu0
      %v1959 = vadd.f32 0.0, %v1958
      %v1960 = vpop.f32.mrf.mxu0
      %v1961 = vadd.f32 0.0, %v1960
      %1962 = vmatmul.bf16.gmra.mxu0 %v948
      %v1963 = vpop.f32.mrf.mxu0
      %v1964 = vadd.f32 0.0, %v1963
      %v1965 = vpop.f32.mrf.mxu0
      %v1966 = vadd.f32 0.0, %v1965
      %1967 = vmatmul.bf16.gmra.mxu0 %v951
      %v1968 = vpop.f32.mrf.mxu0
      %v1969 = vadd.f32 0.0, %v1968
      %v1970 = vpop.f32.mrf.mxu0
      %v1971 = vadd.f32 0.0, %v1970
      %1972 = vmatmul.bf16.gmra.mxu0 %v954
      %v1973 = vpop.f32.mrf.mxu0
      %v1974 = vadd.f32 0.0, %v1973
      %v1975 = vpop.f32.mrf.mxu0
      %v1976 = vadd.f32 0.0, %v1975
      %1977 = vmatmul.bf16.gmra.mxu0 %v957
      %v1978 = vpop.f32.mrf.mxu0
      %v1979 = vadd.f32 0.0, %v1978
      %v1980 = vpop.f32.mrf.mxu0
      %v1981 = vadd.f32 0.0, %v1980
      %1982 = vmatmul.bf16.gmra.mxu0 %v960
      %v1983 = vpop.f32.mrf.mxu0
      %v1984 = vadd.f32 0.0, %v1983
      %v1985 = vpop.f32.mrf.mxu0
      %v1986 = vadd.f32 0.0, %v1985
      %1987 = vmatmul.bf16.gmra.mxu0 %v963
      %v1988 = vpop.f32.mrf.mxu0
      %v1989 = vadd.f32 0.0, %v1988
      %v1990 = vpop.f32.mrf.mxu0
      %v1991 = vadd.f32 0.0, %v1990
      %1992 = vmatmul.bf16.gmra.mxu0 %v966
      %v1993 = vpop.f32.mrf.mxu0
      %v1994 = vadd.f32 0.0, %v1993
      %v1995 = vpop.f32.mrf.mxu0
      %v1996 = vadd.f32 0.0, %v1995
      %1997 = vmatmul.bf16.gmra.mxu0 %v969
      %v1998 = vpop.f32.mrf.mxu0
      %v1999 = vadd.f32 0.0, %v1998
      %v2000 = vpop.f32.mrf.mxu0
      %v2001 = vadd.f32 0.0, %v2000
      %2002 = vmatmul.bf16.gmra.mxu0 %v1676
      %v2003 = vpop.f32.mrf.mxu0
      %v2004 = vadd.f32 0.0, %v2003
      %v2005 = vpop.f32.mrf.mxu0
      %v2006 = vadd.f32 0.0, %v2005
      %2007 = vmatmul.bf16.gmra.mxu0 %v1679
      %v2008 = vpop.f32.mrf.mxu0
      %v2009 = vadd.f32 0.0, %v2008
      %v2010 = vpop.f32.mrf.mxu0
      %v2011 = vadd.f32 0.0, %v2010
      %2012 = vdwg.mxu0
      %v2013 = vadd.f32 %v1338, %v1694
      %v2014 = vadd.f32 %v1340, %v1696
      %v2015 = vadd.f32 %v1343, %v1699
      %v2016 = vadd.f32 %v1345, %v1701
      %v2017 = vadd.f32 %v1348, %v1704
      %v2018 = vadd.f32 %v1350, %v1706
      %v2019 = vadd.f32 %v1353, %v1709
      %v2020 = vadd.f32 %v1355, %v1711
      %v2021 = vadd.f32 %v1358, %v1714
      %v2022 = vadd.f32 %v1360, %v1716
      %v2023 = vadd.f32 %v1363, %v1719
      %v2024 = vadd.f32 %v1365, %v1721
      %v2025 = vadd.f32 %v1368, %v1724
      %v2026 = vadd.f32 %v1370, %v1726
      %v2027 = vadd.f32 %v1373, %v1729
      %v2028 = vadd.f32 %v1375, %v1731
      %v2029 = vadd.f32 %v1378, %v1734
      %v2030 = vadd.f32 %v1380, %v1736
      %v2031 = vadd.f32 %v1383, %v1739
      %v2032 = vadd.f32 %v1385, %v1741
      %v2033 = vadd.f32 %v1388, %v1744
      %v2034 = vadd.f32 %v1390, %v1746
      %v2035 = vadd.f32 %v1393, %v1749
      %v2036 = vadd.f32 %v1395, %v1751
      %v2037 = vadd.f32 %v1398, %v1754
      %v2038 = vadd.f32 %v1400, %v1756
      %v2039 = vadd.f32 %v1403, %v1759
      %v2040 = vadd.f32 %v1405, %v1761
      %v2041 = vadd.f32 %v1408, %v1764
      %v2042 = vadd.f32 %v1410, %v1766
      %v2043 = vadd.f32 %v1413, %v1769
      %v2044 = vadd.f32 %v1415, %v1771
      %v2045 = vadd.f32 %v1418, %v1774
      %v2046 = vadd.f32 %v1420, %v1776
      %v2047 = vadd.f32 %v1423, %v1779
      %v2048 = vadd.f32 %v1425, %v1781
      %v2049 = vadd.f32 %v1428, %v1784
      %v2050 = vadd.f32 %v1430, %v1786
      %v2051 = vadd.f32 %v1433, %v1789
      %v2052 = vadd.f32 %v1435, %v1791
      %v2053 = vadd.f32 %v1438, %v1794
      %v2054 = vadd.f32 %v1440, %v1796
      %v2055 = vadd.f32 %v1443, %v1799
      %v2056 = vadd.f32 %v1445, %v1801
      %v2057 = vadd.f32 %v1448, %v1804
      %v2058 = vadd.f32 %v1450, %v1806
      %v2059 = vadd.f32 %v1453, %v1809
      %v2060 = vadd.f32 %v1455, %v1811
      %v2061 = vadd.f32 %v1458, %v1814
      %v2062 = vadd.f32 %v1460, %v1816
      %v2063 = vadd.f32 %v1463, %v1819
      %v2064 = vadd.f32 %v1465, %v1821
      %v2065 = vadd.f32 %v1468, %v1824
      %v2066 = vadd.f32 %v1470, %v1826
      %v2067 = vadd.f32 %v1473, %v1829
      %v2068 = vadd.f32 %v1475, %v1831
      %v2069 = vadd.f32 %v1478, %v1834
      %v2070 = vadd.f32 %v1480, %v1836
      %v2071 = vadd.f32 %v1483, %v1839
      %v2072 = vadd.f32 %v1485, %v1841
      %v2073 = vadd.f32 %v1488, %v1844
      %v2074 = vadd.f32 %v1490, %v1846
      %v2075 = vadd.f32 %v1493, %v1849
      %v2076 = vadd.f32 %v1495, %v1851
      %v2077 = vadd.f32 %v1498, %v1854
      %v2078 = vadd.f32 %v1500, %v1856
      %v2079 = vadd.f32 %v1503, %v1859
      %v2080 = vadd.f32 %v1505, %v1861
      %v2081 = vadd.f32 %v1508, %v1864
      %v2082 = vadd.f32 %v1510, %v1866
      %v2083 = vadd.f32 %v1513, %v1869
      %v2084 = vadd.f32 %v1515, %v1871
      %v2085 = vadd.f32 %v1518, %v1874
      %v2086 = vadd.f32 %v1520, %v1876
      %v2087 = vadd.f32 %v1523, %v1879
      %v2088 = vadd.f32 %v1525, %v1881
      %v2089 = vadd.f32 %v1528, %v1884
      %v2090 = vadd.f32 %v1530, %v1886
      %v2091 = vadd.f32 %v1533, %v1889
      %v2092 = vadd.f32 %v1535, %v1891
      %v2093 = vadd.f32 %v1538, %v1894
      %v2094 = vadd.f32 %v1540, %v1896
      %v2095 = vadd.f32 %v1543, %v1899
      %v2096 = vadd.f32 %v1545, %v1901
      %v2097 = vadd.f32 %v1548, %v1904
      %v2098 = vadd.f32 %v1550, %v1906
      %v2099 = vadd.f32 %v1553, %v1909
      %v2100 = vadd.f32 %v1555, %v1911
      %v2101 = vadd.f32 %v1558, %v1914
      %v2102 = vadd.f32 %v1560, %v1916
      %v2103 = vadd.f32 %v1563, %v1919
      %v2104 = vadd.f32 %v1565, %v1921
      %v2105 = vadd.f32 %v1568, %v1924
      %v2106 = vadd.f32 %v1570, %v1926
      %v2107 = vadd.f32 %v1573, %v1929
      %v2108 = vadd.f32 %v1575, %v1931
      %v2109 = vadd.f32 %v1578, %v1934
      %v2110 = vadd.f32 %v1580, %v1936
      %v2111 = vadd.f32 %v1583, %v1939
      %v2112 = vadd.f32 %v1585, %v1941
      %v2113 = vadd.f32 %v1588, %v1944
      %v2114 = vadd.f32 %v1590, %v1946
      %v2115 = vadd.f32 %v1593, %v1949
      %v2116 = vadd.f32 %v1595, %v1951
      %v2117 = vadd.f32 %v1598, %v1954
      %v2118 = vadd.f32 %v1600, %v1956
      %v2119 = vadd.f32 %v1603, %v1959
      %v2120 = vadd.f32 %v1605, %v1961
      %v2121 = vadd.f32 %v1608, %v1964
      %v2122 = vadd.f32 %v1610, %v1966
      %v2123 = vadd.f32 %v1613, %v1969
      %v2124 = vadd.f32 %v1615, %v1971
      %v2125 = vadd.f32 %v1618, %v1974
      %v2126 = vadd.f32 %v1620, %v1976
      %v2127 = vadd.f32 %v1623, %v1979
      %v2128 = vadd.f32 %v1625, %v1981
      %v2129 = vadd.f32 %v1628, %v1984
      %v2130 = vadd.f32 %v1630, %v1986
      %v2131 = vadd.f32 %v1633, %v1989
      %v2132 = vadd.f32 %v1635, %v1991
      %v2133 = vadd.f32 %v1638, %v1994
      %v2134 = vadd.f32 %v1640, %v1996
      %v2135 = vadd.f32 %v1643, %v1999
      %v2136 = vadd.f32 %v1645, %v2001
      %v2137 = vadd.f32 %v1648, %v2004
      %v2138 = vadd.f32 %v1650, %v2006
      %v2139 = vadd.f32 %v1653, %v2009
      %v2140 = vadd.f32 %v1655, %v2011
      %v2141 = vld [vmem:[%s271] sm:$0xff]
      %v2142 = vld [vmem:[%s305] sm:$0x1]
      %v2144 = vperm.slane %v2141, 0
      %v2145 = vperm.slane %v2141, 1
      %v2146 = vperm.slane %v2141, 2
      %v2147 = vperm.slane %v2141, 3
      %v2148 = vperm.slane %v2141, 4
      %v2149 = vperm.slane %v2141, 5
      %v2150 = vperm.slane %v2141, 6
      %v2151 = vperm.slane %v2141, 7
      %2160 = vmatpush.msra.mxu0 %v2028
      %2161 = vmatpush.msra.mxu0 %v2027
      %2162 = vmatpush.msra.mxu0 %v2026
      %2163 = vmatpush.msra.mxu0 %v2025
      %2164 = vmatpush.msra.mxu0 %v2024
      %2165 = vmatpush.msra.mxu0 %v2023
      %2166 = vmatpush.msra.mxu0 %v2022
      %2167 = vmatpush.msra.mxu0 %v2021
      %2168 = vmatpush.msra.mxu0 %v2020
      %2169 = vmatpush.msra.mxu0 %v2019
      %2170 = vmatpush.msra.mxu0 %v2018
      %2171 = vmatpush.msra.mxu0 %v2017
      %2172 = vmatpush.msra.mxu0 %v2016
      %2173 = vmatpush.msra.mxu0 %v2015
      %2174 = vmatpush.msra.mxu0 %v2014
      %2175 = vmatpush.msra.mxu0 %v2013
      %2176 = vmatmul.f32.gmra.mxu0 %v2144
      %v2177 = vpop.f32.mrf.mxu0
      %v2178 = vadd.f32 0.0, %v2177
      %2179 = vdwg.mxu0
      %2180 = vmatpush.msra.mxu0 %v2044
      %2181 = vmatpush.msra.mxu0 %v2043
      %2182 = vmatpush.msra.mxu0 %v2042
      %2183 = vmatpush.msra.mxu0 %v2041
      %2184 = vmatpush.msra.mxu0 %v2040
      %2185 = vmatpush.msra.mxu0 %v2039
      %2186 = vmatpush.msra.mxu0 %v2038
      %2187 = vmatpush.msra.mxu0 %v2037
      %2188 = vmatpush.msra.mxu0 %v2036
      %2189 = vmatpush.msra.mxu0 %v2035
      %2190 = vmatpush.msra.mxu0 %v2034
      %2191 = vmatpush.msra.mxu0 %v2033
      %2192 = vmatpush.msra.mxu0 %v2032
      %2193 = vmatpush.msra.mxu0 %v2031
      %2194 = vmatpush.msra.mxu0 %v2030
      %2195 = vmatpush.msra.mxu0 %v2029
      %2196 = vmatmul.f32.gmra.mxu0 %v2145
      %v2197 = vpop.f32.mrf.mxu0
      %v2198 = vadd.f32 %v2178, %v2197
      %2199 = vdwg.mxu0
      %2200 = vmatpush.msra.mxu0 %v2060
      %2201 = vmatpush.msra.mxu0 %v2059
      %2202 = vmatpush.msra.mxu0 %v2058
      %2203 = vmatpush.msra.mxu0 %v2057
      %2204 = vmatpush.msra.mxu0 %v2056
      %2205 = vmatpush.msra.mxu0 %v2055
      %2206 = vmatpush.msra.mxu0 %v2054
      %2207 = vmatpush.msra.mxu0 %v2053
      %2208 = vmatpush.msra.mxu0 %v2052
      %2209 = vmatpush.msra.mxu0 %v2051
      %2210 = vmatpush.msra.mxu0 %v2050
      %2211 = vmatpush.msra.mxu0 %v2049
      %2212 = vmatpush.msra.mxu0 %v2048
      %2213 = vmatpush.msra.mxu0 %v2047
      %2214 = vmatpush.msra.mxu0 %v2046
      %2215 = vmatpush.msra.mxu0 %v2045
      %2216 = vmatmul.f32.gmra.mxu0 %v2146
      %v2217 = vpop.f32.mrf.mxu0
      %v2218 = vadd.f32 %v2198, %v2217
      %2219 = vdwg.mxu0
      %2220 = vmatpush.msra.mxu0 %v2076
      %2221 = vmatpush.msra.mxu0 %v2075
      %2222 = vmatpush.msra.mxu0 %v2074
      %2223 = vmatpush.msra.mxu0 %v2073
      %2224 = vmatpush.msra.mxu0 %v2072
      %2225 = vmatpush.msra.mxu0 %v2071
      %2226 = vmatpush.msra.mxu0 %v2070
      %2227 = vmatpush.msra.mxu0 %v2069
      %2228 = vmatpush.msra.mxu0 %v2068
      %2229 = vmatpush.msra.mxu0 %v2067
      %2230 = vmatpush.msra.mxu0 %v2066
      %2231 = vmatpush.msra.mxu0 %v2065
      %2232 = vmatpush.msra.mxu0 %v2064
      %2233 = vmatpush.msra.mxu0 %v2063
      %2234 = vmatpush.msra.mxu0 %v2062
      %2235 = vmatpush.msra.mxu0 %v2061
      %2236 = vmatmul.f32.gmra.mxu0 %v2147
      %v2237 = vpop.f32.mrf.mxu0
      %v2238 = vadd.f32 %v2218, %v2237
      %2239 = vdwg.mxu0
      %2240 = vmatpush.msra.mxu0 %v2092
      %2241 = vmatpush.msra.mxu0 %v2091
      %2242 = vmatpush.msra.mxu0 %v2090
      %2243 = vmatpush.msra.mxu0 %v2089
      %2244 = vmatpush.msra.mxu0 %v2088
      %2245 = vmatpush.msra.mxu0 %v2087
      %2246 = vmatpush.msra.mxu0 %v2086
      %2247 = vmatpush.msra.mxu0 %v2085
      %2248 = vmatpush.msra.mxu0 %v2084
      %2249 = vmatpush.msra.mxu0 %v2083
      %2250 = vmatpush.msra.mxu0 %v2082
      %2251 = vmatpush.msra.mxu0 %v2081
      %2252 = vmatpush.msra.mxu0 %v2080
      %2253 = vmatpush.msra.mxu0 %v2079
      %2254 = vmatpush.msra.mxu0 %v2078
      %2255 = vmatpush.msra.mxu0 %v2077
      %2256 = vmatmul.f32.gmra.mxu0 %v2148
      %v2257 = vpop.f32.mrf.mxu0
      %v2258 = vadd.f32 %v2238, %v2257
      %2259 = vdwg.mxu0
      %2260 = vmatpush.msra.mxu0 %v2108
      %2261 = vmatpush.msra.mxu0 %v2107
      %2262 = vmatpush.msra.mxu0 %v2106
      %2263 = vmatpush.msra.mxu0 %v2105
      %2264 = vmatpush.msra.mxu0 %v2104
      %2265 = vmatpush.msra.mxu0 %v2103
      %2266 = vmatpush.msra.mxu0 %v2102
      %2267 = vmatpush.msra.mxu0 %v2101
      %2268 = vmatpush.msra.mxu0 %v2100
      %2269 = vmatpush.msra.mxu0 %v2099
      %2270 = vmatpush.msra.mxu0 %v2098
      %2271 = vmatpush.msra.mxu0 %v2097
      %2272 = vmatpush.msra.mxu0 %v2096
      %2273 = vmatpush.msra.mxu0 %v2095
      %2274 = vmatpush.msra.mxu0 %v2094
      %2275 = vmatpush.msra.mxu0 %v2093
      %2276 = vmatmul.f32.gmra.mxu0 %v2149
      %v2277 = vpop.f32.mrf.mxu0
      %v2278 = vadd.f32 %v2258, %v2277
      %2279 = vdwg.mxu0
      %2280 = vmatpush.msra.mxu0 %v2124
      %2281 = vmatpush.msra.mxu0 %v2123
      %2282 = vmatpush.msra.mxu0 %v2122
      %2283 = vmatpush.msra.mxu0 %v2121
      %2284 = vmatpush.msra.mxu0 %v2120
      %2285 = vmatpush.msra.mxu0 %v2119
      %2286 = vmatpush.msra.mxu0 %v2118
      %2287 = vmatpush.msra.mxu0 %v2117
      %2288 = vmatpush.msra.mxu0 %v2116
      %2289 = vmatpush.msra.mxu0 %v2115
      %2290 = vmatpush.msra.mxu0 %v2114
      %2291 = vmatpush.msra.mxu0 %v2113
      %2292 = vmatpush.msra.mxu0 %v2112
      %2293 = vmatpush.msra.mxu0 %v2111
      %2294 = vmatpush.msra.mxu0 %v2110
      %2295 = vmatpush.msra.mxu0 %v2109
      %2296 = vmatmul.f32.gmra.mxu0 %v2150
      %v2297 = vpop.f32.mrf.mxu0
      %v2298 = vadd.f32 %v2278, %v2297
      %2299 = vdwg.mxu0
      %2300 = vmatpush.msra.mxu0 %v2140
      %2301 = vmatpush.msra.mxu0 %v2139
      %2302 = vmatpush.msra.mxu0 %v2138
      %2303 = vmatpush.msra.mxu0 %v2137
      %2304 = vmatpush.msra.mxu0 %v2136
      %2305 = vmatpush.msra.mxu0 %v2135
      %2306 = vmatpush.msra.mxu0 %v2134
      %2307 = vmatpush.msra.mxu0 %v2133
      %2308 = vmatpush.msra.mxu0 %v2132
      %2309 = vmatpush.msra.mxu0 %v2131
      %2310 = vmatpush.msra.mxu0 %v2130
      %2311 = vmatpush.msra.mxu0 %v2129
      %2312 = vmatpush.msra.mxu0 %v2128
      %2313 = vmatpush.msra.mxu0 %v2127
      %2314 = vmatpush.msra.mxu0 %v2126
      %2315 = vmatpush.msra.mxu0 %v2125
      %2316 = vmatmul.f32.gmra.mxu0 %v2151
      %v2317 = vpop.f32.mrf.mxu0
      %v2318 = vadd.f32 %v2298, %v2317
      %2319 = vdwg.mxu0
      %v2320 = vadd.f32 %v2142, %v2318
      %2321 = vst [vmem:[%s305] sm:$0x1] %v2320
      %v2322 = vld [vmem:[%s305 + $0x1] sm:$0x1]
      %v2323 = vmul.f32 %v2013, %v2013
      %v2324 = vmul.f32 %v2014, %v2014
      %v2325 = vmul.f32 %v2015, %v2015
      %v2326 = vmul.f32 %v2016, %v2016
      %v2327 = vmul.f32 %v2017, %v2017
      %v2328 = vmul.f32 %v2018, %v2018
      %v2329 = vmul.f32 %v2019, %v2019
      %v2330 = vmul.f32 %v2020, %v2020
      %v2331 = vmul.f32 %v2021, %v2021
      %v2332 = vmul.f32 %v2022, %v2022
      %v2333 = vmul.f32 %v2023, %v2023
      %v2334 = vmul.f32 %v2024, %v2024
      %v2335 = vmul.f32 %v2025, %v2025
      %v2336 = vmul.f32 %v2026, %v2026
      %v2337 = vmul.f32 %v2027, %v2027
      %v2338 = vmul.f32 %v2028, %v2028
      %v2339 = vmul.f32 %v2029, %v2029
      %v2340 = vmul.f32 %v2030, %v2030
      %v2341 = vmul.f32 %v2031, %v2031
      %v2342 = vmul.f32 %v2032, %v2032
      %v2343 = vmul.f32 %v2033, %v2033
      %v2344 = vmul.f32 %v2034, %v2034
      %v2345 = vmul.f32 %v2035, %v2035
      %v2346 = vmul.f32 %v2036, %v2036
      %v2347 = vmul.f32 %v2037, %v2037
      %v2348 = vmul.f32 %v2038, %v2038
      %v2349 = vmul.f32 %v2039, %v2039
      %v2350 = vmul.f32 %v2040, %v2040
      %v2351 = vmul.f32 %v2041, %v2041
      %v2352 = vmul.f32 %v2042, %v2042
      %v2353 = vmul.f32 %v2043, %v2043
      %v2354 = vmul.f32 %v2044, %v2044
      %v2355 = vmul.f32 %v2045, %v2045
      %v2356 = vmul.f32 %v2046, %v2046
      %v2357 = vmul.f32 %v2047, %v2047
      %v2358 = vmul.f32 %v2048, %v2048
      %v2359 = vmul.f32 %v2049, %v2049
      %v2360 = vmul.f32 %v2050, %v2050
      %v2361 = vmul.f32 %v2051, %v2051
      %v2362 = vmul.f32 %v2052, %v2052
      %v2363 = vmul.f32 %v2053, %v2053
      %v2364 = vmul.f32 %v2054, %v2054
      %v2365 = vmul.f32 %v2055, %v2055
      %v2366 = vmul.f32 %v2056, %v2056
      %v2367 = vmul.f32 %v2057, %v2057
      %v2368 = vmul.f32 %v2058, %v2058
      %v2369 = vmul.f32 %v2059, %v2059
      %v2370 = vmul.f32 %v2060, %v2060
      %v2371 = vmul.f32 %v2061, %v2061
      %v2372 = vmul.f32 %v2062, %v2062
      %v2373 = vmul.f32 %v2063, %v2063
      %v2374 = vmul.f32 %v2064, %v2064
      %v2375 = vmul.f32 %v2065, %v2065
      %v2376 = vmul.f32 %v2066, %v2066
      %v2377 = vmul.f32 %v2067, %v2067
      %v2378 = vmul.f32 %v2068, %v2068
      %v2379 = vmul.f32 %v2069, %v2069
      %v2380 = vmul.f32 %v2070, %v2070
      %v2381 = vmul.f32 %v2071, %v2071
      %v2382 = vmul.f32 %v2072, %v2072
      %v2383 = vmul.f32 %v2073, %v2073
      %v2384 = vmul.f32 %v2074, %v2074
      %v2385 = vmul.f32 %v2075, %v2075
      %v2386 = vmul.f32 %v2076, %v2076
      %v2387 = vmul.f32 %v2077, %v2077
      %v2388 = vmul.f32 %v2078, %v2078
      %v2389 = vmul.f32 %v2079, %v2079
      %v2390 = vmul.f32 %v2080, %v2080
      %v2391 = vmul.f32 %v2081, %v2081
      %v2392 = vmul.f32 %v2082, %v2082
      %v2393 = vmul.f32 %v2083, %v2083
      %v2394 = vmul.f32 %v2084, %v2084
      %v2395 = vmul.f32 %v2085, %v2085
      %v2396 = vmul.f32 %v2086, %v2086
      %v2397 = vmul.f32 %v2087, %v2087
      %v2398 = vmul.f32 %v2088, %v2088
      %v2399 = vmul.f32 %v2089, %v2089
      %v2400 = vmul.f32 %v2090, %v2090
      %v2401 = vmul.f32 %v2091, %v2091
      %v2402 = vmul.f32 %v2092, %v2092
      %v2403 = vmul.f32 %v2093, %v2093
      %v2404 = vmul.f32 %v2094, %v2094
      %v2405 = vmul.f32 %v2095, %v2095
      %v2406 = vmul.f32 %v2096, %v2096
      %v2407 = vmul.f32 %v2097, %v2097
      %v2408 = vmul.f32 %v2098, %v2098
      %v2409 = vmul.f32 %v2099, %v2099
      %v2410 = vmul.f32 %v2100, %v2100
      %v2411 = vmul.f32 %v2101, %v2101
      %v2412 = vmul.f32 %v2102, %v2102
      %v2413 = vmul.f32 %v2103, %v2103
      %v2414 = vmul.f32 %v2104, %v2104
      %v2415 = vmul.f32 %v2105, %v2105
      %v2416 = vmul.f32 %v2106, %v2106
      %v2417 = vmul.f32 %v2107, %v2107
      %v2418 = vmul.f32 %v2108, %v2108
      %v2419 = vmul.f32 %v2109, %v2109
      %v2420 = vmul.f32 %v2110, %v2110
      %v2421 = vmul.f32 %v2111, %v2111
      %v2422 = vmul.f32 %v2112, %v2112
      %v2423 = vmul.f32 %v2113, %v2113
      %v2424 = vmul.f32 %v2114, %v2114
      %v2425 = vmul.f32 %v2115, %v2115
      %v2426 = vmul.f32 %v2116, %v2116
      %v2427 = vmul.f32 %v2117, %v2117
      %v2428 = vmul.f32 %v2118, %v2118
      %v2429 = vmul.f32 %v2119, %v2119
      %v2430 = vmul.f32 %v2120, %v2120
      %v2431 = vmul.f32 %v2121, %v2121
      %v2432 = vmul.f32 %v2122, %v2122
      %v2433 = vmul.f32 %v2123, %v2123
      %v2434 = vmul.f32 %v2124, %v2124
      %v2435 = vmul.f32 %v2125, %v2125
      %v2436 = vmul.f32 %v2126, %v2126
      %v2437 = vmul.f32 %v2127, %v2127
      %v2438 = vmul.f32 %v2128, %v2128
      %v2439 = vmul.f32 %v2129, %v2129
      %v2440 = vmul.f32 %v2130, %v2130
      %v2441 = vmul.f32 %v2131, %v2131
      %v2442 = vmul.f32 %v2132, %v2132
      %v2443 = vmul.f32 %v2133, %v2133
      %v2444 = vmul.f32 %v2134, %v2134
      %v2445 = vmul.f32 %v2135, %v2135
      %v2446 = vmul.f32 %v2136, %v2136
      %v2447 = vmul.f32 %v2137, %v2137
      %v2448 = vmul.f32 %v2138, %v2138
      %v2449 = vmul.f32 %v2139, %v2139
      %v2450 = vmul.f32 %v2140, %v2140
      %2451 = vmatpush.msra.mxu0 %v2338
      %2452 = vmatpush.msra.mxu0 %v2337
      %2453 = vmatpush.msra.mxu0 %v2336
      %2454 = vmatpush.msra.mxu0 %v2335
      %2455 = vmatpush.msra.mxu0 %v2334
      %2456 = vmatpush.msra.mxu0 %v2333
      %2457 = vmatpush.msra.mxu0 %v2332
      %2458 = vmatpush.msra.mxu0 %v2331
      %2459 = vmatpush.msra.mxu0 %v2330
      %2460 = vmatpush.msra.mxu0 %v2329
      %2461 = vmatpush.msra.mxu0 %v2328
      %2462 = vmatpush.msra.mxu0 %v2327
      %2463 = vmatpush.msra.mxu0 %v2326
      %2464 = vmatpush.msra.mxu0 %v2325
      %2465 = vmatpush.msra.mxu0 %v2324
      %2466 = vmatpush.msra.mxu0 %v2323
      %2467 = vmatmul.f32.gmra.mxu0 %v2144
      %v2468 = vpop.f32.mrf.mxu0
      %v2469 = vadd.f32 0.0, %v2468
      %2470 = vdwg.mxu0
      %2471 = vmatpush.msra.mxu0 %v2354
      %2472 = vmatpush.msra.mxu0 %v2353
      %2473 = vmatpush.msra.mxu0 %v2352
      %2474 = vmatpush.msra.mxu0 %v2351
      %2475 = vmatpush.msra.mxu0 %v2350
      %2476 = vmatpush.msra.mxu0 %v2349
      %2477 = vmatpush.msra.mxu0 %v2348
      %2478 = vmatpush.msra.mxu0 %v2347
      %2479 = vmatpush.msra.mxu0 %v2346
      %2480 = vmatpush.msra.mxu0 %v2345
      %2481 = vmatpush.msra.mxu0 %v2344
      %2482 = vmatpush.msra.mxu0 %v2343
      %2483 = vmatpush.msra.mxu0 %v2342
      %2484 = vmatpush.msra.mxu0 %v2341
      %2485 = vmatpush.msra.mxu0 %v2340
      %2486 = vmatpush.msra.mxu0 %v2339
      %2487 = vmatmul.f32.gmra.mxu0 %v2145
      %v2488 = vpop.f32.mrf.mxu0
      %v2489 = vadd.f32 %v2469, %v2488
      %2490 = vdwg.mxu0
      %2491 = vmatpush.msra.mxu0 %v2370
      %2492 = vmatpush.msra.mxu0 %v2369
      %2493 = vmatpush.msra.mxu0 %v2368
      %2494 = vmatpush.msra.mxu0 %v2367
      %2495 = vmatpush.msra.mxu0 %v2366
      %2496 = vmatpush.msra.mxu0 %v2365
      %2497 = vmatpush.msra.mxu0 %v2364
      %2498 = vmatpush.msra.mxu0 %v2363
      %2499 = vmatpush.msra.mxu0 %v2362
      %2500 = vmatpush.msra.mxu0 %v2361
      %2501 = vmatpush.msra.mxu0 %v2360
      %2502 = vmatpush.msra.mxu0 %v2359
      %2503 = vmatpush.msra.mxu0 %v2358
      %2504 = vmatpush.msra.mxu0 %v2357
      %2505 = vmatpush.msra.mxu0 %v2356
      %2506 = vmatpush.msra.mxu0 %v2355
      %2507 = vmatmul.f32.gmra.mxu0 %v2146
      %v2508 = vpop.f32.mrf.mxu0
      %v2509 = vadd.f32 %v2489, %v2508
      %2510 = vdwg.mxu0
      %2511 = vmatpush.msra.mxu0 %v2386
      %2512 = vmatpush.msra.mxu0 %v2385
      %2513 = vmatpush.msra.mxu0 %v2384
      %2514 = vmatpush.msra.mxu0 %v2383
      %2515 = vmatpush.msra.mxu0 %v2382
      %2516 = vmatpush.msra.mxu0 %v2381
      %2517 = vmatpush.msra.mxu0 %v2380
      %2518 = vmatpush.msra.mxu0 %v2379
      %2519 = vmatpush.msra.mxu0 %v2378
      %2520 = vmatpush.msra.mxu0 %v2377
      %2521 = vmatpush.msra.mxu0 %v2376
      %2522 = vmatpush.msra.mxu0 %v2375
      %2523 = vmatpush.msra.mxu0 %v2374
      %2524 = vmatpush.msra.mxu0 %v2373
      %2525 = vmatpush.msra.mxu0 %v2372
      %2526 = vmatpush.msra.mxu0 %v2371
      %2527 = vmatmul.f32.gmra.mxu0 %v2147
      %v2528 = vpop.f32.mrf.mxu0
      %v2529 = vadd.f32 %v2509, %v2528
      %2530 = vdwg.mxu0
      %2531 = vmatpush.msra.mxu0 %v2402
      %2532 = vmatpush.msra.mxu0 %v2401
      %2533 = vmatpush.msra.mxu0 %v2400
      %2534 = vmatpush.msra.mxu0 %v2399
      %2535 = vmatpush.msra.mxu0 %v2398
      %2536 = vmatpush.msra.mxu0 %v2397
      %2537 = vmatpush.msra.mxu0 %v2396
      %2538 = vmatpush.msra.mxu0 %v2395
      %2539 = vmatpush.msra.mxu0 %v2394
      %2540 = vmatpush.msra.mxu0 %v2393
      %2541 = vmatpush.msra.mxu0 %v2392
      %2542 = vmatpush.msra.mxu0 %v2391
      %2543 = vmatpush.msra.mxu0 %v2390
      %2544 = vmatpush.msra.mxu0 %v2389
      %2545 = vmatpush.msra.mxu0 %v2388
      %2546 = vmatpush.msra.mxu0 %v2387
      %2547 = vmatmul.f32.gmra.mxu0 %v2148
      %v2548 = vpop.f32.mrf.mxu0
      %v2549 = vadd.f32 %v2529, %v2548
      %2550 = vdwg.mxu0
      %2551 = vmatpush.msra.mxu0 %v2418
      %2552 = vmatpush.msra.mxu0 %v2417
      %2553 = vmatpush.msra.mxu0 %v2416
      %2554 = vmatpush.msra.mxu0 %v2415
      %2555 = vmatpush.msra.mxu0 %v2414
      %2556 = vmatpush.msra.mxu0 %v2413
      %2557 = vmatpush.msra.mxu0 %v2412
      %2558 = vmatpush.msra.mxu0 %v2411
      %2559 = vmatpush.msra.mxu0 %v2410
      %2560 = vmatpush.msra.mxu0 %v2409
      %2561 = vmatpush.msra.mxu0 %v2408
      %2562 = vmatpush.msra.mxu0 %v2407
      %2563 = vmatpush.msra.mxu0 %v2406
      %2564 = vmatpush.msra.mxu0 %v2405
      %2565 = vmatpush.msra.mxu0 %v2404
      %2566 = vmatpush.msra.mxu0 %v2403
      %2567 = vmatmul.f32.gmra.mxu0 %v2149
      %v2568 = vpop.f32.mrf.mxu0
      %v2569 = vadd.f32 %v2549, %v2568
      %2570 = vdwg.mxu0
      %2571 = vmatpush.msra.mxu0 %v2434
      %2572 = vmatpush.msra.mxu0 %v2433
      %2573 = vmatpush.msra.mxu0 %v2432
      %2574 = vmatpush.msra.mxu0 %v2431
      %2575 = vmatpush.msra.mxu0 %v2430
      %2576 = vmatpush.msra.mxu0 %v2429
      %2577 = vmatpush.msra.mxu0 %v2428
      %2578 = vmatpush.msra.mxu0 %v2427
      %2579 = vmatpush.msra.mxu0 %v2426
      %2580 = vmatpush.msra.mxu0 %v2425
      %2581 = vmatpush.msra.mxu0 %v2424
      %2582 = vmatpush.msra.mxu0 %v2423
      %2583 = vmatpush.msra.mxu0 %v2422
      %2584 = vmatpush.msra.mxu0 %v2421
      %2585 = vmatpush.msra.mxu0 %v2420
      %2586 = vmatpush.msra.mxu0 %v2419
      %2587 = vmatmul.f32.gmra.mxu0 %v2150
      %v2588 = vpop.f32.mrf.mxu0
      %v2589 = vadd.f32 %v2569, %v2588
      %2590 = vdwg.mxu0
      %2591 = vmatpush.msra.mxu0 %v2450
      %2592 = vmatpush.msra.mxu0 %v2449
      %2593 = vmatpush.msra.mxu0 %v2448
      %2594 = vmatpush.msra.mxu0 %v2447
      %2595 = vmatpush.msra.mxu0 %v2446
      %2596 = vmatpush.msra.mxu0 %v2445
      %2597 = vmatpush.msra.mxu0 %v2444
      %2598 = vmatpush.msra.mxu0 %v2443
      %2599 = vmatpush.msra.mxu0 %v2442
      %2600 = vmatpush.msra.mxu0 %v2441
      %2601 = vmatpush.msra.mxu0 %v2440
      %2602 = vmatpush.msra.mxu0 %v2439
      %2603 = vmatpush.msra.mxu0 %v2438
      %2604 = vmatpush.msra.mxu0 %v2437
      %2605 = vmatpush.msra.mxu0 %v2436
      %2606 = vmatpush.msra.mxu0 %v2435
      %2607 = vmatmul.f32.gmra.mxu0 %v2151
      %v2608 = vpop.f32.mrf.mxu0
      %v2609 = vadd.f32 %v2589, %v2608
      %2610 = vdwg.mxu0
      %v2611 = vadd.f32 %v2322, %v2609
      %2612 = vst [vmem:[%s305 + $0x1] sm:$0x1] %v2611
      %p2613 = scmp.lt.s32.totalorder %s19, 1
      %s2614 = scalar_select %p2613, %s19, 1
      %s2615 = smul.addr %s2614, 2
      %s2616 = scalar_lea.vmem %s4, %s2615
      // Predicated region
      $region41: #{convt_block.2} parent=35 // pred_check
        %p2617 = pneg %p154
      $region42: #{convt_block.2} parent=35 // pred_check_branch
        %2619 = sbr.rel (%p2617) target = $region44
      $region43: #{convt_block.2} parent=35 // pred_region
        _
      $region44: #{convt_block.2} parent=35 // pred_fallthru
        _
    $region36: #{convt_block.2} parent=5 // pred_fallthru
      _
    %p2620 = scmp.le.s32.totalorder 2, %s10
    // Predicated region
    $region45: #{convt_block.2} parent=5 // pred_check
      %p2621 = pneg %p2620
    $region46: #{convt_block.2} parent=5 // pred_check_branch
      %2623 = sbr.rel (%p2621) target = $region48
    $region47: #{convt_block.2} parent=5 // pred_region
      %s2624 = ssub.s32 %s10, 2
      // Predicated region
      $region49: #{convt_block.2} parent=47 // pred_check
        %p2625 = pneg %p160
      $region50: #{convt_block.2} parent=47 // pred_check_branch
        %2627 = sbr.rel (%p2625) target = $region52
      $region51: #{convt_block.2} parent=47 // pred_region
        %p2628 = scmp.lt.s32.totalorder %s21, 1
        %s2629 = scalar_select %p2628, %s21, 1
        %s2630 = smul.addr %s2629, 2
        %s2631 = scalar_lea.vmem %s4, %s2630
      $region52: #{convt_block.2} parent=47 // pred_fallthru
        _
    $region48: #{convt_block.2} parent=5 // pred_fallthru
      _
  $region6: #{convt_block.2} parent=0 // loop_footer
    %s14 = sadd.s32 1, %s10
  $region7: #{convt_block.2} parent=0 // loop_footer_branch
    %9 = sbr.rel target = $region3
  $region8: #{convt_block.2} parent=0 // loop_exit
    _

// kernel: convt_block.3
$region0: #{convt_block.3}
  #allocation0 [shape = 'u32[]', space=smem, size = 0x4, offset = 0x4, fixed_abs, tag = 'smem constant byte address 0x4 - core index']
  #allocation1 [shape = 'u32[72,128]{1,0:T(1,128)}', space=vmem, size = 0x9000, scoped, tag = 'internal scratch']
  %s0 = inlined_call_operand.vmem [shape: bf16[2112,12], index: 0, kind: input, shape index: {}, may-alias: {0,1}]
  %s1 = inlined_call_operand.vmem [shape: bf16[2112,12], index: 1, kind: input, shape index: {}, may-alias: {0,1}]
  %s2 = inlined_call_operand.vmem [shape: bf16[3,12,128], index: 2, kind: input, shape index: {}]
  %s3 = inlined_call_operand.vmem [shape: f32[1,128], index: 3, kind: input, shape index: {}]
  %s4 = inlined_call_operand.vmem [shape: f32[1,128], index: 4, kind: input, shape index: {}]
  %s5 = inlined_call_operand.vmem [shape: bf16[2048,128], index: 5, kind: output, shape index: {}]
  %s6 = sld [smem:[#allocation0]]
  $region53: #{convt_block.3} parent=0
    _
  %s8 = ssub.s32 1, %s6
  %s9 = scalar_select 0, %s8, %s6
  loop: start=0, step=1, limit=4
  $region2: #{convt_block.3} parent=0 // loop_pre_header
    _
  $region3: #{convt_block.3} parent=0 // loop_header
    %s11 = sphi 0, %s15
    %p12 = scmp.ge.s32.totalorder %s11, 4
    %s21 = sphi 0, %s23
    %s24 = sphi 0, %s21
    %s25 = sphi 0, %s24
    %s41 = sphi 0, %s25
    %s51 = sphi 0, %s53
    %s54 = sphi 0, %s51
    %s55 = sphi 0, %s54
    %s71 = sphi 0, %s55
    %s75 = sphi 0, %s75
    %s77 = sphi 0, %s75
    %s78 = sphi 0, %s77
    %s92 = sphi 0, %s78
    %s96 = sphi 0, %s96
    %s98 = sphi 0, %s96
    %s99 = sphi 0, %s98
    %s113 = sphi 0, %s99
    %s117 = sphi 0, %s117
    %s119 = sphi 0, %s117
    %s120 = sphi 0, %s119
    %s134 = sphi 0, %s120
    %s140 = sphi 0, %s142
    %s143 = sphi 0, %s140
    %s144 = sphi 0, %s143
    %s160 = sphi 0, %s144
  $region4: #{convt_block.3} parent=0 // loop_header_branch
    %14 = sbr.rel (%p12) target = $region8
  $region5: #{convt_block.3} parent=0 // loop_body
    %s16 = ssub.s32 %s11, 1
    %s17 = ssub.s32 %s11, 2
    %s18 = sadd.s32 %s11, 1
    %s19 = ssub.s32 %s11, %s18
    %p20 = scmp.eq.s32.totalorder %s19, 0
    %s22 = sadd.s32 %s21, 1
    %s23 = scalar_select %p20, %s21, %s22
    %p26 = pneg %p20
    %p27 = scmp.eq.s32.totalorder %s11, 1
    %p28 = por %p26, %p27
    %p29 = scmp.ne.s32.totalorder %s21, %s24
    %p30 = scmp.eq.s32.totalorder %s11, 0
    %p31 = por %p29, %p30
    %p32 = scmp.ne.s32.totalorder %s21, %s24
    %p33 = scmp.eq.s32.totalorder %s16, 1
    %p34 = por %p32, %p33
    %p35 = scmp.ne.s32.totalorder %s24, %s25
    %p36 = scmp.eq.s32.totalorder %s16, 0
    %p37 = por %p35, %p36
    %p38 = scmp.ne.s32.totalorder %s24, %s25
    %p39 = scmp.eq.s32.totalorder %s17, 1
    %p40 = por %p38, %p39
    %p42 = scmp.ne.s32.totalorder %s25, %s41
    %p43 = scmp.eq.s32.totalorder %s17, 0
    %p44 = por %p42, %p43
    %s45 = sadd.s32 %s11, 1
    %s46 = smul.u32 %s45, 16
    %s47 = sadd.s32 %s18, 1
    %s48 = smul.u32 %s47, 16
    %s49 = ssub.s32 %s46, %s48
    %p50 = scmp.eq.s32.totalorder %s49, 0
    %s52 = sadd.s32 %s51, 1
    %s53 = scalar_select %p50, %s51, %s52
    %p56 = pneg %p50
    %p57 = scmp.eq.s32.totalorder %s11, 1
    %p58 = por %p56, %p57
    %p59 = scmp.ne.s32.totalorder %s51, %s54
    %p60 = scmp.eq.s32.totalorder %s11, 0
    %p61 = por %p59, %p60
    %p62 = scmp.ne.s32.totalorder %s51, %s54
    %p63 = scmp.eq.s32.totalorder %s16, 1
    %p64 = por %p62, %p63
    %p65 = scmp.ne.s32.totalorder %s54, %s55
    %p66 = scmp.eq.s32.totalorder %s16, 0
    %p67 = por %p65, %p66
    %p68 = scmp.ne.s32.totalorder %s54, %s55
    %p69 = scmp.eq.s32.totalorder %s17, 1
    %p70 = por %p68, %p69
    %p72 = scmp.ne.s32.totalorder %s55, %s71
    %p73 = scmp.eq.s32.totalorder %s17, 0
    %p74 = por %p72, %p73
    %s76 = sadd.s32 %s75, 1
    %p79 = scmp.eq.s32.totalorder %s11, 1
    %p80 = scmp.ne.s32.totalorder %s75, %s77
    %p81 = scmp.eq.s32.totalorder %s11, 0
    %p82 = por %p80, %p81
    %p83 = scmp.ne.s32.totalorder %s75, %s77
    %p84 = scmp.eq.s32.totalorder %s16, 1
    %p85 = por %p83, %p84
    %p86 = scmp.ne.s32.totalorder %s77, %s78
    %p87 = scmp.eq.s32.totalorder %s16, 0
    %p88 = por %p86, %p87
    %p89 = scmp.ne.s32.totalorder %s77, %s78
    %p90 = scmp.eq.s32.totalorder %s17, 1
    %p91 = por %p89, %p90
    %p93 = scmp.ne.s32.totalorder %s78, %s92
    %p94 = scmp.eq.s32.totalorder %s17, 0
    %p95 = por %p93, %p94
    %s97 = sadd.s32 %s96, 1
    %p100 = scmp.eq.s32.totalorder %s11, 1
    %p101 = scmp.ne.s32.totalorder %s96, %s98
    %p102 = scmp.eq.s32.totalorder %s11, 0
    %p103 = por %p101, %p102
    %p104 = scmp.ne.s32.totalorder %s96, %s98
    %p105 = scmp.eq.s32.totalorder %s16, 1
    %p106 = por %p104, %p105
    %p107 = scmp.ne.s32.totalorder %s98, %s99
    %p108 = scmp.eq.s32.totalorder %s16, 0
    %p109 = por %p107, %p108
    %p110 = scmp.ne.s32.totalorder %s98, %s99
    %p111 = scmp.eq.s32.totalorder %s17, 1
    %p112 = por %p110, %p111
    %p114 = scmp.ne.s32.totalorder %s99, %s113
    %p115 = scmp.eq.s32.totalorder %s17, 0
    %p116 = por %p114, %p115
    %s118 = sadd.s32 %s117, 1
    %p121 = scmp.eq.s32.totalorder %s11, 1
    %p122 = scmp.ne.s32.totalorder %s117, %s119
    %p123 = scmp.eq.s32.totalorder %s11, 0
    %p124 = por %p122, %p123
    %p125 = scmp.ne.s32.totalorder %s117, %s119
    %p126 = scmp.eq.s32.totalorder %s16, 1
    %p127 = por %p125, %p126
    %p128 = scmp.ne.s32.totalorder %s119, %s120
    %p129 = scmp.eq.s32.totalorder %s16, 0
    %p130 = por %p128, %p129
    %p131 = scmp.ne.s32.totalorder %s119, %s120
    %p132 = scmp.eq.s32.totalorder %s17, 1
    %p133 = por %p131, %p132
    %p135 = scmp.ne.s32.totalorder %s120, %s134
    %p136 = scmp.eq.s32.totalorder %s17, 0
    %p137 = por %p135, %p136
    %s138 = ssub.s32 %s11, %s18
    %p139 = scmp.eq.s32.totalorder %s138, 0
    %s141 = sadd.s32 %s140, 1
    %s142 = scalar_select %p139, %s140, %s141
    %p145 = pneg %p139
    %p146 = scmp.eq.s32.totalorder %s11, 1
    %p147 = por %p145, %p146
    %p148 = scmp.ne.s32.totalorder %s140, %s143
    %p149 = scmp.eq.s32.totalorder %s11, 0
    %p150 = por %p148, %p149
    %p151 = scmp.ne.s32.totalorder %s140, %s143
    %p152 = scmp.eq.s32.totalorder %s16, 1
    %p153 = por %p151, %p152
    %p154 = scmp.ne.s32.totalorder %s143, %s144
    %p155 = scmp.eq.s32.totalorder %s16, 0
    %p156 = por %p154, %p155
    %p157 = scmp.ne.s32.totalorder %s143, %s144
    %p158 = scmp.eq.s32.totalorder %s17, 1
    %p159 = por %p157, %p158
    %p161 = scmp.ne.s32.totalorder %s144, %s160
    %p162 = scmp.eq.s32.totalorder %s17, 0
    %p163 = por %p161, %p162
    %p164 = scmp.le.s32.totalorder 1, %s11
    %p165 = scmp.lt.s32.totalorder %s11, 3
    %p166 = pnand %p164, %p165
    %p167 = pneg %p166
    // Predicated region
    $region9: #{convt_block.3} parent=5 // pred_check
      _
    $region10: #{convt_block.3} parent=5 // pred_check_branch
      %169 = sbr.rel (%p166) target = $region12
    $region11: #{convt_block.3} parent=5 // pred_region
      %s170 = ssub.s32 %s11, 1
      // Predicated region
      $region13: #{convt_block.3} parent=11 // pred_check
        %p171 = pneg %p88
      $region14: #{convt_block.3} parent=11 // pred_check_branch
        %173 = sbr.rel (%p171) target = $region16
      $region15: #{convt_block.3} parent=11 // pred_region
        _
      $region16: #{convt_block.3} parent=11 // pred_fallthru
        _
      // Predicated region
      $region17: #{convt_block.3} parent=11 // pred_check
        %p174 = pneg %p109
      $region18: #{convt_block.3} parent=11 // pred_check_branch
        %176 = sbr.rel (%p174) target = $region20
      $region19: #{convt_block.3} parent=11 // pred_region
        _
      $region20: #{convt_block.3} parent=11 // pred_fallthru
        _
      // Predicated region
      $region21: #{convt_block.3} parent=11 // pred_check
        %p177 = pneg %p130
      $region22: #{convt_block.3} parent=11 // pred_check_branch
        %179 = sbr.rel (%p177) target = $region24
      $region23: #{convt_block.3} parent=11 // pred_region
        _
      $region24: #{convt_block.3} parent=11 // pred_fallthru
        _
    $region12: #{convt_block.3} parent=5 // pred_fallthru
      _
    %p180 = scmp.lt.s32.totalorder %s11, 2
    // Predicated region
    $region25: #{convt_block.3} parent=5 // pred_check
      %p181 = pneg %p180
    $region26: #{convt_block.3} parent=5 // pred_check_branch
      %183 = sbr.rel (%p181) target = $region28
    $region27: #{convt_block.3} parent=5 // pred_region
      // Predicated region
      $region29: #{convt_block.3} parent=27 // pred_check
        %p184 = pneg %p31
      $region30: #{convt_block.3} parent=27 // pred_check_branch
        %186 = sbr.rel (%p184) target = $region32
      $region31: #{convt_block.3} parent=27 // pred_region
        %s187 = smul.u32 128, %s11
        %s188 = ssub.s32 264, %s187
        %p189 = scmp.lt.s32.totalorder %s188, 128
        %s190 = scalar_select %p189, %s188, 128
        %s191 = smul.u32 4, %s190
        %p192 = scmp.lt.s32.totalorder %s187, 263
        %s193 = scalar_select %p192, %s187, 263
        %s194 = smul.addr %s193, 4
        %s195 = scalar_lea.vmem %s0, %s194
        %s196 = smul.u32 128, %s11
        %s197 = ssub.s32 264, %s196
        %p198 = scmp.lt.s32.totalorder %s197, 128
        %s199 = scalar_select %p198, %s197, 128
        %s200 = smul.u32 4, %s199
      $region32: #{convt_block.3} parent=27 // pred_fallthru
        _
      // Predicated region
      $region33: #{convt_block.3} parent=27 // pred_check
        %p201 = pneg %p61
      $region34: #{convt_block.3} parent=27 // pred_check_branch
        %203 = sbr.rel (%p201) target = $region36
      $region35: #{convt_block.3} parent=27 // pred_region
        %s204 = sadd.s32 %s11, 1
        %s205 = smul.u32 %s204, 16
        %s206 = smul.u32 8, %s205
        %p207 = scmp.lt.s32.totalorder %s206, 263
        %s208 = scalar_select %p207, %s206, 263
        %s209 = smul.addr %s208, 4
        %s210 = scalar_lea.vmem %s1, %s209
        %s211 = sadd.s32 %s11, 1
        %s212 = smul.u32 %s211, 16
        %s213 = smul.u32 8, %s212
      $region36: #{convt_block.3} parent=27 // pred_fallthru
        _
    $region28: #{convt_block.3} parent=5 // pred_fallthru
      _
    %p214 = scmp.le.s32.totalorder 1, %s11
    %p215 = scmp.lt.s32.totalorder %s11, 3
    %p216 = pnand %p214, %p215
    %p217 = pneg %p216
    // Predicated region
    $region37: #{convt_block.3} parent=5 // pred_check
      _
    $region38: #{convt_block.3} parent=5 // pred_check_branch
      %219 = sbr.rel (%p216) target = $region40
    $region39: #{convt_block.3} parent=5 // pred_region
      %s220 = ssub.s32 %s11, 1
      %s221 = smul.u32 128, %s16
      %s222 = ssub.s32 264, %s221
      %p223 = scmp.lt.s32.totalorder %s222, 128
      %s224 = scalar_select %p223, %s222, 128
      %s225 = smul.u32 4, %s224
      %p226 = scmp.lt.s32.totalorder %s221, 263
      %s227 = scalar_select %p226, %s221, 263
      %s228 = smul.addr %s227, 4
      %s229 = scalar_lea.vmem %s0, %s228
      %p230 = pneg %p37
      %p231 = pneg %p34
      %s232 = sadd.s32 %s16, 1
      %s233 = smul.u32 %s232, 16
      %s234 = smul.u32 8, %s233
      %p235 = scmp.lt.s32.totalorder %s234, 263
      %s236 = scalar_select %p235, %s234, 263
      %s237 = smul.addr %s236, 4
      %s238 = scalar_lea.vmem %s1, %s237
      %p239 = pneg %p67
      %p240 = pneg %p64
      %p241 = pneg %p88
      %p242 = pneg %p85
      %p243 = pneg %p109
      %p244 = pneg %p106
      %p245 = pneg %p130
      %p246 = pneg %p127
      %p247 = pneg %p156
      %p248 = pneg %p153
      %s249 = smul.u32 128, %s16
      %p250 = scmp.lt.s32.totalorder %s249, 255
      %s251 = scalar_select %p250, %s249, 255
      %s252 = smul.addr %s251, 4
      %s253 = scalar_lea.vmem %s5, %s252
      %s254 = smul.u32 128, %s16
      %s255 = ssub.s32 264, %s254
      %p256 = scmp.lt.s32.totalorder %s255, 128
      %s257 = scalar_select %p256, %s255, 128
      %s258 = smul.u32 4, %s257
      %p259 = scmp.lt.s32.totalorder %s254, 263
      %s260 = scalar_select %p259, %s254, 263
      %s261 = smul.addr %s260, 4
      %s262 = scalar_lea.vmem %s0, %s261
      %s263 = smul.u32 128, %s16
      %s264 = ssub.s32 264, %s263
      %p265 = scmp.lt.s32.totalorder %s264, 128
      %s266 = scalar_select %p265, %s264, 128
      %s267 = smul.u32 4, %s266
      %s268 = sadd.s32 %s16, 1
      %s269 = smul.u32 %s268, 16
      %s270 = smul.u32 8, %s269
      %p271 = scmp.lt.s32.totalorder %s270, 263
      %s272 = scalar_select %p271, %s270, 263
      %s273 = smul.addr %s272, 4
      %s274 = scalar_lea.vmem %s1, %s273
      %s275 = sadd.s32 %s16, 1
      %s276 = smul.u32 %s275, 16
      %s277 = smul.u32 8, %s276
      %s278 = smul.u32 128, %s16
      %p279 = scmp.lt.s32.totalorder %s278, 255
      %s280 = scalar_select %p279, %s278, 255
      %s281 = smul.addr %s280, 4
      %s282 = scalar_lea.vmem %s5, %s281
      %s283 = smul.u32 128, %s16
      %v285 = vld [vmem:[%s262] sm:$0xf]
      %v286 = vld [vmem:[%s262 + $0x4] sm:$0xf]
      %v287 = vld [vmem:[%s262 + $0x8] sm:$0xf]
      %v288 = vld [vmem:[%s262 + $0xc] sm:$0xf]
      %v289 = vld [vmem:[%s262 + $0x10] sm:$0xf]
      %v290 = vld [vmem:[%s262 + $0x14] sm:$0xf]
      %v291 = vld [vmem:[%s262 + $0x18] sm:$0xf]
      %v292 = vld [vmem:[%s262 + $0x1c] sm:$0xf]
      %v293 = vld [vmem:[%s262 + $0x20] sm:$0xf]
      %v294 = vld [vmem:[%s262 + $0x24] sm:$0xf]
      %v295 = vld [vmem:[%s262 + $0x28] sm:$0xf]
      %v296 = vld [vmem:[%s262 + $0x2c] sm:$0xf]
      %v297 = vld [vmem:[%s262 + $0x30] sm:$0xf]
      %v298 = vld [vmem:[%s262 + $0x34] sm:$0xf]
      %v299 = vld [vmem:[%s262 + $0x38] sm:$0xf]
      %v300 = vld [vmem:[%s262 + $0x3c] sm:$0xf]
      %v301 = vld [vmem:[%s262 + $0x40] sm:$0xf]
      %v302 = vld [vmem:[%s262 + $0x44] sm:$0xf]
      %v303 = vld [vmem:[%s262 + $0x48] sm:$0xf]
      %v304 = vld [vmem:[%s262 + $0x4c] sm:$0xf]
      %v305 = vld [vmem:[%s262 + $0x50] sm:$0xf]
      %v306 = vld [vmem:[%s262 + $0x54] sm:$0xf]
      %v307 = vld [vmem:[%s262 + $0x58] sm:$0xf]
      %v308 = vld [vmem:[%s262 + $0x5c] sm:$0xf]
      %v309 = vld [vmem:[%s262 + $0x60] sm:$0xf]
      %v310 = vld [vmem:[%s262 + $0x64] sm:$0xf]
      %v311 = vld [vmem:[%s262 + $0x68] sm:$0xf]
      %v312 = vld [vmem:[%s262 + $0x6c] sm:$0xf]
      %v313 = vld [vmem:[%s262 + $0x70] sm:$0xf]
      %v314 = vld [vmem:[%s262 + $0x74] sm:$0xf]
      %v315 = vld [vmem:[%s262 + $0x78] sm:$0xf]
      %v316 = vld [vmem:[%s262 + $0x7c] sm:$0xf]
      %v317 = vld [vmem:[%s262 + $0x80] sm:$0xf]
      %v318 = vld [vmem:[%s262 + $0x84] sm:$0xf]
      %v319 = vld [vmem:[%s262 + $0x88] sm:$0xf]
      %v320 = vld [vmem:[%s262 + $0x8c] sm:$0xf]
      %v321 = vld [vmem:[%s262 + $0x90] sm:$0xf]
      %v322 = vld [vmem:[%s262 + $0x94] sm:$0xf]
      %v323 = vld [vmem:[%s262 + $0x98] sm:$0xf]
      %v324 = vld [vmem:[%s262 + $0x9c] sm:$0xf]
      %v325 = vld [vmem:[%s262 + $0xa0] sm:$0xf]
      %v326 = vld [vmem:[%s262 + $0xa4] sm:$0xf]
      %v327 = vld [vmem:[%s262 + $0xa8] sm:$0xf]
      %v328 = vld [vmem:[%s262 + $0xac] sm:$0xf]
      %v329 = vld [vmem:[%s262 + $0xb0] sm:$0xf]
      %v330 = vld [vmem:[%s262 + $0xb4] sm:$0xf]
      %v331 = vld [vmem:[%s262 + $0xb8] sm:$0xf]
      %v332 = vld [vmem:[%s262 + $0xbc] sm:$0xf]
      %v333 = vld [vmem:[%s262 + $0xc0] sm:$0xf]
      %v334 = vld [vmem:[%s262 + $0xc4] sm:$0xf]
      %v335 = vld [vmem:[%s262 + $0xc8] sm:$0xf]
      %v336 = vld [vmem:[%s262 + $0xcc] sm:$0xf]
      %v337 = vld [vmem:[%s262 + $0xd0] sm:$0xf]
      %v338 = vld [vmem:[%s262 + $0xd4] sm:$0xf]
      %v339 = vld [vmem:[%s262 + $0xd8] sm:$0xf]
      %v340 = vld [vmem:[%s262 + $0xdc] sm:$0xf]
      %v341 = vld [vmem:[%s262 + $0xe0] sm:$0xf]
      %v342 = vld [vmem:[%s262 + $0xe4] sm:$0xf]
      %v343 = vld [vmem:[%s262 + $0xe8] sm:$0xf]
      %v344 = vld [vmem:[%s262 + $0xec] sm:$0xf]
      %v345 = vld [vmem:[%s262 + $0xf0] sm:$0xf]
      %v346 = vld [vmem:[%s262 + $0xf4] sm:$0xf]
      %v347 = vld [vmem:[%s262 + $0xf8] sm:$0xf]
      %v348 = vld [vmem:[%s262 + $0xfc] sm:$0xf]
      %v349 = vld [vmem:[%s262 + $0x100] sm:$0xf]
      %v350 = vld [vmem:[%s262 + $0x104] sm:$0xf]
      %v351 = vld [vmem:[%s262 + $0x108] sm:$0xf]
      %v352 = vld [vmem:[%s262 + $0x10c] sm:$0xf]
      %v353 = vld [vmem:[%s262 + $0x110] sm:$0xf]
      %v354 = vld [vmem:[%s262 + $0x114] sm:$0xf]
      %v355 = vld [vmem:[%s262 + $0x118] sm:$0xf]
      %v356 = vld [vmem:[%s262 + $0x11c] sm:$0xf]
      %v357 = vld [vmem:[%s262 + $0x120] sm:$0xf]
      %v358 = vld [vmem:[%s262 + $0x124] sm:$0xf]
      %v359 = vld [vmem:[%s262 + $0x128] sm:$0xf]
      %v360 = vld [vmem:[%s262 + $0x12c] sm:$0xf]
      %v361 = vld [vmem:[%s262 + $0x130] sm:$0xf]
      %v362 = vld [vmem:[%s262 + $0x134] sm:$0xf]
      %v363 = vld [vmem:[%s262 + $0x138] sm:$0xf]
      %v364 = vld [vmem:[%s262 + $0x13c] sm:$0xf]
      %v365 = vld [vmem:[%s262 + $0x140] sm:$0xf]
      %v366 = vld [vmem:[%s262 + $0x144] sm:$0xf]
      %v367 = vld [vmem:[%s262 + $0x148] sm:$0xf]
      %v368 = vld [vmem:[%s262 + $0x14c] sm:$0xf]
      %v369 = vld [vmem:[%s262 + $0x150] sm:$0xf]
      %v370 = vld [vmem:[%s262 + $0x154] sm:$0xf]
      %v371 = vld [vmem:[%s262 + $0x158] sm:$0xf]
      %v372 = vld [vmem:[%s262 + $0x15c] sm:$0xf]
      %v373 = vld [vmem:[%s262 + $0x160] sm:$0xf]
      %v374 = vld [vmem:[%s262 + $0x164] sm:$0xf]
      %v375 = vld [vmem:[%s262 + $0x168] sm:$0xf]
      %v376 = vld [vmem:[%s262 + $0x16c] sm:$0xf]
      %v377 = vld [vmem:[%s262 + $0x170] sm:$0xf]
      %v378 = vld [vmem:[%s262 + $0x174] sm:$0xf]
      %v379 = vld [vmem:[%s262 + $0x178] sm:$0xf]
      %v380 = vld [vmem:[%s262 + $0x17c] sm:$0xf]
      %v381 = vld [vmem:[%s262 + $0x180] sm:$0xf]
      %v382 = vld [vmem:[%s262 + $0x184] sm:$0xf]
      %v383 = vld [vmem:[%s262 + $0x188] sm:$0xf]
      %v384 = vld [vmem:[%s262 + $0x18c] sm:$0xf]
      %v385 = vld [vmem:[%s262 + $0x190] sm:$0xf]
      %v386 = vld [vmem:[%s262 + $0x194] sm:$0xf]
      %v387 = vld [vmem:[%s262 + $0x198] sm:$0xf]
      %v388 = vld [vmem:[%s262 + $0x19c] sm:$0xf]
      %v389 = vld [vmem:[%s262 + $0x1a0] sm:$0xf]
      %v390 = vld [vmem:[%s262 + $0x1a4] sm:$0xf]
      %v391 = vld [vmem:[%s262 + $0x1a8] sm:$0xf]
      %v392 = vld [vmem:[%s262 + $0x1ac] sm:$0xf]
      %v393 = vld [vmem:[%s262 + $0x1b0] sm:$0xf]
      %v394 = vld [vmem:[%s262 + $0x1b4] sm:$0xf]
      %v395 = vld [vmem:[%s262 + $0x1b8] sm:$0xf]
      %v396 = vld [vmem:[%s262 + $0x1bc] sm:$0xf]
      %v397 = vld [vmem:[%s262 + $0x1c0] sm:$0xf]
      %v398 = vld [vmem:[%s262 + $0x1c4] sm:$0xf]
      %v399 = vld [vmem:[%s262 + $0x1c8] sm:$0xf]
      %v400 = vld [vmem:[%s262 + $0x1cc] sm:$0xf]
      %v401 = vld [vmem:[%s262 + $0x1d0] sm:$0xf]
      %v402 = vld [vmem:[%s262 + $0x1d4] sm:$0xf]
      %v403 = vld [vmem:[%s262 + $0x1d8] sm:$0xf]
      %v404 = vld [vmem:[%s262 + $0x1dc] sm:$0xf]
      %v405 = vld [vmem:[%s262 + $0x1e0] sm:$0xf]
      %v406 = vld [vmem:[%s262 + $0x1e4] sm:$0xf]
      %v407 = vld [vmem:[%s262 + $0x1e8] sm:$0xf]
      %v408 = vld [vmem:[%s262 + $0x1ec] sm:$0xf]
      %v409 = vld [vmem:[%s262 + $0x1f0] sm:$0xf]
      %v410 = vld [vmem:[%s262 + $0x1f4] sm:$0xf]
      %v411 = vld [vmem:[%s262 + $0x1f8] sm:$0xf]
      %v412 = vld [vmem:[%s262 + $0x1fc] sm:$0xf]
      %v413 = vld [vmem:[%s274] sm:$0xf]
      %v414 = vld [vmem:[%s274 + $0x4] sm:$0xf]
      %v415 = vld [vmem:[%s274 + $0x8] sm:$0xf]
      %v416 = vld [vmem:[%s274 + $0xc] sm:$0xf]
      %v417 = vld [vmem:[%s274 + $0x10] sm:$0xf]
      %v418 = vld [vmem:[%s274 + $0x14] sm:$0xf]
      %v419 = vld [vmem:[%s274 + $0x18] sm:$0xf]
      %v420 = vld [vmem:[%s274 + $0x1c] sm:$0xf]
      %v421 = vld [vmem:[%s2] sm:$0xf]
      %v422 = vld [vmem:[%s2 + $0x4] sm:$0x3]
      %v547 = vunpack.c.l.b16 %v289
      %v548 = vunpack.c.l.b16 %v290
      %v549 = vunpack.c.l.b16 %v291
      %v550 = vunpack.c.l.b16 %v292
      %v551 = vunpack.c.l.b16 %v293
      %v552 = vunpack.c.l.b16 %v294
      %v553 = vunpack.c.l.b16 %v295
      %v554 = vunpack.c.l.b16 %v296
      %v555 = vunpack.c.l.b16 %v297
      %v556 = vunpack.c.l.b16 %v298
      %v557 = vunpack.c.l.b16 %v299
      %v558 = vunpack.c.l.b16 %v300
      %v559 = vunpack.c.l.b16 %v301
      %v560 = vunpack.c.l.b16 %v302
      %v561 = vunpack.c.l.b16 %v303
      %v562 = vunpack.c.l.b16 %v304
      %v563 = vunpack.c.l.b16 %v305
      %v564 = vunpack.c.l.b16 %v306
      %v565 = vunpack.c.l.b16 %v307
      %v566 = vunpack.c.l.b16 %v308
      %v567 = vunpack.c.l.b16 %v309
      %v568 = vunpack.c.l.b16 %v310
      %v569 = vunpack.c.l.b16 %v311
      %v570 = vunpack.c.l.b16 %v312
      %v571 = vunpack.c.l.b16 %v313
      %v572 = vunpack.c.l.b16 %v314
      %v573 = vunpack.c.l.b16 %v315
      %v574 = vunpack.c.l.b16 %v316
      %v575 = vunpack.c.l.b16 %v317
      %v576 = vunpack.c.l.b16 %v318
      %v577 = vunpack.c.l.b16 %v319
      %v578 = vunpack.c.l.b16 %v320
      %v579 = vunpack.c.l.b16 %v321
      %v580 = vunpack.c.l.b16 %v322
      %v581 = vunpack.c.l.b16 %v323
      %v582 = vunpack.c.l.b16 %v324
      %v583 = vunpack.c.l.b16 %v325
      %v584 = vunpack.c.l.b16 %v326
      %v585 = vunpack.c.l.b16 %v327
      %v586 = vunpack.c.l.b16 %v328
      %v587 = vunpack.c.l.b16 %v329
      %v588 = vunpack.c.l.b16 %v330
      %v589 = vunpack.c.l.b16 %v331
      %v590 = vunpack.c.l.b16 %v332
      %v591 = vunpack.c.l.b16 %v333
      %v592 = vunpack.c.l.b16 %v334
      %v593 = vunpack.c.l.b16 %v335
      %v594 = vunpack.c.l.b16 %v336
      %v595 = vunpack.c.l.b16 %v337
      %v596 = vunpack.c.l.b16 %v338
      %v597 = vunpack.c.l.b16 %v339
      %v598 = vunpack.c.l.b16 %v340
      %v599 = vunpack.c.l.b16 %v341
      %v600 = vunpack.c.l.b16 %v342
      %v601 = vunpack.c.l.b16 %v343
      %v602 = vunpack.c.l.b16 %v344
      %v603 = vunpack.c.l.b16 %v345
      %v604 = vunpack.c.l.b16 %v346
      %v605 = vunpack.c.l.b16 %v347
      %v606 = vunpack.c.l.b16 %v348
      %v607 = vunpack.c.l.b16 %v349
      %v608 = vunpack.c.l.b16 %v350
      %v609 = vunpack.c.l.b16 %v351
      %v610 = vunpack.c.l.b16 %v352
      %v611 = vunpack.c.l.b16 %v353
      %v612 = vunpack.c.l.b16 %v354
      %v613 = vunpack.c.l.b16 %v355
      %v614 = vunpack.c.l.b16 %v356
      %v615 = vunpack.c.l.b16 %v357
      %v616 = vunpack.c.l.b16 %v358
      %v617 = vunpack.c.l.b16 %v359
      %v618 = vunpack.c.l.b16 %v360
      %v619 = vunpack.c.l.b16 %v361
      %v620 = vunpack.c.l.b16 %v362
      %v621 = vunpack.c.l.b16 %v363
      %v622 = vunpack.c.l.b16 %v364
      %v623 = vunpack.c.l.b16 %v365
      %v624 = vunpack.c.l.b16 %v366
      %v625 = vunpack.c.l.b16 %v367
      %v626 = vunpack.c.l.b16 %v368
      %v627 = vunpack.c.l.b16 %v369
      %v628 = vunpack.c.l.b16 %v370
      %v629 = vunpack.c.l.b16 %v371
      %v630 = vunpack.c.l.b16 %v372
      %v631 = vunpack.c.l.b16 %v373
      %v632 = vunpack.c.l.b16 %v374
      %v633 = vunpack.c.l.b16 %v375
      %v634 = vunpack.c.l.b16 %v376
      %v635 = vunpack.c.l.b16 %v377
      %v636 = vunpack.c.l.b16 %v378
      %v637 = vunpack.c.l.b16 %v379
      %v638 = vunpack.c.l.b16 %v380
      %v639 = vunpack.c.l.b16 %v381
      %v640 = vunpack.c.l.b16 %v382
      %v641 = vunpack.c.l.b16 %v383
      %v642 = vunpack.c.l.b16 %v384
      %v643 = vunpack.c.l.b16 %v385
      %v644 = vunpack.c.l.b16 %v386
      %v645 = vunpack.c.l.b16 %v387
      %v646 = vunpack.c.l.b16 %v388
      %v647 = vunpack.c.l.b16 %v389
      %v648 = vunpack.c.l.b16 %v390
      %v649 = vunpack.c.l.b16 %v391
      %v650 = vunpack.c.l.b16 %v392
      %v651 = vunpack.c.l.b16 %v393
      %v652 = vunpack.c.l.b16 %v394
      %v653 = vunpack.c.l.b16 %v395
      %v654 = vunpack.c.l.b16 %v396
      %v655 = vunpack.c.l.b16 %v397
      %v656 = vunpack.c.l.b16 %v398
      %v657 = vunpack.c.l.b16 %v399
      %v658 = vunpack.c.l.b16 %v400
      %v659 = vunpack.c.l.b16 %v401
      %v660 = vunpack.c.l.b16 %v402
      %v661 = vunpack.c.l.b16 %v403
      %v662 = vunpack.c.l.b16 %v404
      %v663 = vunpack.c.l.b16 %v405
      %v664 = vunpack.c.l.b16 %v406
      %v665 = vunpack.c.l.b16 %v407
      %v666 = vunpack.c.l.b16 %v408
      %v667 = vunpack.c.l.b16 %v409
      %v668 = vunpack.c.l.b16 %v410
      %v669 = vunpack.c.l.b16 %v411
      %v670 = vunpack.c.l.b16 %v412
      %v671 = vpack.c.b16 %v548, %v547
      %v672 = vpack.c.b16 %v550, %v549
      %v673 = vpack.c.b16 %v552, %v551
      %v674 = vpack.c.b16 %v554, %v553
      %v675 = vpack.c.b16 %v556, %v555
      %v676 = vpack.c.b16 %v558, %v557
      %v677 = vpack.c.b16 %v560, %v559
      %v678 = vpack.c.b16 %v562, %v561
      %v679 = vpack.c.b16 %v564, %v563
      %v680 = vpack.c.b16 %v566, %v565
      %v681 = vpack.c.b16 %v568, %v567
      %v682 = vpack.c.b16 %v570, %v569
      %v683 = vpack.c.b16 %v572, %v571
      %v684 = vpack.c.b16 %v574, %v573
      %v685 = vpack.c.b16 %v576, %v575
      %v686 = vpack.c.b16 %v578, %v577
      %v687 = vpack.c.b16 %v580, %v579
      %v688 = vpack.c.b16 %v582, %v581
      %v689 = vpack.c.b16 %v584, %v583
      %v690 = vpack.c.b16 %v586, %v585
      %v691 = vpack.c.b16 %v588, %v587
      %v692 = vpack.c.b16 %v590, %v589
      %v693 = vpack.c.b16 %v592, %v591
      %v694 = vpack.c.b16 %v594, %v593
      %v695 = vpack.c.b16 %v596, %v595
      %v696 = vpack.c.b16 %v598, %v597
      %v697 = vpack.c.b16 %v600, %v599
      %v698 = vpack.c.b16 %v602, %v601
      %v699 = vpack.c.b16 %v604, %v603
      %v700 = vpack.c.b16 %v606, %v605
      %v701 = vpack.c.b16 %v608, %v607
      %v702 = vpack.c.b16 %v610, %v609
      %v703 = vpack.c.b16 %v612, %v611
      %v704 = vpack.c.b16 %v614, %v613
      %v705 = vpack.c.b16 %v616, %v615
      %v706 = vpack.c.b16 %v618, %v617
      %v707 = vpack.c.b16 %v620, %v619
      %v708 = vpack.c.b16 %v622, %v621
      %v709 = vpack.c.b16 %v624, %v623
      %v710 = vpack.c.b16 %v626, %v625
      %v711 = vpack.c.b16 %v628, %v627
      %v712 = vpack.c.b16 %v630, %v629
      %v713 = vpack.c.b16 %v632, %v631
      %v714 = vpack.c.b16 %v634, %v633
      %v715 = vpack.c.b16 %v636, %v635
      %v716 = vpack.c.b16 %v638, %v637
      %v717 = vpack.c.b16 %v640, %v639
      %v718 = vpack.c.b16 %v642, %v641
      %v719 = vpack.c.b16 %v644, %v643
      %v720 = vpack.c.b16 %v646, %v645
      %v721 = vpack.c.b16 %v648, %v647
      %v722 = vpack.c.b16 %v650, %v649
      %v723 = vpack.c.b16 %v652, %v651
      %v724 = vpack.c.b16 %v654, %v653
      %v725 = vpack.c.b16 %v656, %v655
      %v726 = vpack.c.b16 %v658, %v657
      %v727 = vpack.c.b16 %v660, %v659
      %v728 = vpack.c.b16 %v662, %v661
      %v729 = vpack.c.b16 %v664, %v663
      %v730 = vpack.c.b16 %v666, %v665
      %v731 = vpack.c.b16 %v668, %v667
      %v732 = vpack.c.b16 %v670, %v669
      %v737 = vunpack.c.l.b16 %v413
      %v738 = vunpack.c.l.b16 %v414
      %v739 = vunpack.c.l.b16 %v415
      %v740 = vunpack.c.l.b16 %v416
      %v741 = vpack.c.b16 %v738, %v737
      %v742 = vpack.c.b16 %v740, %v739
      %s743 = scalar_lea.vmem %s2, 8
      %v744 = vld [vmem:[%s743] sm:$0xf]
      %v745 = vld [vmem:[%s743 + $0x4] sm:$0x3]
      %v748 = vunpack.c.l.b16 %v744
      %v749 = vunpack.c.l.b16 %v745
      %v750 = vpack.c.b16 %v749, %v748
      %vm751 = vcmask 97280
      %v753 = vsel %vm751, %v671, 0
      %v756 = vsel %vm751, %v672, 0
      %v759 = vsel %vm751, %v673, 0
      %v762 = vsel %vm751, %v674, 0
      %v765 = vsel %vm751, %v675, 0
      %v768 = vsel %vm751, %v676, 0
      %v771 = vsel %vm751, %v677, 0
      %v774 = vsel %vm751, %v678, 0
      %v777 = vsel %vm751, %v679, 0
      %v780 = vsel %vm751, %v680, 0
      %v783 = vsel %vm751, %v681, 0
      %v786 = vsel %vm751, %v682, 0
      %v789 = vsel %vm751, %v683, 0
      %v792 = vsel %vm751, %v684, 0
      %v795 = vsel %vm751, %v685, 0
      %v798 = vsel %vm751, %v686, 0
      %v801 = vsel %vm751, %v687, 0
      %v804 = vsel %vm751, %v688, 0
      %v807 = vsel %vm751, %v689, 0
      %v810 = vsel %vm751, %v690, 0
      %v813 = vsel %vm751, %v691, 0
      %v816 = vsel %vm751, %v692, 0
      %v819 = vsel %vm751, %v693, 0
      %v822 = vsel %vm751, %v694, 0
      %v825 = vsel %vm751, %v695, 0
      %v828 = vsel %vm751, %v696, 0
      %v831 = vsel %vm751, %v697, 0
      %v834 = vsel %vm751, %v698, 0
      %v837 = vsel %vm751, %v699, 0
      %v840 = vsel %vm751, %v700, 0
      %v843 = vsel %vm751, %v701, 0
      %v846 = vsel %vm751, %v702, 0
      %v849 = vsel %vm751, %v703, 0
      %v852 = vsel %vm751, %v704, 0
      %v855 = vsel %vm751, %v705, 0
      %v858 = vsel %vm751, %v706, 0
      %v861 = vsel %vm751, %v707, 0
      %v864 = vsel %vm751, %v708, 0
      %v867 = vsel %vm751, %v709, 0
      %v870 = vsel %vm751, %v710, 0
      %v873 = vsel %vm751, %v711, 0
      %v876 = vsel %vm751, %v712, 0
      %v879 = vsel %vm751, %v713, 0
      %v882 = vsel %vm751, %v714, 0
      %v885 = vsel %vm751, %v715, 0
      %v888 = vsel %vm751, %v716, 0
      %v891 = vsel %vm751, %v717, 0
      %v894 = vsel %vm751, %v718, 0
      %v897 = vsel %vm751, %v719, 0
      %v900 = vsel %vm751, %v720, 0
      %v903 = vsel %vm751, %v721, 0
      %v906 = vsel %vm751, %v722, 0
      %v909 = vsel %vm751, %v723, 0
      %v912 = vsel %vm751, %v724, 0
      %v915 = vsel %vm751, %v725, 0
      %v918 = vsel %vm751, %v726, 0
      %v921 = vsel %vm751, %v727, 0
      %v924 = vsel %vm751, %v728, 0
      %v927 = vsel %vm751, %v729, 0
      %v930 = vsel %vm751, %v730, 0
      %v933 = vsel %vm751, %v731, 0
      %v936 = vsel %vm751, %v732, 0
      %v939 = vsel %vm751, %v741, 0
      %v942 = vsel %vm751, %v742, 0
      %vm944 = vcmask 1045504
      %v946 = vsel %vm944, %v750, 0
      %948 = vmatpush.bf16.msra.mxu0 0
      %949 = vmatpush.bf16.msra.mxu0 0
      %950 = vmatpush.bf16.msra.mxu0 0
      %951 = vmatpush.bf16.msra.mxu0 0
      %952 = vmatpush.bf16.msra.mxu0 0
      %953 = vmatpush.bf16.msra.mxu0 0
      %954 = vmatpush.bf16.msra.mxu0 0
      %955 = vmatpush.bf16.msra.mxu0 %v946
      %956 = vmatmul.bf16.gmra.mxu0 %v753
      %v957 = vpop.f32.mrf.mxu0
      %v958 = vadd.f32 0.0, %v957
      %v959 = vpop.f32.mrf.mxu0
      %v960 = vadd.f32 0.0, %v959
      %961 = vmatmul.bf16.gmra.mxu0 %v756
      %v962 = vpop.f32.mrf.mxu0
      %v963 = vadd.f32 0.0, %v962
      %v964 = vpop.f32.mrf.mxu0
      %v965 = vadd.f32 0.0, %v964
      %966 = vmatmul.bf16.gmra.mxu0 %v759
      %v967 = vpop.f32.mrf.mxu0
      %v968 = vadd.f32 0.0, %v967
      %v969 = vpop.f32.mrf.mxu0
      %v970 = vadd.f32 0.0, %v969
      %971 = vmatmul.bf16.gmra.mxu0 %v762
      %v972 = vpop.f32.mrf.mxu0
      %v973 = vadd.f32 0.0, %v972
      %v974 = vpop.f32.mrf.mxu0
      %v975 = vadd.f32 0.0, %v974
      %976 = vmatmul.bf16.gmra.mxu0 %v765
      %v977 = vpop.f32.mrf.mxu0
      %v978 = vadd.f32 0.0, %v977
      %v979 = vpop.f32.mrf.mxu0
      %v980 = vadd.f32 0.0, %v979
      %981 = vmatmul.bf16.gmra.mxu0 %v768
      %v982 = vpop.f32.mrf.mxu0
      %v983 = vadd.f32 0.0, %v982
      %v984 = vpop.f32.mrf.mxu0
      %v985 = vadd.f32 0.0, %v984
      %986 = vmatmul.bf16.gmra.mxu0 %v771
      %v987 = vpop.f32.mrf.mxu0
      %v988 = vadd.f32 0.0, %v987
      %v989 = vpop.f32.mrf.mxu0
      %v990 = vadd.f32 0.0, %v989
      %991 = vmatmul.bf16.gmra.mxu0 %v774
      %v992 = vpop.f32.mrf.mxu0
      %v993 = vadd.f32 0.0, %v992
      %v994 = vpop.f32.mrf.mxu0
      %v995 = vadd.f32 0.0, %v994
      %996 = vmatmul.bf16.gmra.mxu0 %v777
      %v997 = vpop.f32.mrf.mxu0
      %v998 = vadd.f32 0.0, %v997
      %v999 = vpop.f32.mrf.mxu0
      %v1000 = vadd.f32 0.0, %v999
      %1001 = vmatmul.bf16.gmra.mxu0 %v780
      %v1002 = vpop.f32.mrf.mxu0
      %v1003 = vadd.f32 0.0, %v1002
      %v1004 = vpop.f32.mrf.mxu0
      %v1005 = vadd.f32 0.0, %v1004
      %1006 = vmatmul.bf16.gmra.mxu0 %v783
      %v1007 = vpop.f32.mrf.mxu0
      %v1008 = vadd.f32 0.0, %v1007
      %v1009 = vpop.f32.mrf.mxu0
      %v1010 = vadd.f32 0.0, %v1009
      %1011 = vmatmul.bf16.gmra.mxu0 %v786
      %v1012 = vpop.f32.mrf.mxu0
      %v1013 = vadd.f32 0.0, %v1012
      %v1014 = vpop.f32.mrf.mxu0
      %v1015 = vadd.f32 0.0, %v1014
      %1016 = vmatmul.bf16.gmra.mxu0 %v789
      %v1017 = vpop.f32.mrf.mxu0
      %v1018 = vadd.f32 0.0, %v1017
      %v1019 = vpop.f32.mrf.mxu0
      %v1020 = vadd.f32 0.0, %v1019
      %1021 = vmatmul.bf16.gmra.mxu0 %v792
      %v1022 = vpop.f32.mrf.mxu0
      %v1023 = vadd.f32 0.0, %v1022
      %v1024 = vpop.f32.mrf.mxu0
      %v1025 = vadd.f32 0.0, %v1024
      %1026 = vmatmul.bf16.gmra.mxu0 %v795
      %v1027 = vpop.f32.mrf.mxu0
      %v1028 = vadd.f32 0.0, %v1027
      %v1029 = vpop.f32.mrf.mxu0
      %v1030 = vadd.f32 0.0, %v1029
      %1031 = vmatmul.bf16.gmra.mxu0 %v798
      %v1032 = vpop.f32.mrf.mxu0
      %v1033 = vadd.f32 0.0, %v1032
      %v1034 = vpop.f32.mrf.mxu0
      %v1035 = vadd.f32 0.0, %v1034
      %1036 = vmatmul.bf16.gmra.mxu0 %v801
      %v1037 = vpop.f32.mrf.mxu0
      %v1038 = vadd.f32 0.0, %v1037
      %v1039 = vpop.f32.mrf.mxu0
      %v1040 = vadd.f32 0.0, %v1039
      %1041 = vmatmul.bf16.gmra.mxu0 %v804
      %v1042 = vpop.f32.mrf.mxu0
      %v1043 = vadd.f32 0.0, %v1042
      %v1044 = vpop.f32.mrf.mxu0
      %v1045 = vadd.f32 0.0, %v1044
      %1046 = vmatmul.bf16.gmra.mxu0 %v807
      %v1047 = vpop.f32.mrf.mxu0
      %v1048 = vadd.f32 0.0, %v1047
      %v1049 = vpop.f32.mrf.mxu0
      %v1050 = vadd.f32 0.0, %v1049
      %1051 = vmatmul.bf16.gmra.mxu0 %v810
      %v1052 = vpop.f32.mrf.mxu0
      %v1053 = vadd.f32 0.0, %v1052
      %v1054 = vpop.f32.mrf.mxu0
      %v1055 = vadd.f32 0.0, %v1054
      %1056 = vmatmul.bf16.gmra.mxu0 %v813
      %v1057 = vpop.f32.mrf.mxu0
      %v1058 = vadd.f32 0.0, %v1057
      %v1059 = vpop.f32.mrf.mxu0
      %v1060 = vadd.f32 0.0, %v1059
      %1061 = vmatmul.bf16.gmra.mxu0 %v816
      %v1062 = vpop.f32.mrf.mxu0
      %v1063 = vadd.f32 0.0, %v1062
      %v1064 = vpop.f32.mrf.mxu0
      %v1065 = vadd.f32 0.0, %v1064
      %1066 = vmatmul.bf16.gmra.mxu0 %v819
      %v1067 = vpop.f32.mrf.mxu0
      %v1068 = vadd.f32 0.0, %v1067
      %v1069 = vpop.f32.mrf.mxu0
      %v1070 = vadd.f32 0.0, %v1069
      %1071 = vmatmul.bf16.gmra.mxu0 %v822
      %v1072 = vpop.f32.mrf.mxu0
      %v1073 = vadd.f32 0.0, %v1072
      %v1074 = vpop.f32.mrf.mxu0
      %v1075 = vadd.f32 0.0, %v1074
      %1076 = vmatmul.bf16.gmra.mxu0 %v825
      %v1077 = vpop.f32.mrf.mxu0
      %v1078 = vadd.f32 0.0, %v1077
      %v1079 = vpop.f32.mrf.mxu0
      %v1080 = vadd.f32 0.0, %v1079
      %1081 = vmatmul.bf16.gmra.mxu0 %v828
      %v1082 = vpop.f32.mrf.mxu0
      %v1083 = vadd.f32 0.0, %v1082
      %v1084 = vpop.f32.mrf.mxu0
      %v1085 = vadd.f32 0.0, %v1084
      %1086 = vmatmul.bf16.gmra.mxu0 %v831
      %v1087 = vpop.f32.mrf.mxu0
      %v1088 = vadd.f32 0.0, %v1087
      %v1089 = vpop.f32.mrf.mxu0
      %v1090 = vadd.f32 0.0, %v1089
      %1091 = vmatmul.bf16.gmra.mxu0 %v834
      %v1092 = vpop.f32.mrf.mxu0
      %v1093 = vadd.f32 0.0, %v1092
      %v1094 = vpop.f32.mrf.mxu0
      %v1095 = vadd.f32 0.0, %v1094
      %1096 = vmatmul.bf16.gmra.mxu0 %v837
      %v1097 = vpop.f32.mrf.mxu0
      %v1098 = vadd.f32 0.0, %v1097
      %v1099 = vpop.f32.mrf.mxu0
      %v1100 = vadd.f32 0.0, %v1099
      %1101 = vmatmul.bf16.gmra.mxu0 %v840
      %v1102 = vpop.f32.mrf.mxu0
      %v1103 = vadd.f32 0.0, %v1102
      %v1104 = vpop.f32.mrf.mxu0
      %v1105 = vadd.f32 0.0, %v1104
      %1106 = vmatmul.bf16.gmra.mxu0 %v843
      %v1107 = vpop.f32.mrf.mxu0
      %v1108 = vadd.f32 0.0, %v1107
      %v1109 = vpop.f32.mrf.mxu0
      %v1110 = vadd.f32 0.0, %v1109
      %1111 = vmatmul.bf16.gmra.mxu0 %v846
      %v1112 = vpop.f32.mrf.mxu0
      %v1113 = vadd.f32 0.0, %v1112
      %v1114 = vpop.f32.mrf.mxu0
      %v1115 = vadd.f32 0.0, %v1114
      %1116 = vmatmul.bf16.gmra.mxu0 %v849
      %v1117 = vpop.f32.mrf.mxu0
      %v1118 = vadd.f32 0.0, %v1117
      %v1119 = vpop.f32.mrf.mxu0
      %v1120 = vadd.f32 0.0, %v1119
      %1121 = vmatmul.bf16.gmra.mxu0 %v852
      %v1122 = vpop.f32.mrf.mxu0
      %v1123 = vadd.f32 0.0, %v1122
      %v1124 = vpop.f32.mrf.mxu0
      %v1125 = vadd.f32 0.0, %v1124
      %1126 = vmatmul.bf16.gmra.mxu0 %v855
      %v1127 = vpop.f32.mrf.mxu0
      %v1128 = vadd.f32 0.0, %v1127
      %v1129 = vpop.f32.mrf.mxu0
      %v1130 = vadd.f32 0.0, %v1129
      %1131 = vmatmul.bf16.gmra.mxu0 %v858
      %v1132 = vpop.f32.mrf.mxu0
      %v1133 = vadd.f32 0.0, %v1132
      %v1134 = vpop.f32.mrf.mxu0
      %v1135 = vadd.f32 0.0, %v1134
      %1136 = vmatmul.bf16.gmra.mxu0 %v861
      %v1137 = vpop.f32.mrf.mxu0
      %v1138 = vadd.f32 0.0, %v1137
      %v1139 = vpop.f32.mrf.mxu0
      %v1140 = vadd.f32 0.0, %v1139
      %1141 = vmatmul.bf16.gmra.mxu0 %v864
      %v1142 = vpop.f32.mrf.mxu0
      %v1143 = vadd.f32 0.0, %v1142
      %v1144 = vpop.f32.mrf.mxu0
      %v1145 = vadd.f32 0.0, %v1144
      %1146 = vmatmul.bf16.gmra.mxu0 %v867
      %v1147 = vpop.f32.mrf.mxu0
      %v1148 = vadd.f32 0.0, %v1147
      %v1149 = vpop.f32.mrf.mxu0
      %v1150 = vadd.f32 0.0, %v1149
      %1151 = vmatmul.bf16.gmra.mxu0 %v870
      %v1152 = vpop.f32.mrf.mxu0
      %v1153 = vadd.f32 0.0, %v1152
      %v1154 = vpop.f32.mrf.mxu0
      %v1155 = vadd.f32 0.0, %v1154
      %1156 = vmatmul.bf16.gmra.mxu0 %v873
      %v1157 = vpop.f32.mrf.mxu0
      %v1158 = vadd.f32 0.0, %v1157
      %v1159 = vpop.f32.mrf.mxu0
      %v1160 = vadd.f32 0.0, %v1159
      %1161 = vmatmul.bf16.gmra.mxu0 %v876
      %v1162 = vpop.f32.mrf.mxu0
      %v1163 = vadd.f32 0.0, %v1162
      %v1164 = vpop.f32.mrf.mxu0
      %v1165 = vadd.f32 0.0, %v1164
      %1166 = vmatmul.bf16.gmra.mxu0 %v879
      %v1167 = vpop.f32.mrf.mxu0
      %v1168 = vadd.f32 0.0, %v1167
      %v1169 = vpop.f32.mrf.mxu0
      %v1170 = vadd.f32 0.0, %v1169
      %1171 = vmatmul.bf16.gmra.mxu0 %v882
      %v1172 = vpop.f32.mrf.mxu0
      %v1173 = vadd.f32 0.0, %v1172
      %v1174 = vpop.f32.mrf.mxu0
      %v1175 = vadd.f32 0.0, %v1174
      %1176 = vmatmul.bf16.gmra.mxu0 %v885
      %v1177 = vpop.f32.mrf.mxu0
      %v1178 = vadd.f32 0.0, %v1177
      %v1179 = vpop.f32.mrf.mxu0
      %v1180 = vadd.f32 0.0, %v1179
      %1181 = vmatmul.bf16.gmra.mxu0 %v888
      %v1182 = vpop.f32.mrf.mxu0
      %v1183 = vadd.f32 0.0, %v1182
      %v1184 = vpop.f32.mrf.mxu0
      %v1185 = vadd.f32 0.0, %v1184
      %1186 = vmatmul.bf16.gmra.mxu0 %v891
      %v1187 = vpop.f32.mrf.mxu0
      %v1188 = vadd.f32 0.0, %v1187
      %v1189 = vpop.f32.mrf.mxu0
      %v1190 = vadd.f32 0.0, %v1189
      %1191 = vmatmul.bf16.gmra.mxu0 %v894
      %v1192 = vpop.f32.mrf.mxu0
      %v1193 = vadd.f32 0.0, %v1192
      %v1194 = vpop.f32.mrf.mxu0
      %v1195 = vadd.f32 0.0, %v1194
      %1196 = vmatmul.bf16.gmra.mxu0 %v897
      %v1197 = vpop.f32.mrf.mxu0
      %v1198 = vadd.f32 0.0, %v1197
      %v1199 = vpop.f32.mrf.mxu0
      %v1200 = vadd.f32 0.0, %v1199
      %1201 = vmatmul.bf16.gmra.mxu0 %v900
      %v1202 = vpop.f32.mrf.mxu0
      %v1203 = vadd.f32 0.0, %v1202
      %v1204 = vpop.f32.mrf.mxu0
      %v1205 = vadd.f32 0.0, %v1204
      %1206 = vmatmul.bf16.gmra.mxu0 %v903
      %v1207 = vpop.f32.mrf.mxu0
      %v1208 = vadd.f32 0.0, %v1207
      %v1209 = vpop.f32.mrf.mxu0
      %v1210 = vadd.f32 0.0, %v1209
      %1211 = vmatmul.bf16.gmra.mxu0 %v906
      %v1212 = vpop.f32.mrf.mxu0
      %v1213 = vadd.f32 0.0, %v1212
      %v1214 = vpop.f32.mrf.mxu0
      %v1215 = vadd.f32 0.0, %v1214
      %1216 = vmatmul.bf16.gmra.mxu0 %v909
      %v1217 = vpop.f32.mrf.mxu0
      %v1218 = vadd.f32 0.0, %v1217
      %v1219 = vpop.f32.mrf.mxu0
      %v1220 = vadd.f32 0.0, %v1219
      %1221 = vmatmul.bf16.gmra.mxu0 %v912
      %v1222 = vpop.f32.mrf.mxu0
      %v1223 = vadd.f32 0.0, %v1222
      %v1224 = vpop.f32.mrf.mxu0
      %v1225 = vadd.f32 0.0, %v1224
      %1226 = vmatmul.bf16.gmra.mxu0 %v915
      %v1227 = vpop.f32.mrf.mxu0
      %v1228 = vadd.f32 0.0, %v1227
      %v1229 = vpop.f32.mrf.mxu0
      %v1230 = vadd.f32 0.0, %v1229
      %1231 = vmatmul.bf16.gmra.mxu0 %v918
      %v1232 = vpop.f32.mrf.mxu0
      %v1233 = vadd.f32 0.0, %v1232
      %v1234 = vpop.f32.mrf.mxu0
      %v1235 = vadd.f32 0.0, %v1234
      %1236 = vmatmul.bf16.gmra.mxu0 %v921
      %v1237 = vpop.f32.mrf.mxu0
      %v1238 = vadd.f32 0.0, %v1237
      %v1239 = vpop.f32.mrf.mxu0
      %v1240 = vadd.f32 0.0, %v1239
      %1241 = vmatmul.bf16.gmra.mxu0 %v924
      %v1242 = vpop.f32.mrf.mxu0
      %v1243 = vadd.f32 0.0, %v1242
      %v1244 = vpop.f32.mrf.mxu0
      %v1245 = vadd.f32 0.0, %v1244
      %1246 = vmatmul.bf16.gmra.mxu0 %v927
      %v1247 = vpop.f32.mrf.mxu0
      %v1248 = vadd.f32 0.0, %v1247
      %v1249 = vpop.f32.mrf.mxu0
      %v1250 = vadd.f32 0.0, %v1249
      %1251 = vmatmul.bf16.gmra.mxu0 %v930
      %v1252 = vpop.f32.mrf.mxu0
      %v1253 = vadd.f32 0.0, %v1252
      %v1254 = vpop.f32.mrf.mxu0
      %v1255 = vadd.f32 0.0, %v1254
      %1256 = vmatmul.bf16.gmra.mxu0 %v933
      %v1257 = vpop.f32.mrf.mxu0
      %v1258 = vadd.f32 0.0, %v1257
      %v1259 = vpop.f32.mrf.mxu0
      %v1260 = vadd.f32 0.0, %v1259
      %1261 = vmatmul.bf16.gmra.mxu0 %v936
      %v1262 = vpop.f32.mrf.mxu0
      %v1263 = vadd.f32 0.0, %v1262
      %v1264 = vpop.f32.mrf.mxu0
      %v1265 = vadd.f32 0.0, %v1264
      %1266 = vmatmul.bf16.gmra.mxu0 %v939
      %v1267 = vpop.f32.mrf.mxu0
      %v1268 = vadd.f32 0.0, %v1267
      %v1269 = vpop.f32.mrf.mxu0
      %v1270 = vadd.f32 0.0, %v1269
      %1271 = vmatmul.bf16.gmra.mxu0 %v942
      %v1272 = vpop.f32.mrf.mxu0
      %v1273 = vadd.f32 0.0, %v1272
      %v1274 = vpop.f32.mrf.mxu0
      %v1275 = vadd.f32 0.0, %v1274
      %1276 = vdwg.mxu0
      %v1281 = vunpack.c.l.b16 %v285
      %v1282 = vunpack.c.l.b16 %v286
      %v1283 = vunpack.c.l.b16 %v287
      %v1284 = vunpack.c.l.b16 %v288
      %v1285 = vpack.c.b16 %v1282, %v1281
      %v1286 = vpack.c.b16 %v1284, %v1283
      %v1289 = vunpack.c.l.b16 %v421
      %v1290 = vunpack.c.l.b16 %v422
      %v1291 = vpack.c.b16 %v1290, %v1289
      %v1293 = vsel %vm751, %v1285, 0
      %v1296 = vsel %vm751, %v1286, 0
      %v1299 = vsel %vm944, %v1291, 0
      %1301 = vmatpush.bf16.msra.mxu0 0
      %1302 = vmatpush.bf16.msra.mxu0 0
      %1303 = vmatpush.bf16.msra.mxu0 0
      %1304 = vmatpush.bf16.msra.mxu0 0
      %1305 = vmatpush.bf16.msra.mxu0 0
      %1306 = vmatpush.bf16.msra.mxu0 0
      %1307 = vmatpush.bf16.msra.mxu0 0
      %1308 = vmatpush.bf16.msra.mxu0 %v1299
      %1309 = vmatmul.bf16.gmra.mxu0 %v1293
      %v1310 = vpop.f32.mrf.mxu0
      %v1311 = vadd.f32 %v958, %v1310
      %v1312 = vpop.f32.mrf.mxu0
      %v1313 = vadd.f32 %v960, %v1312
      %1314 = vmatmul.bf16.gmra.mxu0 %v1296
      %v1315 = vpop.f32.mrf.mxu0
      %v1316 = vadd.f32 %v963, %v1315
      %v1317 = vpop.f32.mrf.mxu0
      %v1318 = vadd.f32 %v965, %v1317
      %1319 = vmatmul.bf16.gmra.mxu0 %v753
      %v1320 = vpop.f32.mrf.mxu0
      %v1321 = vadd.f32 %v968, %v1320
      %v1322 = vpop.f32.mrf.mxu0
      %v1323 = vadd.f32 %v970, %v1322
      %1324 = vmatmul.bf16.gmra.mxu0 %v756
      %v1325 = vpop.f32.mrf.mxu0
      %v1326 = vadd.f32 %v973, %v1325
      %v1327 = vpop.f32.mrf.mxu0
      %v1328 = vadd.f32 %v975, %v1327
      %1329 = vmatmul.bf16.gmra.mxu0 %v759
      %v1330 = vpop.f32.mrf.mxu0
      %v1331 = vadd.f32 %v978, %v1330
      %v1332 = vpop.f32.mrf.mxu0
      %v1333 = vadd.f32 %v980, %v1332
      %1334 = vmatmul.bf16.gmra.mxu0 %v762
      %v1335 = vpop.f32.mrf.mxu0
      %v1336 = vadd.f32 %v983, %v1335
      %v1337 = vpop.f32.mrf.mxu0
      %v1338 = vadd.f32 %v985, %v1337
      %1339 = vmatmul.bf16.gmra.mxu0 %v765
      %v1340 = vpop.f32.mrf.mxu0
      %v1341 = vadd.f32 %v988, %v1340
      %v1342 = vpop.f32.mrf.mxu0
      %v1343 = vadd.f32 %v990, %v1342
      %1344 = vmatmul.bf16.gmra.mxu0 %v768
      %v1345 = vpop.f32.mrf.mxu0
      %v1346 = vadd.f32 %v993, %v1345
      %v1347 = vpop.f32.mrf.mxu0
      %v1348 = vadd.f32 %v995, %v1347
      %1349 = vmatmul.bf16.gmra.mxu0 %v771
      %v1350 = vpop.f32.mrf.mxu0
      %v1351 = vadd.f32 %v998, %v1350
      %v1352 = vpop.f32.mrf.mxu0
      %v1353 = vadd.f32 %v1000, %v1352
      %1354 = vmatmul.bf16.gmra.mxu0 %v774
      %v1355 = vpop.f32.mrf.mxu0
      %v1356 = vadd.f32 %v1003, %v1355
      %v1357 = vpop.f32.mrf.mxu0
      %v1358 = vadd.f32 %v1005, %v1357
      %1359 = vmatmul.bf16.gmra.mxu0 %v777
      %v1360 = vpop.f32.mrf.mxu0
      %v1361 = vadd.f32 %v1008, %v1360
      %v1362 = vpop.f32.mrf.mxu0
      %v1363 = vadd.f32 %v1010, %v1362
      %1364 = vmatmul.bf16.gmra.mxu0 %v780
      %v1365 = vpop.f32.mrf.mxu0
      %v1366 = vadd.f32 %v1013, %v1365
      %v1367 = vpop.f32.mrf.mxu0
      %v1368 = vadd.f32 %v1015, %v1367
      %1369 = vmatmul.bf16.gmra.mxu0 %v783
      %v1370 = vpop.f32.mrf.mxu0
      %v1371 = vadd.f32 %v1018, %v1370
      %v1372 = vpop.f32.mrf.mxu0
      %v1373 = vadd.f32 %v1020, %v1372
      %1374 = vmatmul.bf16.gmra.mxu0 %v786
      %v1375 = vpop.f32.mrf.mxu0
      %v1376 = vadd.f32 %v1023, %v1375
      %v1377 = vpop.f32.mrf.mxu0
      %v1378 = vadd.f32 %v1025, %v1377
      %1379 = vmatmul.bf16.gmra.mxu0 %v789
      %v1380 = vpop.f32.mrf.mxu0
      %v1381 = vadd.f32 %v1028, %v1380
      %v1382 = vpop.f32.mrf.mxu0
      %v1383 = vadd.f32 %v1030, %v1382
      %1384 = vmatmul.bf16.gmra.mxu0 %v792
      %v1385 = vpop.f32.mrf.mxu0
      %v1386 = vadd.f32 %v1033, %v1385
      %v1387 = vpop.f32.mrf.mxu0
      %v1388 = vadd.f32 %v1035, %v1387
      %1389 = vmatmul.bf16.gmra.mxu0 %v795
      %v1390 = vpop.f32.mrf.mxu0
      %v1391 = vadd.f32 %v1038, %v1390
      %v1392 = vpop.f32.mrf.mxu0
      %v1393 = vadd.f32 %v1040, %v1392
      %1394 = vmatmul.bf16.gmra.mxu0 %v798
      %v1395 = vpop.f32.mrf.mxu0
      %v1396 = vadd.f32 %v1043, %v1395
      %v1397 = vpop.f32.mrf.mxu0
      %v1398 = vadd.f32 %v1045, %v1397
      %1399 = vmatmul.bf16.gmra.mxu0 %v801
      %v1400 = vpop.f32.mrf.mxu0
      %v1401 = vadd.f32 %v1048, %v1400
      %v1402 = vpop.f32.mrf.mxu0
      %v1403 = vadd.f32 %v1050, %v1402
      %1404 = vmatmul.bf16.gmra.mxu0 %v804
      %v1405 = vpop.f32.mrf.mxu0
      %v1406 = vadd.f32 %v1053, %v1405
      %v1407 = vpop.f32.mrf.mxu0
      %v1408 = vadd.f32 %v1055, %v1407
      %1409 = vmatmul.bf16.gmra.mxu0 %v807
      %v1410 = vpop.f32.mrf.mxu0
      %v1411 = vadd.f32 %v1058, %v1410
      %v1412 = vpop.f32.mrf.mxu0
      %v1413 = vadd.f32 %v1060, %v1412
      %1414 = vmatmul.bf16.gmra.mxu0 %v810
      %v1415 = vpop.f32.mrf.mxu0
      %v1416 = vadd.f32 %v1063, %v1415
      %v1417 = vpop.f32.mrf.mxu0
      %v1418 = vadd.f32 %v1065, %v1417
      %1419 = vmatmul.bf16.gmra.mxu0 %v813
      %v1420 = vpop.f32.mrf.mxu0
      %v1421 = vadd.f32 %v1068, %v1420
      %v1422 = vpop.f32.mrf.mxu0
      %v1423 = vadd.f32 %v1070, %v1422
      %1424 = vmatmul.bf16.gmra.mxu0 %v816
      %v1425 = vpop.f32.mrf.mxu0
      %v1426 = vadd.f32 %v1073, %v1425
      %v1427 = vpop.f32.mrf.mxu0
      %v1428 = vadd.f32 %v1075, %v1427
      %1429 = vmatmul.bf16.gmra.mxu0 %v819
      %v1430 = vpop.f32.mrf.mxu0
      %v1431 = vadd.f32 %v1078, %v1430
      %v1432 = vpop.f32.mrf.mxu0
      %v1433 = vadd.f32 %v1080, %v1432
      %1434 = vmatmul.bf16.gmra.mxu0 %v822
      %v1435 = vpop.f32.mrf.mxu0
      %v1436 = vadd.f32 %v1083, %v1435
      %v1437 = vpop.f32.mrf.mxu0
      %v1438 = vadd.f32 %v1085, %v1437
      %1439 = vmatmul.bf16.gmra.mxu0 %v825
      %v1440 = vpop.f32.mrf.mxu0
      %v1441 = vadd.f32 %v1088, %v1440
      %v1442 = vpop.f32.mrf.mxu0
      %v1443 = vadd.f32 %v1090, %v1442
      %1444 = vmatmul.bf16.gmra.mxu0 %v828
      %v1445 = vpop.f32.mrf.mxu0
      %v1446 = vadd.f32 %v1093, %v1445
      %v1447 = vpop.f32.mrf.mxu0
      %v1448 = vadd.f32 %v1095, %v1447
      %1449 = vmatmul.bf16.gmra.mxu0 %v831
      %v1450 = vpop.f32.mrf.mxu0
      %v1451 = vadd.f32 %v1098, %v1450
      %v1452 = vpop.f32.mrf.mxu0
      %v1453 = vadd.f32 %v1100, %v1452
      %1454 = vmatmul.bf16.gmra.mxu0 %v834
      %v1455 = vpop.f32.mrf.mxu0
      %v1456 = vadd.f32 %v1103, %v1455
      %v1457 = vpop.f32.mrf.mxu0
      %v1458 = vadd.f32 %v1105, %v1457
      %1459 = vmatmul.bf16.gmra.mxu0 %v837
      %v1460 = vpop.f32.mrf.mxu0
      %v1461 = vadd.f32 %v1108, %v1460
      %v1462 = vpop.f32.mrf.mxu0
      %v1463 = vadd.f32 %v1110, %v1462
      %1464 = vmatmul.bf16.gmra.mxu0 %v840
      %v1465 = vpop.f32.mrf.mxu0
      %v1466 = vadd.f32 %v1113, %v1465
      %v1467 = vpop.f32.mrf.mxu0
      %v1468 = vadd.f32 %v1115, %v1467
      %1469 = vmatmul.bf16.gmra.mxu0 %v843
      %v1470 = vpop.f32.mrf.mxu0
      %v1471 = vadd.f32 %v1118, %v1470
      %v1472 = vpop.f32.mrf.mxu0
      %v1473 = vadd.f32 %v1120, %v1472
      %1474 = vmatmul.bf16.gmra.mxu0 %v846
      %v1475 = vpop.f32.mrf.mxu0
      %v1476 = vadd.f32 %v1123, %v1475
      %v1477 = vpop.f32.mrf.mxu0
      %v1478 = vadd.f32 %v1125, %v1477
      %1479 = vmatmul.bf16.gmra.mxu0 %v849
      %v1480 = vpop.f32.mrf.mxu0
      %v1481 = vadd.f32 %v1128, %v1480
      %v1482 = vpop.f32.mrf.mxu0
      %v1483 = vadd.f32 %v1130, %v1482
      %1484 = vmatmul.bf16.gmra.mxu0 %v852
      %v1485 = vpop.f32.mrf.mxu0
      %v1486 = vadd.f32 %v1133, %v1485
      %v1487 = vpop.f32.mrf.mxu0
      %v1488 = vadd.f32 %v1135, %v1487
      %1489 = vmatmul.bf16.gmra.mxu0 %v855
      %v1490 = vpop.f32.mrf.mxu0
      %v1491 = vadd.f32 %v1138, %v1490
      %v1492 = vpop.f32.mrf.mxu0
      %v1493 = vadd.f32 %v1140, %v1492
      %1494 = vmatmul.bf16.gmra.mxu0 %v858
      %v1495 = vpop.f32.mrf.mxu0
      %v1496 = vadd.f32 %v1143, %v1495
      %v1497 = vpop.f32.mrf.mxu0
      %v1498 = vadd.f32 %v1145, %v1497
      %1499 = vmatmul.bf16.gmra.mxu0 %v861
      %v1500 = vpop.f32.mrf.mxu0
      %v1501 = vadd.f32 %v1148, %v1500
      %v1502 = vpop.f32.mrf.mxu0
      %v1503 = vadd.f32 %v1150, %v1502
      %1504 = vmatmul.bf16.gmra.mxu0 %v864
      %v1505 = vpop.f32.mrf.mxu0
      %v1506 = vadd.f32 %v1153, %v1505
      %v1507 = vpop.f32.mrf.mxu0
      %v1508 = vadd.f32 %v1155, %v1507
      %1509 = vmatmul.bf16.gmra.mxu0 %v867
      %v1510 = vpop.f32.mrf.mxu0
      %v1511 = vadd.f32 %v1158, %v1510
      %v1512 = vpop.f32.mrf.mxu0
      %v1513 = vadd.f32 %v1160, %v1512
      %1514 = vmatmul.bf16.gmra.mxu0 %v870
      %v1515 = vpop.f32.mrf.mxu0
      %v1516 = vadd.f32 %v1163, %v1515
      %v1517 = vpop.f32.mrf.mxu0
      %v1518 = vadd.f32 %v1165, %v1517
      %1519 = vmatmul.bf16.gmra.mxu0 %v873
      %v1520 = vpop.f32.mrf.mxu0
      %v1521 = vadd.f32 %v1168, %v1520
      %v1522 = vpop.f32.mrf.mxu0
      %v1523 = vadd.f32 %v1170, %v1522
      %1524 = vmatmul.bf16.gmra.mxu0 %v876
      %v1525 = vpop.f32.mrf.mxu0
      %v1526 = vadd.f32 %v1173, %v1525
      %v1527 = vpop.f32.mrf.mxu0
      %v1528 = vadd.f32 %v1175, %v1527
      %1529 = vmatmul.bf16.gmra.mxu0 %v879
      %v1530 = vpop.f32.mrf.mxu0
      %v1531 = vadd.f32 %v1178, %v1530
      %v1532 = vpop.f32.mrf.mxu0
      %v1533 = vadd.f32 %v1180, %v1532
      %1534 = vmatmul.bf16.gmra.mxu0 %v882
      %v1535 = vpop.f32.mrf.mxu0
      %v1536 = vadd.f32 %v1183, %v1535
      %v1537 = vpop.f32.mrf.mxu0
      %v1538 = vadd.f32 %v1185, %v1537
      %1539 = vmatmul.bf16.gmra.mxu0 %v885
      %v1540 = vpop.f32.mrf.mxu0
      %v1541 = vadd.f32 %v1188, %v1540
      %v1542 = vpop.f32.mrf.mxu0
      %v1543 = vadd.f32 %v1190, %v1542
      %1544 = vmatmul.bf16.gmra.mxu0 %v888
      %v1545 = vpop.f32.mrf.mxu0
      %v1546 = vadd.f32 %v1193, %v1545
      %v1547 = vpop.f32.mrf.mxu0
      %v1548 = vadd.f32 %v1195, %v1547
      %1549 = vmatmul.bf16.gmra.mxu0 %v891
      %v1550 = vpop.f32.mrf.mxu0
      %v1551 = vadd.f32 %v1198, %v1550
      %v1552 = vpop.f32.mrf.mxu0
      %v1553 = vadd.f32 %v1200, %v1552
      %1554 = vmatmul.bf16.gmra.mxu0 %v894
      %v1555 = vpop.f32.mrf.mxu0
      %v1556 = vadd.f32 %v1203, %v1555
      %v1557 = vpop.f32.mrf.mxu0
      %v1558 = vadd.f32 %v1205, %v1557
      %1559 = vmatmul.bf16.gmra.mxu0 %v897
      %v1560 = vpop.f32.mrf.mxu0
      %v1561 = vadd.f32 %v1208, %v1560
      %v1562 = vpop.f32.mrf.mxu0
      %v1563 = vadd.f32 %v1210, %v1562
      %1564 = vmatmul.bf16.gmra.mxu0 %v900
      %v1565 = vpop.f32.mrf.mxu0
      %v1566 = vadd.f32 %v1213, %v1565
      %v1567 = vpop.f32.mrf.mxu0
      %v1568 = vadd.f32 %v1215, %v1567
      %1569 = vmatmul.bf16.gmra.mxu0 %v903
      %v1570 = vpop.f32.mrf.mxu0
      %v1571 = vadd.f32 %v1218, %v1570
      %v1572 = vpop.f32.mrf.mxu0
      %v1573 = vadd.f32 %v1220, %v1572
      %1574 = vmatmul.bf16.gmra.mxu0 %v906
      %v1575 = vpop.f32.mrf.mxu0
      %v1576 = vadd.f32 %v1223, %v1575
      %v1577 = vpop.f32.mrf.mxu0
      %v1578 = vadd.f32 %v1225, %v1577
      %1579 = vmatmul.bf16.gmra.mxu0 %v909
      %v1580 = vpop.f32.mrf.mxu0
      %v1581 = vadd.f32 %v1228, %v1580
      %v1582 = vpop.f32.mrf.mxu0
      %v1583 = vadd.f32 %v1230, %v1582
      %1584 = vmatmul.bf16.gmra.mxu0 %v912
      %v1585 = vpop.f32.mrf.mxu0
      %v1586 = vadd.f32 %v1233, %v1585
      %v1587 = vpop.f32.mrf.mxu0
      %v1588 = vadd.f32 %v1235, %v1587
      %1589 = vmatmul.bf16.gmra.mxu0 %v915
      %v1590 = vpop.f32.mrf.mxu0
      %v1591 = vadd.f32 %v1238, %v1590
      %v1592 = vpop.f32.mrf.mxu0
      %v1593 = vadd.f32 %v1240, %v1592
      %1594 = vmatmul.bf16.gmra.mxu0 %v918
      %v1595 = vpop.f32.mrf.mxu0
      %v1596 = vadd.f32 %v1243, %v1595
      %v1597 = vpop.f32.mrf.mxu0
      %v1598 = vadd.f32 %v1245, %v1597
      %1599 = vmatmul.bf16.gmra.mxu0 %v921
      %v1600 = vpop.f32.mrf.mxu0
      %v1601 = vadd.f32 %v1248, %v1600
      %v1602 = vpop.f32.mrf.mxu0
      %v1603 = vadd.f32 %v1250, %v1602
      %1604 = vmatmul.bf16.gmra.mxu0 %v924
      %v1605 = vpop.f32.mrf.mxu0
      %v1606 = vadd.f32 %v1253, %v1605
      %v1607 = vpop.f32.mrf.mxu0
      %v1608 = vadd.f32 %v1255, %v1607
      %1609 = vmatmul.bf16.gmra.mxu0 %v927
      %v1610 = vpop.f32.mrf.mxu0
      %v1611 = vadd.f32 %v1258, %v1610
      %v1612 = vpop.f32.mrf.mxu0
      %v1613 = vadd.f32 %v1260, %v1612
      %1614 = vmatmul.bf16.gmra.mxu0 %v930
      %v1615 = vpop.f32.mrf.mxu0
      %v1616 = vadd.f32 %v1263, %v1615
      %v1617 = vpop.f32.mrf.mxu0
      %v1618 = vadd.f32 %v1265, %v1617
      %1619 = vmatmul.bf16.gmra.mxu0 %v933
      %v1620 = vpop.f32.mrf.mxu0
      %v1621 = vadd.f32 %v1268, %v1620
      %v1622 = vpop.f32.mrf.mxu0
      %v1623 = vadd.f32 %v1270, %v1622
      %1624 = vmatmul.bf16.gmra.mxu0 %v936
      %v1625 = vpop.f32.mrf.mxu0
      %v1626 = vadd.f32 %v1273, %v1625
      %v1627 = vpop.f32.mrf.mxu0
      %v1628 = vadd.f32 %v1275, %v1627
      %1629 = vdwg.mxu0
      %v1634 = vunpack.c.l.b16 %v417
      %v1635 = vunpack.c.l.b16 %v418
      %v1636 = vunpack.c.l.b16 %v419
      %v1637 = vunpack.c.l.b16 %v420
      %v1638 = vpack.c.b16 %v1635, %v1634
      %v1639 = vpack.c.b16 %v1637, %v1636
      %s1640 = scalar_lea.vmem %s2, 16
      %v1641 = vld [vmem:[%s1640] sm:$0xf]
      %v1642 = vld [vmem:[%s1640 + $0x4] sm:$0x3]
      %v1645 = vunpack.c.l.b16 %v1641
      %v1646 = vunpack.c.l.b16 %v1642
      %v1647 = vpack.c.b16 %v1646, %v1645
      %v1649 = vsel %vm751, %v1638, 0
      %v1652 = vsel %vm751, %v1639, 0
      %v1655 = vsel %vm944, %v1647, 0
      %1657 = vmatpush.bf16.msra.mxu0 0
      %1658 = vmatpush.bf16.msra.mxu0 0
      %1659 = vmatpush.bf16.msra.mxu0 0
      %1660 = vmatpush.bf16.msra.mxu0 0
      %1661 = vmatpush.bf16.msra.mxu0 0
      %1662 = vmatpush.bf16.msra.mxu0 0
      %1663 = vmatpush.bf16.msra.mxu0 0
      %1664 = vmatpush.bf16.msra.mxu0 %v1655
      %1665 = vmatmul.bf16.gmra.mxu0 %v759
      %v1666 = vpop.f32.mrf.mxu0
      %v1667 = vadd.f32 0.0, %v1666
      %v1668 = vpop.f32.mrf.mxu0
      %v1669 = vadd.f32 0.0, %v1668
      %1670 = vmatmul.bf16.gmra.mxu0 %v762
      %v1671 = vpop.f32.mrf.mxu0
      %v1672 = vadd.f32 0.0, %v1671
      %v1673 = vpop.f32.mrf.mxu0
      %v1674 = vadd.f32 0.0, %v1673
      %1675 = vmatmul.bf16.gmra.mxu0 %v765
      %v1676 = vpop.f32.mrf.mxu0
      %v1677 = vadd.f32 0.0, %v1676
      %v1678 = vpop.f32.mrf.mxu0
      %v1679 = vadd.f32 0.0, %v1678
      %1680 = vmatmul.bf16.gmra.mxu0 %v768
      %v1681 = vpop.f32.mrf.mxu0
      %v1682 = vadd.f32 0.0, %v1681
      %v1683 = vpop.f32.mrf.mxu0
      %v1684 = vadd.f32 0.0, %v1683
      %1685 = vmatmul.bf16.gmra.mxu0 %v771
      %v1686 = vpop.f32.mrf.mxu0
      %v1687 = vadd.f32 0.0, %v1686
      %v1688 = vpop.f32.mrf.mxu0
      %v1689 = vadd.f32 0.0, %v1688
      %1690 = vmatmul.bf16.gmra.mxu0 %v774
      %v1691 = vpop.f32.mrf.mxu0
      %v1692 = vadd.f32 0.0, %v1691
      %v1693 = vpop.f32.mrf.mxu0
      %v1694 = vadd.f32 0.0, %v1693
      %1695 = vmatmul.bf16.gmra.mxu0 %v777
      %v1696 = vpop.f32.mrf.mxu0
      %v1697 = vadd.f32 0.0, %v1696
      %v1698 = vpop.f32.mrf.mxu0
      %v1699 = vadd.f32 0.0, %v1698
      %1700 = vmatmul.bf16.gmra.mxu0 %v780
      %v1701 = vpop.f32.mrf.mxu0
      %v1702 = vadd.f32 0.0, %v1701
      %v1703 = vpop.f32.mrf.mxu0
      %v1704 = vadd.f32 0.0, %v1703
      %1705 = vmatmul.bf16.gmra.mxu0 %v783
      %v1706 = vpop.f32.mrf.mxu0
      %v1707 = vadd.f32 0.0, %v1706
      %v1708 = vpop.f32.mrf.mxu0
      %v1709 = vadd.f32 0.0, %v1708
      %1710 = vmatmul.bf16.gmra.mxu0 %v786
      %v1711 = vpop.f32.mrf.mxu0
      %v1712 = vadd.f32 0.0, %v1711
      %v1713 = vpop.f32.mrf.mxu0
      %v1714 = vadd.f32 0.0, %v1713
      %1715 = vmatmul.bf16.gmra.mxu0 %v789
      %v1716 = vpop.f32.mrf.mxu0
      %v1717 = vadd.f32 0.0, %v1716
      %v1718 = vpop.f32.mrf.mxu0
      %v1719 = vadd.f32 0.0, %v1718
      %1720 = vmatmul.bf16.gmra.mxu0 %v792
      %v1721 = vpop.f32.mrf.mxu0
      %v1722 = vadd.f32 0.0, %v1721
      %v1723 = vpop.f32.mrf.mxu0
      %v1724 = vadd.f32 0.0, %v1723
      %1725 = vmatmul.bf16.gmra.mxu0 %v795
      %v1726 = vpop.f32.mrf.mxu0
      %v1727 = vadd.f32 0.0, %v1726
      %v1728 = vpop.f32.mrf.mxu0
      %v1729 = vadd.f32 0.0, %v1728
      %1730 = vmatmul.bf16.gmra.mxu0 %v798
      %v1731 = vpop.f32.mrf.mxu0
      %v1732 = vadd.f32 0.0, %v1731
      %v1733 = vpop.f32.mrf.mxu0
      %v1734 = vadd.f32 0.0, %v1733
      %1735 = vmatmul.bf16.gmra.mxu0 %v801
      %v1736 = vpop.f32.mrf.mxu0
      %v1737 = vadd.f32 0.0, %v1736
      %v1738 = vpop.f32.mrf.mxu0
      %v1739 = vadd.f32 0.0, %v1738
      %1740 = vmatmul.bf16.gmra.mxu0 %v804
      %v1741 = vpop.f32.mrf.mxu0
      %v1742 = vadd.f32 0.0, %v1741
      %v1743 = vpop.f32.mrf.mxu0
      %v1744 = vadd.f32 0.0, %v1743
      %1745 = vmatmul.bf16.gmra.mxu0 %v807
      %v1746 = vpop.f32.mrf.mxu0
      %v1747 = vadd.f32 0.0, %v1746
      %v1748 = vpop.f32.mrf.mxu0
      %v1749 = vadd.f32 0.0, %v1748
      %1750 = vmatmul.bf16.gmra.mxu0 %v810
      %v1751 = vpop.f32.mrf.mxu0
      %v1752 = vadd.f32 0.0, %v1751
      %v1753 = vpop.f32.mrf.mxu0
      %v1754 = vadd.f32 0.0, %v1753
      %1755 = vmatmul.bf16.gmra.mxu0 %v813
      %v1756 = vpop.f32.mrf.mxu0
      %v1757 = vadd.f32 0.0, %v1756
      %v1758 = vpop.f32.mrf.mxu0
      %v1759 = vadd.f32 0.0, %v1758
      %1760 = vmatmul.bf16.gmra.mxu0 %v816
      %v1761 = vpop.f32.mrf.mxu0
      %v1762 = vadd.f32 0.0, %v1761
      %v1763 = vpop.f32.mrf.mxu0
      %v1764 = vadd.f32 0.0, %v1763
      %1765 = vmatmul.bf16.gmra.mxu0 %v819
      %v1766 = vpop.f32.mrf.mxu0
      %v1767 = vadd.f32 0.0, %v1766
      %v1768 = vpop.f32.mrf.mxu0
      %v1769 = vadd.f32 0.0, %v1768
      %1770 = vmatmul.bf16.gmra.mxu0 %v822
      %v1771 = vpop.f32.mrf.mxu0
      %v1772 = vadd.f32 0.0, %v1771
      %v1773 = vpop.f32.mrf.mxu0
      %v1774 = vadd.f32 0.0, %v1773
      %1775 = vmatmul.bf16.gmra.mxu0 %v825
      %v1776 = vpop.f32.mrf.mxu0
      %v1777 = vadd.f32 0.0, %v1776
      %v1778 = vpop.f32.mrf.mxu0
      %v1779 = vadd.f32 0.0, %v1778
      %1780 = vmatmul.bf16.gmra.mxu0 %v828
      %v1781 = vpop.f32.mrf.mxu0
      %v1782 = vadd.f32 0.0, %v1781
      %v1783 = vpop.f32.mrf.mxu0
      %v1784 = vadd.f32 0.0, %v1783
      %1785 = vmatmul.bf16.gmra.mxu0 %v831
      %v1786 = vpop.f32.mrf.mxu0
      %v1787 = vadd.f32 0.0, %v1786
      %v1788 = vpop.f32.mrf.mxu0
      %v1789 = vadd.f32 0.0, %v1788
      %1790 = vmatmul.bf16.gmra.mxu0 %v834
      %v1791 = vpop.f32.mrf.mxu0
      %v1792 = vadd.f32 0.0, %v1791
      %v1793 = vpop.f32.mrf.mxu0
      %v1794 = vadd.f32 0.0, %v1793
      %1795 = vmatmul.bf16.gmra.mxu0 %v837
      %v1796 = vpop.f32.mrf.mxu0
      %v1797 = vadd.f32 0.0, %v1796
      %v1798 = vpop.f32.mrf.mxu0
      %v1799 = vadd.f32 0.0, %v1798
      %1800 = vmatmul.bf16.gmra.mxu0 %v840
      %v1801 = vpop.f32.mrf.mxu0
      %v1802 = vadd.f32 0.0, %v1801
      %v1803 = vpop.f32.mrf.mxu0
      %v1804 = vadd.f32 0.0, %v1803
      %1805 = vmatmul.bf16.gmra.mxu0 %v843
      %v1806 = vpop.f32.mrf.mxu0
      %v1807 = vadd.f32 0.0, %v1806
      %v1808 = vpop.f32.mrf.mxu0
      %v1809 = vadd.f32 0.0, %v1808
      %1810 = vmatmul.bf16.gmra.mxu0 %v846
      %v1811 = vpop.f32.mrf.mxu0
      %v1812 = vadd.f32 0.0, %v1811
      %v1813 = vpop.f32.mrf.mxu0
      %v1814 = vadd.f32 0.0, %v1813
      %1815 = vmatmul.bf16.gmra.mxu0 %v849
      %v1816 = vpop.f32.mrf.mxu0
      %v1817 = vadd.f32 0.0, %v1816
      %v1818 = vpop.f32.mrf.mxu0
      %v1819 = vadd.f32 0.0, %v1818
      %1820 = vmatmul.bf16.gmra.mxu0 %v852
      %v1821 = vpop.f32.mrf.mxu0
      %v1822 = vadd.f32 0.0, %v1821
      %v1823 = vpop.f32.mrf.mxu0
      %v1824 = vadd.f32 0.0, %v1823
      %1825 = vmatmul.bf16.gmra.mxu0 %v855
      %v1826 = vpop.f32.mrf.mxu0
      %v1827 = vadd.f32 0.0, %v1826
      %v1828 = vpop.f32.mrf.mxu0
      %v1829 = vadd.f32 0.0, %v1828
      %1830 = vmatmul.bf16.gmra.mxu0 %v858
      %v1831 = vpop.f32.mrf.mxu0
      %v1832 = vadd.f32 0.0, %v1831
      %v1833 = vpop.f32.mrf.mxu0
      %v1834 = vadd.f32 0.0, %v1833
      %1835 = vmatmul.bf16.gmra.mxu0 %v861
      %v1836 = vpop.f32.mrf.mxu0
      %v1837 = vadd.f32 0.0, %v1836
      %v1838 = vpop.f32.mrf.mxu0
      %v1839 = vadd.f32 0.0, %v1838
      %1840 = vmatmul.bf16.gmra.mxu0 %v864
      %v1841 = vpop.f32.mrf.mxu0
      %v1842 = vadd.f32 0.0, %v1841
      %v1843 = vpop.f32.mrf.mxu0
      %v1844 = vadd.f32 0.0, %v1843
      %1845 = vmatmul.bf16.gmra.mxu0 %v867
      %v1846 = vpop.f32.mrf.mxu0
      %v1847 = vadd.f32 0.0, %v1846
      %v1848 = vpop.f32.mrf.mxu0
      %v1849 = vadd.f32 0.0, %v1848
      %1850 = vmatmul.bf16.gmra.mxu0 %v870
      %v1851 = vpop.f32.mrf.mxu0
      %v1852 = vadd.f32 0.0, %v1851
      %v1853 = vpop.f32.mrf.mxu0
      %v1854 = vadd.f32 0.0, %v1853
      %1855 = vmatmul.bf16.gmra.mxu0 %v873
      %v1856 = vpop.f32.mrf.mxu0
      %v1857 = vadd.f32 0.0, %v1856
      %v1858 = vpop.f32.mrf.mxu0
      %v1859 = vadd.f32 0.0, %v1858
      %1860 = vmatmul.bf16.gmra.mxu0 %v876
      %v1861 = vpop.f32.mrf.mxu0
      %v1862 = vadd.f32 0.0, %v1861
      %v1863 = vpop.f32.mrf.mxu0
      %v1864 = vadd.f32 0.0, %v1863
      %1865 = vmatmul.bf16.gmra.mxu0 %v879
      %v1866 = vpop.f32.mrf.mxu0
      %v1867 = vadd.f32 0.0, %v1866
      %v1868 = vpop.f32.mrf.mxu0
      %v1869 = vadd.f32 0.0, %v1868
      %1870 = vmatmul.bf16.gmra.mxu0 %v882
      %v1871 = vpop.f32.mrf.mxu0
      %v1872 = vadd.f32 0.0, %v1871
      %v1873 = vpop.f32.mrf.mxu0
      %v1874 = vadd.f32 0.0, %v1873
      %1875 = vmatmul.bf16.gmra.mxu0 %v885
      %v1876 = vpop.f32.mrf.mxu0
      %v1877 = vadd.f32 0.0, %v1876
      %v1878 = vpop.f32.mrf.mxu0
      %v1879 = vadd.f32 0.0, %v1878
      %1880 = vmatmul.bf16.gmra.mxu0 %v888
      %v1881 = vpop.f32.mrf.mxu0
      %v1882 = vadd.f32 0.0, %v1881
      %v1883 = vpop.f32.mrf.mxu0
      %v1884 = vadd.f32 0.0, %v1883
      %1885 = vmatmul.bf16.gmra.mxu0 %v891
      %v1886 = vpop.f32.mrf.mxu0
      %v1887 = vadd.f32 0.0, %v1886
      %v1888 = vpop.f32.mrf.mxu0
      %v1889 = vadd.f32 0.0, %v1888
      %1890 = vmatmul.bf16.gmra.mxu0 %v894
      %v1891 = vpop.f32.mrf.mxu0
      %v1892 = vadd.f32 0.0, %v1891
      %v1893 = vpop.f32.mrf.mxu0
      %v1894 = vadd.f32 0.0, %v1893
      %1895 = vmatmul.bf16.gmra.mxu0 %v897
      %v1896 = vpop.f32.mrf.mxu0
      %v1897 = vadd.f32 0.0, %v1896
      %v1898 = vpop.f32.mrf.mxu0
      %v1899 = vadd.f32 0.0, %v1898
      %1900 = vmatmul.bf16.gmra.mxu0 %v900
      %v1901 = vpop.f32.mrf.mxu0
      %v1902 = vadd.f32 0.0, %v1901
      %v1903 = vpop.f32.mrf.mxu0
      %v1904 = vadd.f32 0.0, %v1903
      %1905 = vmatmul.bf16.gmra.mxu0 %v903
      %v1906 = vpop.f32.mrf.mxu0
      %v1907 = vadd.f32 0.0, %v1906
      %v1908 = vpop.f32.mrf.mxu0
      %v1909 = vadd.f32 0.0, %v1908
      %1910 = vmatmul.bf16.gmra.mxu0 %v906
      %v1911 = vpop.f32.mrf.mxu0
      %v1912 = vadd.f32 0.0, %v1911
      %v1913 = vpop.f32.mrf.mxu0
      %v1914 = vadd.f32 0.0, %v1913
      %1915 = vmatmul.bf16.gmra.mxu0 %v909
      %v1916 = vpop.f32.mrf.mxu0
      %v1917 = vadd.f32 0.0, %v1916
      %v1918 = vpop.f32.mrf.mxu0
      %v1919 = vadd.f32 0.0, %v1918
      %1920 = vmatmul.bf16.gmra.mxu0 %v912
      %v1921 = vpop.f32.mrf.mxu0
      %v1922 = vadd.f32 0.0, %v1921
      %v1923 = vpop.f32.mrf.mxu0
      %v1924 = vadd.f32 0.0, %v1923
      %1925 = vmatmul.bf16.gmra.mxu0 %v915
      %v1926 = vpop.f32.mrf.mxu0
      %v1927 = vadd.f32 0.0, %v1926
      %v1928 = vpop.f32.mrf.mxu0
      %v1929 = vadd.f32 0.0, %v1928
      %1930 = vmatmul.bf16.gmra.mxu0 %v918
      %v1931 = vpop.f32.mrf.mxu0
      %v1932 = vadd.f32 0.0, %v1931
      %v1933 = vpop.f32.mrf.mxu0
      %v1934 = vadd.f32 0.0, %v1933
      %1935 = vmatmul.bf16.gmra.mxu0 %v921
      %v1936 = vpop.f32.mrf.mxu0
      %v1937 = vadd.f32 0.0, %v1936
      %v1938 = vpop.f32.mrf.mxu0
      %v1939 = vadd.f32 0.0, %v1938
      %1940 = vmatmul.bf16.gmra.mxu0 %v924
      %v1941 = vpop.f32.mrf.mxu0
      %v1942 = vadd.f32 0.0, %v1941
      %v1943 = vpop.f32.mrf.mxu0
      %v1944 = vadd.f32 0.0, %v1943
      %1945 = vmatmul.bf16.gmra.mxu0 %v927
      %v1946 = vpop.f32.mrf.mxu0
      %v1947 = vadd.f32 0.0, %v1946
      %v1948 = vpop.f32.mrf.mxu0
      %v1949 = vadd.f32 0.0, %v1948
      %1950 = vmatmul.bf16.gmra.mxu0 %v930
      %v1951 = vpop.f32.mrf.mxu0
      %v1952 = vadd.f32 0.0, %v1951
      %v1953 = vpop.f32.mrf.mxu0
      %v1954 = vadd.f32 0.0, %v1953
      %1955 = vmatmul.bf16.gmra.mxu0 %v933
      %v1956 = vpop.f32.mrf.mxu0
      %v1957 = vadd.f32 0.0, %v1956
      %v1958 = vpop.f32.mrf.mxu0
      %v1959 = vadd.f32 0.0, %v1958
      %1960 = vmatmul.bf16.gmra.mxu0 %v936
      %v1961 = vpop.f32.mrf.mxu0
      %v1962 = vadd.f32 0.0, %v1961
      %v1963 = vpop.f32.mrf.mxu0
      %v1964 = vadd.f32 0.0, %v1963
      %1965 = vmatmul.bf16.gmra.mxu0 %v939
      %v1966 = vpop.f32.mrf.mxu0
      %v1967 = vadd.f32 0.0, %v1966
      %v1968 = vpop.f32.mrf.mxu0
      %v1969 = vadd.f32 0.0, %v1968
      %1970 = vmatmul.bf16.gmra.mxu0 %v942
      %v1971 = vpop.f32.mrf.mxu0
      %v1972 = vadd.f32 0.0, %v1971
      %v1973 = vpop.f32.mrf.mxu0
      %v1974 = vadd.f32 0.0, %v1973
      %1975 = vmatmul.bf16.gmra.mxu0 %v1649
      %v1976 = vpop.f32.mrf.mxu0
      %v1977 = vadd.f32 0.0, %v1976
      %v1978 = vpop.f32.mrf.mxu0
      %v1979 = vadd.f32 0.0, %v1978
      %1980 = vmatmul.bf16.gmra.mxu0 %v1652
      %v1981 = vpop.f32.mrf.mxu0
      %v1982 = vadd.f32 0.0, %v1981
      %v1983 = vpop.f32.mrf.mxu0
      %v1984 = vadd.f32 0.0, %v1983
      %1985 = vdwg.mxu0
      %v1986 = vadd.f32 %v1311, %v1667
      %v1987 = vadd.f32 %v1313, %v1669
      %v1988 = vadd.f32 %v1316, %v1672
      %v1989 = vadd.f32 %v1318, %v1674
      %v1990 = vadd.f32 %v1321, %v1677
      %v1991 = vadd.f32 %v1323, %v1679
      %v1992 = vadd.f32 %v1326, %v1682
      %v1993 = vadd.f32 %v1328, %v1684
      %v1994 = vadd.f32 %v1331, %v1687
      %v1995 = vadd.f32 %v1333, %v1689
      %v1996 = vadd.f32 %v1336, %v1692
      %v1997 = vadd.f32 %v1338, %v1694
      %v1998 = vadd.f32 %v1341, %v1697
      %v1999 = vadd.f32 %v1343, %v1699
      %v2000 = vadd.f32 %v1346, %v1702
      %v2001 = vadd.f32 %v1348, %v1704
      %v2002 = vadd.f32 %v1351, %v1707
      %v2003 = vadd.f32 %v1353, %v1709
      %v2004 = vadd.f32 %v1356, %v1712
      %v2005 = vadd.f32 %v1358, %v1714
      %v2006 = vadd.f32 %v1361, %v1717
      %v2007 = vadd.f32 %v1363, %v1719
      %v2008 = vadd.f32 %v1366, %v1722
      %v2009 = vadd.f32 %v1368, %v1724
      %v2010 = vadd.f32 %v1371, %v1727
      %v2011 = vadd.f32 %v1373, %v1729
      %v2012 = vadd.f32 %v1376, %v1732
      %v2013 = vadd.f32 %v1378, %v1734
      %v2014 = vadd.f32 %v1381, %v1737
      %v2015 = vadd.f32 %v1383, %v1739
      %v2016 = vadd.f32 %v1386, %v1742
      %v2017 = vadd.f32 %v1388, %v1744
      %v2018 = vadd.f32 %v1391, %v1747
      %v2019 = vadd.f32 %v1393, %v1749
      %v2020 = vadd.f32 %v1396, %v1752
      %v2021 = vadd.f32 %v1398, %v1754
      %v2022 = vadd.f32 %v1401, %v1757
      %v2023 = vadd.f32 %v1403, %v1759
      %v2024 = vadd.f32 %v1406, %v1762
      %v2025 = vadd.f32 %v1408, %v1764
      %v2026 = vadd.f32 %v1411, %v1767
      %v2027 = vadd.f32 %v1413, %v1769
      %v2028 = vadd.f32 %v1416, %v1772
      %v2029 = vadd.f32 %v1418, %v1774
      %v2030 = vadd.f32 %v1421, %v1777
      %v2031 = vadd.f32 %v1423, %v1779
      %v2032 = vadd.f32 %v1426, %v1782
      %v2033 = vadd.f32 %v1428, %v1784
      %v2034 = vadd.f32 %v1431, %v1787
      %v2035 = vadd.f32 %v1433, %v1789
      %v2036 = vadd.f32 %v1436, %v1792
      %v2037 = vadd.f32 %v1438, %v1794
      %v2038 = vadd.f32 %v1441, %v1797
      %v2039 = vadd.f32 %v1443, %v1799
      %v2040 = vadd.f32 %v1446, %v1802
      %v2041 = vadd.f32 %v1448, %v1804
      %v2042 = vadd.f32 %v1451, %v1807
      %v2043 = vadd.f32 %v1453, %v1809
      %v2044 = vadd.f32 %v1456, %v1812
      %v2045 = vadd.f32 %v1458, %v1814
      %v2046 = vadd.f32 %v1461, %v1817
      %v2047 = vadd.f32 %v1463, %v1819
      %v2048 = vadd.f32 %v1466, %v1822
      %v2049 = vadd.f32 %v1468, %v1824
      %v2050 = vadd.f32 %v1471, %v1827
      %v2051 = vadd.f32 %v1473, %v1829
      %v2052 = vadd.f32 %v1476, %v1832
      %v2053 = vadd.f32 %v1478, %v1834
      %v2054 = vadd.f32 %v1481, %v1837
      %v2055 = vadd.f32 %v1483, %v1839
      %v2056 = vadd.f32 %v1486, %v1842
      %v2057 = vadd.f32 %v1488, %v1844
      %v2058 = vadd.f32 %v1491, %v1847
      %v2059 = vadd.f32 %v1493, %v1849
      %v2060 = vadd.f32 %v1496, %v1852
      %v2061 = vadd.f32 %v1498, %v1854
      %v2062 = vadd.f32 %v1501, %v1857
      %v2063 = vadd.f32 %v1503, %v1859
      %v2064 = vadd.f32 %v1506, %v1862
      %v2065 = vadd.f32 %v1508, %v1864
      %v2066 = vadd.f32 %v1511, %v1867
      %v2067 = vadd.f32 %v1513, %v1869
      %v2068 = vadd.f32 %v1516, %v1872
      %v2069 = vadd.f32 %v1518, %v1874
      %v2070 = vadd.f32 %v1521, %v1877
      %v2071 = vadd.f32 %v1523, %v1879
      %v2072 = vadd.f32 %v1526, %v1882
      %v2073 = vadd.f32 %v1528, %v1884
      %v2074 = vadd.f32 %v1531, %v1887
      %v2075 = vadd.f32 %v1533, %v1889
      %v2076 = vadd.f32 %v1536, %v1892
      %v2077 = vadd.f32 %v1538, %v1894
      %v2078 = vadd.f32 %v1541, %v1897
      %v2079 = vadd.f32 %v1543, %v1899
      %v2080 = vadd.f32 %v1546, %v1902
      %v2081 = vadd.f32 %v1548, %v1904
      %v2082 = vadd.f32 %v1551, %v1907
      %v2083 = vadd.f32 %v1553, %v1909
      %v2084 = vadd.f32 %v1556, %v1912
      %v2085 = vadd.f32 %v1558, %v1914
      %v2086 = vadd.f32 %v1561, %v1917
      %v2087 = vadd.f32 %v1563, %v1919
      %v2088 = vadd.f32 %v1566, %v1922
      %v2089 = vadd.f32 %v1568, %v1924
      %v2090 = vadd.f32 %v1571, %v1927
      %v2091 = vadd.f32 %v1573, %v1929
      %v2092 = vadd.f32 %v1576, %v1932
      %v2093 = vadd.f32 %v1578, %v1934
      %v2094 = vadd.f32 %v1581, %v1937
      %v2095 = vadd.f32 %v1583, %v1939
      %v2096 = vadd.f32 %v1586, %v1942
      %v2097 = vadd.f32 %v1588, %v1944
      %v2098 = vadd.f32 %v1591, %v1947
      %v2099 = vadd.f32 %v1593, %v1949
      %v2100 = vadd.f32 %v1596, %v1952
      %v2101 = vadd.f32 %v1598, %v1954
      %v2102 = vadd.f32 %v1601, %v1957
      %v2103 = vadd.f32 %v1603, %v1959
      %v2104 = vadd.f32 %v1606, %v1962
      %v2105 = vadd.f32 %v1608, %v1964
      %v2106 = vadd.f32 %v1611, %v1967
      %v2107 = vadd.f32 %v1613, %v1969
      %v2108 = vadd.f32 %v1616, %v1972
      %v2109 = vadd.f32 %v1618, %v1974
      %v2110 = vadd.f32 %v1621, %v1977
      %v2111 = vadd.f32 %v1623, %v1979
      %v2112 = vadd.f32 %v1626, %v1982
      %v2113 = vadd.f32 %v1628, %v1984
      %v2114 = vld [vmem:[%s3] sm:$0x1]
      %v2116 = vperm.slane %v2114, 0
      %v2118 = vmul.f32 %v1986, %v2116
      %v2119 = vmul.f32 %v1987, %v2116
      %v2120 = vmul.f32 %v1988, %v2116
      %v2121 = vmul.f32 %v1989, %v2116
      %v2122 = vmul.f32 %v1990, %v2116
      %v2123 = vmul.f32 %v1991, %v2116
      %v2124 = vmul.f32 %v1992, %v2116
      %v2125 = vmul.f32 %v1993, %v2116
      %v2126 = vmul.f32 %v1994, %v2116
      %v2127 = vmul.f32 %v1995, %v2116
      %v2128 = vmul.f32 %v1996, %v2116
      %v2129 = vmul.f32 %v1997, %v2116
      %v2130 = vmul.f32 %v1998, %v2116
      %v2131 = vmul.f32 %v1999, %v2116
      %v2132 = vmul.f32 %v2000, %v2116
      %v2133 = vmul.f32 %v2001, %v2116
      %v2134 = vmul.f32 %v2002, %v2116
      %v2135 = vmul.f32 %v2003, %v2116
      %v2136 = vmul.f32 %v2004, %v2116
      %v2137 = vmul.f32 %v2005, %v2116
      %v2138 = vmul.f32 %v2006, %v2116
      %v2139 = vmul.f32 %v2007, %v2116
      %v2140 = vmul.f32 %v2008, %v2116
      %v2141 = vmul.f32 %v2009, %v2116
      %v2142 = vmul.f32 %v2010, %v2116
      %v2143 = vmul.f32 %v2011, %v2116
      %v2144 = vmul.f32 %v2012, %v2116
      %v2145 = vmul.f32 %v2013, %v2116
      %v2146 = vmul.f32 %v2014, %v2116
      %v2147 = vmul.f32 %v2015, %v2116
      %v2148 = vmul.f32 %v2016, %v2116
      %v2149 = vmul.f32 %v2017, %v2116
      %v2150 = vmul.f32 %v2018, %v2116
      %v2151 = vmul.f32 %v2019, %v2116
      %v2152 = vmul.f32 %v2020, %v2116
      %v2153 = vmul.f32 %v2021, %v2116
      %v2154 = vmul.f32 %v2022, %v2116
      %v2155 = vmul.f32 %v2023, %v2116
      %v2156 = vmul.f32 %v2024, %v2116
      %v2157 = vmul.f32 %v2025, %v2116
      %v2158 = vmul.f32 %v2026, %v2116
      %v2159 = vmul.f32 %v2027, %v2116
      %v2160 = vmul.f32 %v2028, %v2116
      %v2161 = vmul.f32 %v2029, %v2116
      %v2162 = vmul.f32 %v2030, %v2116
      %v2163 = vmul.f32 %v2031, %v2116
      %v2164 = vmul.f32 %v2032, %v2116
      %v2165 = vmul.f32 %v2033, %v2116
      %v2166 = vmul.f32 %v2034, %v2116
      %v2167 = vmul.f32 %v2035, %v2116
      %v2168 = vmul.f32 %v2036, %v2116
      %v2169 = vmul.f32 %v2037, %v2116
      %v2170 = vmul.f32 %v2038, %v2116
      %v2171 = vmul.f32 %v2039, %v2116
      %v2172 = vmul.f32 %v2040, %v2116
      %v2173 = vmul.f32 %v2041, %v2116
      %v2174 = vmul.f32 %v2042, %v2116
      %v2175 = vmul.f32 %v2043, %v2116
      %v2176 = vmul.f32 %v2044, %v2116
      %v2177 = vmul.f32 %v2045, %v2116
      %v2178 = vmul.f32 %v2046, %v2116
      %v2179 = vmul.f32 %v2047, %v2116
      %v2180 = vmul.f32 %v2048, %v2116
      %v2181 = vmul.f32 %v2049, %v2116
      %v2182 = vmul.f32 %v2050, %v2116
      %v2183 = vmul.f32 %v2051, %v2116
      %v2184 = vmul.f32 %v2052, %v2116
      %v2185 = vmul.f32 %v2053, %v2116
      %v2186 = vmul.f32 %v2054, %v2116
      %v2187 = vmul.f32 %v2055, %v2116
      %v2188 = vmul.f32 %v2056, %v2116
      %v2189 = vmul.f32 %v2057, %v2116
      %v2190 = vmul.f32 %v2058, %v2116
      %v2191 = vmul.f32 %v2059, %v2116
      %v2192 = vmul.f32 %v2060, %v2116
      %v2193 = vmul.f32 %v2061, %v2116
      %v2194 = vmul.f32 %v2062, %v2116
      %v2195 = vmul.f32 %v2063, %v2116
      %v2196 = vmul.f32 %v2064, %v2116
      %v2197 = vmul.f32 %v2065, %v2116
      %v2198 = vmul.f32 %v2066, %v2116
      %v2199 = vmul.f32 %v2067, %v2116
      %v2200 = vmul.f32 %v2068, %v2116
      %v2201 = vmul.f32 %v2069, %v2116
      %v2202 = vmul.f32 %v2070, %v2116
      %v2203 = vmul.f32 %v2071, %v2116
      %v2204 = vmul.f32 %v2072, %v2116
      %v2205 = vmul.f32 %v2073, %v2116
      %v2206 = vmul.f32 %v2074, %v2116
      %v2207 = vmul.f32 %v2075, %v2116
      %v2208 = vmul.f32 %v2076, %v2116
      %v2209 = vmul.f32 %v2077, %v2116
      %v2210 = vmul.f32 %v2078, %v2116
      %v2211 = vmul.f32 %v2079, %v2116
      %v2212 = vmul.f32 %v2080, %v2116
      %v2213 = vmul.f32 %v2081, %v2116
      %v2214 = vmul.f32 %v2082, %v2116
      %v2215 = vmul.f32 %v2083, %v2116
      %v2216 = vmul.f32 %v2084, %v2116
      %v2217 = vmul.f32 %v2085, %v2116
      %v2218 = vmul.f32 %v2086, %v2116
      %v2219 = vmul.f32 %v2087, %v2116
      %v2220 = vmul.f32 %v2088, %v2116
      %v2221 = vmul.f32 %v2089, %v2116
      %v2222 = vmul.f32 %v2090, %v2116
      %v2223 = vmul.f32 %v2091, %v2116
      %v2224 = vmul.f32 %v2092, %v2116
      %v2225 = vmul.f32 %v2093, %v2116
      %v2226 = vmul.f32 %v2094, %v2116
      %v2227 = vmul.f32 %v2095, %v2116
      %v2228 = vmul.f32 %v2096, %v2116
      %v2229 = vmul.f32 %v2097, %v2116
      %v2230 = vmul.f32 %v2098, %v2116
      %v2231 = vmul.f32 %v2099, %v2116
      %v2232 = vmul.f32 %v2100, %v2116
      %v2233 = vmul.f32 %v2101, %v2116
      %v2234 = vmul.f32 %v2102, %v2116
      %v2235 = vmul.f32 %v2103, %v2116
      %v2236 = vmul.f32 %v2104, %v2116
      %v2237 = vmul.f32 %v2105, %v2116
      %v2238 = vmul.f32 %v2106, %v2116
      %v2239 = vmul.f32 %v2107, %v2116
      %v2240 = vmul.f32 %v2108, %v2116
      %v2241 = vmul.f32 %v2109, %v2116
      %v2242 = vmul.f32 %v2110, %v2116
      %v2243 = vmul.f32 %v2111, %v2116
      %v2244 = vmul.f32 %v2112, %v2116
      %v2245 = vmul.f32 %v2113, %v2116
      %v2246 = vld [vmem:[%s4] sm:$0x1]
      %v2248 = vperm.slane %v2246, 0
      %v2250 = vadd.f32 %v2118, %v2248
      %v2251 = vadd.f32 %v2119, %v2248
      %v2252 = vadd.f32 %v2120, %v2248
      %v2253 = vadd.f32 %v2121, %v2248
      %v2254 = vadd.f32 %v2122, %v2248
      %v2255 = vadd.f32 %v2123, %v2248
      %v2256 = vadd.f32 %v2124, %v2248
      %v2257 = vadd.f32 %v2125, %v2248
      %v2258 = vadd.f32 %v2126, %v2248
      %v2259 = vadd.f32 %v2127, %v2248
      %v2260 = vadd.f32 %v2128, %v2248
      %v2261 = vadd.f32 %v2129, %v2248
      %v2262 = vadd.f32 %v2130, %v2248
      %v2263 = vadd.f32 %v2131, %v2248
      %v2264 = vadd.f32 %v2132, %v2248
      %v2265 = vadd.f32 %v2133, %v2248
      %v2266 = vadd.f32 %v2134, %v2248
      %v2267 = vadd.f32 %v2135, %v2248
      %v2268 = vadd.f32 %v2136, %v2248
      %v2269 = vadd.f32 %v2137, %v2248
      %v2270 = vadd.f32 %v2138, %v2248
      %v2271 = vadd.f32 %v2139, %v2248
      %v2272 = vadd.f32 %v2140, %v2248
      %v2273 = vadd.f32 %v2141, %v2248
      %v2274 = vadd.f32 %v2142, %v2248
      %v2275 = vadd.f32 %v2143, %v2248
      %v2276 = vadd.f32 %v2144, %v2248
      %v2277 = vadd.f32 %v2145, %v2248
      %v2278 = vadd.f32 %v2146, %v2248
      %v2279 = vadd.f32 %v2147, %v2248
      %v2280 = vadd.f32 %v2148, %v2248
      %v2281 = vadd.f32 %v2149, %v2248
      %v2282 = vadd.f32 %v2150, %v2248
      %v2283 = vadd.f32 %v2151, %v2248
      %v2284 = vadd.f32 %v2152, %v2248
      %v2285 = vadd.f32 %v2153, %v2248
      %v2286 = vadd.f32 %v2154, %v2248
      %v2287 = vadd.f32 %v2155, %v2248
      %v2288 = vadd.f32 %v2156, %v2248
      %v2289 = vadd.f32 %v2157, %v2248
      %v2290 = vadd.f32 %v2158, %v2248
      %v2291 = vadd.f32 %v2159, %v2248
      %v2292 = vadd.f32 %v2160, %v2248
      %v2293 = vadd.f32 %v2161, %v2248
      %v2294 = vadd.f32 %v2162, %v2248
      %v2295 = vadd.f32 %v2163, %v2248
      %v2296 = vadd.f32 %v2164, %v2248
      %v2297 = vadd.f32 %v2165, %v2248
      %v2298 = vadd.f32 %v2166, %v2248
      %v2299 = vadd.f32 %v2167, %v2248
      %v2300 = vadd.f32 %v2168, %v2248
      %v2301 = vadd.f32 %v2169, %v2248
      %v2302 = vadd.f32 %v2170, %v2248
      %v2303 = vadd.f32 %v2171, %v2248
      %v2304 = vadd.f32 %v2172, %v2248
      %v2305 = vadd.f32 %v2173, %v2248
      %v2306 = vadd.f32 %v2174, %v2248
      %v2307 = vadd.f32 %v2175, %v2248
      %v2308 = vadd.f32 %v2176, %v2248
      %v2309 = vadd.f32 %v2177, %v2248
      %v2310 = vadd.f32 %v2178, %v2248
      %v2311 = vadd.f32 %v2179, %v2248
      %v2312 = vadd.f32 %v2180, %v2248
      %v2313 = vadd.f32 %v2181, %v2248
      %v2314 = vadd.f32 %v2182, %v2248
      %v2315 = vadd.f32 %v2183, %v2248
      %v2316 = vadd.f32 %v2184, %v2248
      %v2317 = vadd.f32 %v2185, %v2248
      %v2318 = vadd.f32 %v2186, %v2248
      %v2319 = vadd.f32 %v2187, %v2248
      %v2320 = vadd.f32 %v2188, %v2248
      %v2321 = vadd.f32 %v2189, %v2248
      %v2322 = vadd.f32 %v2190, %v2248
      %v2323 = vadd.f32 %v2191, %v2248
      %v2324 = vadd.f32 %v2192, %v2248
      %v2325 = vadd.f32 %v2193, %v2248
      %v2326 = vadd.f32 %v2194, %v2248
      %v2327 = vadd.f32 %v2195, %v2248
      %v2328 = vadd.f32 %v2196, %v2248
      %v2329 = vadd.f32 %v2197, %v2248
      %v2330 = vadd.f32 %v2198, %v2248
      %v2331 = vadd.f32 %v2199, %v2248
      %v2332 = vadd.f32 %v2200, %v2248
      %v2333 = vadd.f32 %v2201, %v2248
      %v2334 = vadd.f32 %v2202, %v2248
      %v2335 = vadd.f32 %v2203, %v2248
      %v2336 = vadd.f32 %v2204, %v2248
      %v2337 = vadd.f32 %v2205, %v2248
      %v2338 = vadd.f32 %v2206, %v2248
      %v2339 = vadd.f32 %v2207, %v2248
      %v2340 = vadd.f32 %v2208, %v2248
      %v2341 = vadd.f32 %v2209, %v2248
      %v2342 = vadd.f32 %v2210, %v2248
      %v2343 = vadd.f32 %v2211, %v2248
      %v2344 = vadd.f32 %v2212, %v2248
      %v2345 = vadd.f32 %v2213, %v2248
      %v2346 = vadd.f32 %v2214, %v2248
      %v2347 = vadd.f32 %v2215, %v2248
      %v2348 = vadd.f32 %v2216, %v2248
      %v2349 = vadd.f32 %v2217, %v2248
      %v2350 = vadd.f32 %v2218, %v2248
      %v2351 = vadd.f32 %v2219, %v2248
      %v2352 = vadd.f32 %v2220, %v2248
      %v2353 = vadd.f32 %v2221, %v2248
      %v2354 = vadd.f32 %v2222, %v2248
      %v2355 = vadd.f32 %v2223, %v2248
      %v2356 = vadd.f32 %v2224, %v2248
      %v2357 = vadd.f32 %v2225, %v2248
      %v2358 = vadd.f32 %v2226, %v2248
      %v2359 = vadd.f32 %v2227, %v2248
      %v2360 = vadd.f32 %v2228, %v2248
      %v2361 = vadd.f32 %v2229, %v2248
      %v2362 = vadd.f32 %v2230, %v2248
      %v2363 = vadd.f32 %v2231, %v2248
      %v2364 = vadd.f32 %v2232, %v2248
      %v2365 = vadd.f32 %v2233, %v2248
      %v2366 = vadd.f32 %v2234, %v2248
      %v2367 = vadd.f32 %v2235, %v2248
      %v2368 = vadd.f32 %v2236, %v2248
      %v2369 = vadd.f32 %v2237, %v2248
      %v2370 = vadd.f32 %v2238, %v2248
      %v2371 = vadd.f32 %v2239, %v2248
      %v2372 = vadd.f32 %v2240, %v2248
      %v2373 = vadd.f32 %v2241, %v2248
      %v2374 = vadd.f32 %v2242, %v2248
      %v2375 = vadd.f32 %v2243, %v2248
      %v2376 = vadd.f32 %v2244, %v2248
      %v2377 = vadd.f32 %v2245, %v2248
      %v2378 = vmax.f32 %v2250, 0.0
      %v2379 = vmax.f32 %v2251, 0.0
      %v2380 = vmax.f32 %v2252, 0.0
      %v2381 = vmax.f32 %v2253, 0.0
      %v2382 = vmax.f32 %v2254, 0.0
      %v2383 = vmax.f32 %v2255, 0.0
      %v2384 = vmax.f32 %v2256, 0.0
      %v2385 = vmax.f32 %v2257, 0.0
      %v2386 = vmax.f32 %v2258, 0.0
      %v2387 = vmax.f32 %v2259, 0.0
      %v2388 = vmax.f32 %v2260, 0.0
      %v2389 = vmax.f32 %v2261, 0.0
      %v2390 = vmax.f32 %v2262, 0.0
      %v2391 = vmax.f32 %v2263, 0.0
      %v2392 = vmax.f32 %v2264, 0.0
      %v2393 = vmax.f32 %v2265, 0.0
      %v2394 = vmax.f32 %v2266, 0.0
      %v2395 = vmax.f32 %v2267, 0.0
      %v2396 = vmax.f32 %v2268, 0.0
      %v2397 = vmax.f32 %v2269, 0.0
      %v2398 = vmax.f32 %v2270, 0.0
      %v2399 = vmax.f32 %v2271, 0.0
      %v2400 = vmax.f32 %v2272, 0.0
      %v2401 = vmax.f32 %v2273, 0.0
      %v2402 = vmax.f32 %v2274, 0.0
      %v2403 = vmax.f32 %v2275, 0.0
      %v2404 = vmax.f32 %v2276, 0.0
      %v2405 = vmax.f32 %v2277, 0.0
      %v2406 = vmax.f32 %v2278, 0.0
      %v2407 = vmax.f32 %v2279, 0.0
      %v2408 = vmax.f32 %v2280, 0.0
      %v2409 = vmax.f32 %v2281, 0.0
      %v2410 = vmax.f32 %v2282, 0.0
      %v2411 = vmax.f32 %v2283, 0.0
      %v2412 = vmax.f32 %v2284, 0.0
      %v2413 = vmax.f32 %v2285, 0.0
      %v2414 = vmax.f32 %v2286, 0.0
      %v2415 = vmax.f32 %v2287, 0.0
      %v2416 = vmax.f32 %v2288, 0.0
      %v2417 = vmax.f32 %v2289, 0.0
      %v2418 = vmax.f32 %v2290, 0.0
      %v2419 = vmax.f32 %v2291, 0.0
      %v2420 = vmax.f32 %v2292, 0.0
      %v2421 = vmax.f32 %v2293, 0.0
      %v2422 = vmax.f32 %v2294, 0.0
      %v2423 = vmax.f32 %v2295, 0.0
      %v2424 = vmax.f32 %v2296, 0.0
      %v2425 = vmax.f32 %v2297, 0.0
      %v2426 = vmax.f32 %v2298, 0.0
      %v2427 = vmax.f32 %v2299, 0.0
      %v2428 = vmax.f32 %v2300, 0.0
      %v2429 = vmax.f32 %v2301, 0.0
      %v2430 = vmax.f32 %v2302, 0.0
      %v2431 = vmax.f32 %v2303, 0.0
      %v2432 = vmax.f32 %v2304, 0.0
      %v2433 = vmax.f32 %v2305, 0.0
      %v2434 = vmax.f32 %v2306, 0.0
      %v2435 = vmax.f32 %v2307, 0.0
      %v2436 = vmax.f32 %v2308, 0.0
      %v2437 = vmax.f32 %v2309, 0.0
      %v2438 = vmax.f32 %v2310, 0.0
      %v2439 = vmax.f32 %v2311, 0.0
      %v2440 = vmax.f32 %v2312, 0.0
      %v2441 = vmax.f32 %v2313, 0.0
      %v2442 = vmax.f32 %v2314, 0.0
      %v2443 = vmax.f32 %v2315, 0.0
      %v2444 = vmax.f32 %v2316, 0.0
      %v2445 = vmax.f32 %v2317, 0.0
      %v2446 = vmax.f32 %v2318, 0.0
      %v2447 = vmax.f32 %v2319, 0.0
      %v2448 = vmax.f32 %v2320, 0.0
      %v2449 = vmax.f32 %v2321, 0.0
      %v2450 = vmax.f32 %v2322, 0.0
      %v2451 = vmax.f32 %v2323, 0.0
      %v2452 = vmax.f32 %v2324, 0.0
      %v2453 = vmax.f32 %v2325, 0.0
      %v2454 = vmax.f32 %v2326, 0.0
      %v2455 = vmax.f32 %v2327, 0.0
      %v2456 = vmax.f32 %v2328, 0.0
      %v2457 = vmax.f32 %v2329, 0.0
      %v2458 = vmax.f32 %v2330, 0.0
      %v2459 = vmax.f32 %v2331, 0.0
      %v2460 = vmax.f32 %v2332, 0.0
      %v2461 = vmax.f32 %v2333, 0.0
      %v2462 = vmax.f32 %v2334, 0.0
      %v2463 = vmax.f32 %v2335, 0.0
      %v2464 = vmax.f32 %v2336, 0.0
      %v2465 = vmax.f32 %v2337, 0.0
      %v2466 = vmax.f32 %v2338, 0.0
      %v2467 = vmax.f32 %v2339, 0.0
      %v2468 = vmax.f32 %v2340, 0.0
      %v2469 = vmax.f32 %v2341, 0.0
      %v2470 = vmax.f32 %v2342, 0.0
      %v2471 = vmax.f32 %v2343, 0.0
      %v2472 = vmax.f32 %v2344, 0.0
      %v2473 = vmax.f32 %v2345, 0.0
      %v2474 = vmax.f32 %v2346, 0.0
      %v2475 = vmax.f32 %v2347, 0.0
      %v2476 = vmax.f32 %v2348, 0.0
      %v2477 = vmax.f32 %v2349, 0.0
      %v2478 = vmax.f32 %v2350, 0.0
      %v2479 = vmax.f32 %v2351, 0.0
      %v2480 = vmax.f32 %v2352, 0.0
      %v2481 = vmax.f32 %v2353, 0.0
      %v2482 = vmax.f32 %v2354, 0.0
      %v2483 = vmax.f32 %v2355, 0.0
      %v2484 = vmax.f32 %v2356, 0.0
      %v2485 = vmax.f32 %v2357, 0.0
      %v2486 = vmax.f32 %v2358, 0.0
      %v2487 = vmax.f32 %v2359, 0.0
      %v2488 = vmax.f32 %v2360, 0.0
      %v2489 = vmax.f32 %v2361, 0.0
      %v2490 = vmax.f32 %v2362, 0.0
      %v2491 = vmax.f32 %v2363, 0.0
      %v2492 = vmax.f32 %v2364, 0.0
      %v2493 = vmax.f32 %v2365, 0.0
      %v2494 = vmax.f32 %v2366, 0.0
      %v2495 = vmax.f32 %v2367, 0.0
      %v2496 = vmax.f32 %v2368, 0.0
      %v2497 = vmax.f32 %v2369, 0.0
      %v2498 = vmax.f32 %v2370, 0.0
      %v2499 = vmax.f32 %v2371, 0.0
      %v2500 = vmax.f32 %v2372, 0.0
      %v2501 = vmax.f32 %v2373, 0.0
      %v2502 = vmax.f32 %v2374, 0.0
      %v2503 = vmax.f32 %v2375, 0.0
      %v2504 = vmax.f32 %v2376, 0.0
      %v2505 = vmax.f32 %v2377, 0.0
      %v2506 = vpack.c.bf16 %v2378, %v2378
      %v2507 = vpack.c.bf16 %v2379, %v2379
      %v2508 = vpack.c.bf16 %v2380, %v2380
      %v2509 = vpack.c.bf16 %v2381, %v2381
      %v2510 = vpack.c.bf16 %v2382, %v2382
      %v2511 = vpack.c.bf16 %v2383, %v2383
      %v2512 = vpack.c.bf16 %v2384, %v2384
      %v2513 = vpack.c.bf16 %v2385, %v2385
      %v2514 = vpack.c.bf16 %v2386, %v2386
      %v2515 = vpack.c.bf16 %v2387, %v2387
      %v2516 = vpack.c.bf16 %v2388, %v2388
      %v2517 = vpack.c.bf16 %v2389, %v2389
      %v2518 = vpack.c.bf16 %v2390, %v2390
      %v2519 = vpack.c.bf16 %v2391, %v2391
      %v2520 = vpack.c.bf16 %v2392, %v2392
      %v2521 = vpack.c.bf16 %v2393, %v2393
      %v2522 = vpack.c.bf16 %v2394, %v2394
      %v2523 = vpack.c.bf16 %v2395, %v2395
      %v2524 = vpack.c.bf16 %v2396, %v2396
      %v2525 = vpack.c.bf16 %v2397, %v2397
      %v2526 = vpack.c.bf16 %v2398, %v2398
      %v2527 = vpack.c.bf16 %v2399, %v2399
      %v2528 = vpack.c.bf16 %v2400, %v2400
      %v2529 = vpack.c.bf16 %v2401, %v2401
      %v2530 = vpack.c.bf16 %v2402, %v2402
      %v2531 = vpack.c.bf16 %v2403, %v2403
      %v2532 = vpack.c.bf16 %v2404, %v2404
      %v2533 = vpack.c.bf16 %v2405, %v2405
      %v2534 = vpack.c.bf16 %v2406, %v2406
      %v2535 = vpack.c.bf16 %v2407, %v2407
      %v2536 = vpack.c.bf16 %v2408, %v2408
      %v2537 = vpack.c.bf16 %v2409, %v2409
      %v2538 = vpack.c.bf16 %v2410, %v2410
      %v2539 = vpack.c.bf16 %v2411, %v2411
      %v2540 = vpack.c.bf16 %v2412, %v2412
      %v2541 = vpack.c.bf16 %v2413, %v2413
      %v2542 = vpack.c.bf16 %v2414, %v2414
      %v2543 = vpack.c.bf16 %v2415, %v2415
      %v2544 = vpack.c.bf16 %v2416, %v2416
      %v2545 = vpack.c.bf16 %v2417, %v2417
      %v2546 = vpack.c.bf16 %v2418, %v2418
      %v2547 = vpack.c.bf16 %v2419, %v2419
      %v2548 = vpack.c.bf16 %v2420, %v2420
      %v2549 = vpack.c.bf16 %v2421, %v2421
      %v2550 = vpack.c.bf16 %v2422, %v2422
      %v2551 = vpack.c.bf16 %v2423, %v2423
      %v2552 = vpack.c.bf16 %v2424, %v2424
      %v2553 = vpack.c.bf16 %v2425, %v2425
      %v2554 = vpack.c.bf16 %v2426, %v2426
      %v2555 = vpack.c.bf16 %v2427, %v2427
      %v2556 = vpack.c.bf16 %v2428, %v2428
      %v2557 = vpack.c.bf16 %v2429, %v2429
      %v2558 = vpack.c.bf16 %v2430, %v2430
      %v2559 = vpack.c.bf16 %v2431, %v2431
      %v2560 = vpack.c.bf16 %v2432, %v2432
      %v2561 = vpack.c.bf16 %v2433, %v2433
      %v2562 = vpack.c.bf16 %v2434, %v2434
      %v2563 = vpack.c.bf16 %v2435, %v2435
      %v2564 = vpack.c.bf16 %v2436, %v2436
      %v2565 = vpack.c.bf16 %v2437, %v2437
      %v2566 = vpack.c.bf16 %v2438, %v2438
      %v2567 = vpack.c.bf16 %v2439, %v2439
      %v2568 = vpack.c.bf16 %v2440, %v2440
      %v2569 = vpack.c.bf16 %v2441, %v2441
      %v2570 = vpack.c.bf16 %v2442, %v2442
      %v2571 = vpack.c.bf16 %v2443, %v2443
      %v2572 = vpack.c.bf16 %v2444, %v2444
      %v2573 = vpack.c.bf16 %v2445, %v2445
      %v2574 = vpack.c.bf16 %v2446, %v2446
      %v2575 = vpack.c.bf16 %v2447, %v2447
      %v2576 = vpack.c.bf16 %v2448, %v2448
      %v2577 = vpack.c.bf16 %v2449, %v2449
      %v2578 = vpack.c.bf16 %v2450, %v2450
      %v2579 = vpack.c.bf16 %v2451, %v2451
      %v2580 = vpack.c.bf16 %v2452, %v2452
      %v2581 = vpack.c.bf16 %v2453, %v2453
      %v2582 = vpack.c.bf16 %v2454, %v2454
      %v2583 = vpack.c.bf16 %v2455, %v2455
      %v2584 = vpack.c.bf16 %v2456, %v2456
      %v2585 = vpack.c.bf16 %v2457, %v2457
      %v2586 = vpack.c.bf16 %v2458, %v2458
      %v2587 = vpack.c.bf16 %v2459, %v2459
      %v2588 = vpack.c.bf16 %v2460, %v2460
      %v2589 = vpack.c.bf16 %v2461, %v2461
      %v2590 = vpack.c.bf16 %v2462, %v2462
      %v2591 = vpack.c.bf16 %v2463, %v2463
      %v2592 = vpack.c.bf16 %v2464, %v2464
      %v2593 = vpack.c.bf16 %v2465, %v2465
      %v2594 = vpack.c.bf16 %v2466, %v2466
      %v2595 = vpack.c.bf16 %v2467, %v2467
      %v2596 = vpack.c.bf16 %v2468, %v2468
      %v2597 = vpack.c.bf16 %v2469, %v2469
      %v2598 = vpack.c.bf16 %v2470, %v2470
      %v2599 = vpack.c.bf16 %v2471, %v2471
      %v2600 = vpack.c.bf16 %v2472, %v2472
      %v2601 = vpack.c.bf16 %v2473, %v2473
      %v2602 = vpack.c.bf16 %v2474, %v2474
      %v2603 = vpack.c.bf16 %v2475, %v2475
      %v2604 = vpack.c.bf16 %v2476, %v2476
      %v2605 = vpack.c.bf16 %v2477, %v2477
      %v2606 = vpack.c.bf16 %v2478, %v2478
      %v2607 = vpack.c.bf16 %v2479, %v2479
      %v2608 = vpack.c.bf16 %v2480, %v2480
      %v2609 = vpack.c.bf16 %v2481, %v2481
      %v2610 = vpack.c.bf16 %v2482, %v2482
      %v2611 = vpack.c.bf16 %v2483, %v2483
      %v2612 = vpack.c.bf16 %v2484, %v2484
      %v2613 = vpack.c.bf16 %v2485, %v2485
      %v2614 = vpack.c.bf16 %v2486, %v2486
      %v2615 = vpack.c.bf16 %v2487, %v2487
      %v2616 = vpack.c.bf16 %v2488, %v2488
      %v2617 = vpack.c.bf16 %v2489, %v2489
      %v2618 = vpack.c.bf16 %v2490, %v2490
      %v2619 = vpack.c.bf16 %v2491, %v2491
      %v2620 = vpack.c.bf16 %v2492, %v2492
      %v2621 = vpack.c.bf16 %v2493, %v2493
      %v2622 = vpack.c.bf16 %v2494, %v2494
      %v2623 = vpack.c.bf16 %v2495, %v2495
      %v2624 = vpack.c.bf16 %v2496, %v2496
      %v2625 = vpack.c.bf16 %v2497, %v2497
      %v2626 = vpack.c.bf16 %v2498, %v2498
      %v2627 = vpack.c.bf16 %v2499, %v2499
      %v2628 = vpack.c.bf16 %v2500, %v2500
      %v2629 = vpack.c.bf16 %v2501, %v2501
      %v2630 = vpack.c.bf16 %v2502, %v2502
      %v2631 = vpack.c.bf16 %v2503, %v2503
      %v2632 = vpack.c.bf16 %v2504, %v2504
      %v2633 = vpack.c.bf16 %v2505, %v2505
      %2634 = vst [vmem:[%s282] sm:$0xf] %v2506
      %2635 = vst [vmem:[%s282 + $0x4] sm:$0xf] %v2507
      %2636 = vst [vmem:[%s282 + $0x8] sm:$0xf] %v2508
      %2637 = vst [vmem:[%s282 + $0xc] sm:$0xf] %v2509
      %2638 = vst [vmem:[%s282 + $0x10] sm:$0xf] %v2510
      %2639 = vst [vmem:[%s282 + $0x14] sm:$0xf] %v2511
      %2640 = vst [vmem:[%s282 + $0x18] sm:$0xf] %v2512
      %2641 = vst [vmem:[%s282 + $0x1c] sm:$0xf] %v2513
      %2642 = vst [vmem:[%s282 + $0x20] sm:$0xf] %v2514
      %2643 = vst [vmem:[%s282 + $0x24] sm:$0xf] %v2515
      %2644 = vst [vmem:[%s282 + $0x28] sm:$0xf] %v2516
      %2645 = vst [vmem:[%s282 + $0x2c] sm:$0xf] %v2517
      %2646 = vst [vmem:[%s282 + $0x30] sm:$0xf] %v2518
      %2647 = vst [vmem:[%s282 + $0x34] sm:$0xf] %v2519
      %2648 = vst [vmem:[%s282 + $0x38] sm:$0xf] %v2520
      %2649 = vst [vmem:[%s282 + $0x3c] sm:$0xf] %v2521
      %2650 = vst [vmem:[%s282 + $0x40] sm:$0xf] %v2522
      %2651 = vst [vmem:[%s282 + $0x44] sm:$0xf] %v2523
      %2652 = vst [vmem:[%s282 + $0x48] sm:$0xf] %v2524
      %2653 = vst [vmem:[%s282 + $0x4c] sm:$0xf] %v2525
      %2654 = vst [vmem:[%s282 + $0x50] sm:$0xf] %v2526
      %2655 = vst [vmem:[%s282 + $0x54] sm:$0xf] %v2527
      %2656 = vst [vmem:[%s282 + $0x58] sm:$0xf] %v2528
      %2657 = vst [vmem:[%s282 + $0x5c] sm:$0xf] %v2529
      %2658 = vst [vmem:[%s282 + $0x60] sm:$0xf] %v2530
      %2659 = vst [vmem:[%s282 + $0x64] sm:$0xf] %v2531
      %2660 = vst [vmem:[%s282 + $0x68] sm:$0xf] %v2532
      %2661 = vst [vmem:[%s282 + $0x6c] sm:$0xf] %v2533
      %2662 = vst [vmem:[%s282 + $0x70] sm:$0xf] %v2534
      %2663 = vst [vmem:[%s282 + $0x74] sm:$0xf] %v2535
      %2664 = vst [vmem:[%s282 + $0x78] sm:$0xf] %v2536
      %2665 = vst [vmem:[%s282 + $0x7c] sm:$0xf] %v2537
      %2666 = vst [vmem:[%s282 + $0x80] sm:$0xf] %v2538
      %2667 = vst [vmem:[%s282 + $0x84] sm:$0xf] %v2539
      %2668 = vst [vmem:[%s282 + $0x88] sm:$0xf] %v2540
      %2669 = vst [vmem:[%s282 + $0x8c] sm:$0xf] %v2541
      %2670 = vst [vmem:[%s282 + $0x90] sm:$0xf] %v2542
      %2671 = vst [vmem:[%s282 + $0x94] sm:$0xf] %v2543
      %2672 = vst [vmem:[%s282 + $0x98] sm:$0xf] %v2544
      %2673 = vst [vmem:[%s282 + $0x9c] sm:$0xf] %v2545
      %2674 = vst [vmem:[%s282 + $0xa0] sm:$0xf] %v2546
      %2675 = vst [vmem:[%s282 + $0xa4] sm:$0xf] %v2547
      %2676 = vst [vmem:[%s282 + $0xa8] sm:$0xf] %v2548
      %2677 = vst [vmem:[%s282 + $0xac] sm:$0xf] %v2549
      %2678 = vst [vmem:[%s282 + $0xb0] sm:$0xf] %v2550
      %2679 = vst [vmem:[%s282 + $0xb4] sm:$0xf] %v2551
      %2680 = vst [vmem:[%s282 + $0xb8] sm:$0xf] %v2552
      %2681 = vst [vmem:[%s282 + $0xbc] sm:$0xf] %v2553
      %2682 = vst [vmem:[%s282 + $0xc0] sm:$0xf] %v2554
      %2683 = vst [vmem:[%s282 + $0xc4] sm:$0xf] %v2555
      %2684 = vst [vmem:[%s282 + $0xc8] sm:$0xf] %v2556
      %2685 = vst [vmem:[%s282 + $0xcc] sm:$0xf] %v2557
      %2686 = vst [vmem:[%s282 + $0xd0] sm:$0xf] %v2558
      %2687 = vst [vmem:[%s282 + $0xd4] sm:$0xf] %v2559
      %2688 = vst [vmem:[%s282 + $0xd8] sm:$0xf] %v2560
      %2689 = vst [vmem:[%s282 + $0xdc] sm:$0xf] %v2561
      %2690 = vst [vmem:[%s282 + $0xe0] sm:$0xf] %v2562
      %2691 = vst [vmem:[%s282 + $0xe4] sm:$0xf] %v2563
      %2692 = vst [vmem:[%s282 + $0xe8] sm:$0xf] %v2564
      %2693 = vst [vmem:[%s282 + $0xec] sm:$0xf] %v2565
      %2694 = vst [vmem:[%s282 + $0xf0] sm:$0xf] %v2566
      %2695 = vst [vmem:[%s282 + $0xf4] sm:$0xf] %v2567
      %2696 = vst [vmem:[%s282 + $0xf8] sm:$0xf] %v2568
      %2697 = vst [vmem:[%s282 + $0xfc] sm:$0xf] %v2569
      %2698 = vst [vmem:[%s282 + $0x100] sm:$0xf] %v2570
      %2699 = vst [vmem:[%s282 + $0x104] sm:$0xf] %v2571
      %2700 = vst [vmem:[%s282 + $0x108] sm:$0xf] %v2572
      %2701 = vst [vmem:[%s282 + $0x10c] sm:$0xf] %v2573
      %2702 = vst [vmem:[%s282 + $0x110] sm:$0xf] %v2574
      %2703 = vst [vmem:[%s282 + $0x114] sm:$0xf] %v2575
      %2704 = vst [vmem:[%s282 + $0x118] sm:$0xf] %v2576
      %2705 = vst [vmem:[%s282 + $0x11c] sm:$0xf] %v2577
      %2706 = vst [vmem:[%s282 + $0x120] sm:$0xf] %v2578
      %2707 = vst [vmem:[%s282 + $0x124] sm:$0xf] %v2579
      %2708 = vst [vmem:[%s282 + $0x128] sm:$0xf] %v2580
      %2709 = vst [vmem:[%s282 + $0x12c] sm:$0xf] %v2581
      %2710 = vst [vmem:[%s282 + $0x130] sm:$0xf] %v2582
      %2711 = vst [vmem:[%s282 + $0x134] sm:$0xf] %v2583
      %2712 = vst [vmem:[%s282 + $0x138] sm:$0xf] %v2584
      %2713 = vst [vmem:[%s282 + $0x13c] sm:$0xf] %v2585
      %2714 = vst [vmem:[%s282 + $0x140] sm:$0xf] %v2586
      %2715 = vst [vmem:[%s282 + $0x144] sm:$0xf] %v2587
      %2716 = vst [vmem:[%s282 + $0x148] sm:$0xf] %v2588
      %2717 = vst [vmem:[%s282 + $0x14c] sm:$0xf] %v2589
      %2718 = vst [vmem:[%s282 + $0x150] sm:$0xf] %v2590
      %2719 = vst [vmem:[%s282 + $0x154] sm:$0xf] %v2591
      %2720 = vst [vmem:[%s282 + $0x158] sm:$0xf] %v2592
      %2721 = vst [vmem:[%s282 + $0x15c] sm:$0xf] %v2593
      %2722 = vst [vmem:[%s282 + $0x160] sm:$0xf] %v2594
      %2723 = vst [vmem:[%s282 + $0x164] sm:$0xf] %v2595
      %2724 = vst [vmem:[%s282 + $0x168] sm:$0xf] %v2596
      %2725 = vst [vmem:[%s282 + $0x16c] sm:$0xf] %v2597
      %2726 = vst [vmem:[%s282 + $0x170] sm:$0xf] %v2598
      %2727 = vst [vmem:[%s282 + $0x174] sm:$0xf] %v2599
      %2728 = vst [vmem:[%s282 + $0x178] sm:$0xf] %v2600
      %2729 = vst [vmem:[%s282 + $0x17c] sm:$0xf] %v2601
      %2730 = vst [vmem:[%s282 + $0x180] sm:$0xf] %v2602
      %2731 = vst [vmem:[%s282 + $0x184] sm:$0xf] %v2603
      %2732 = vst [vmem:[%s282 + $0x188] sm:$0xf] %v2604
      %2733 = vst [vmem:[%s282 + $0x18c] sm:$0xf] %v2605
      %2734 = vst [vmem:[%s282 + $0x190] sm:$0xf] %v2606
      %2735 = vst [vmem:[%s282 + $0x194] sm:$0xf] %v2607
      %2736 = vst [vmem:[%s282 + $0x198] sm:$0xf] %v2608
      %2737 = vst [vmem:[%s282 + $0x19c] sm:$0xf] %v2609
      %2738 = vst [vmem:[%s282 + $0x1a0] sm:$0xf] %v2610
      %2739 = vst [vmem:[%s282 + $0x1a4] sm:$0xf] %v2611
      %2740 = vst [vmem:[%s282 + $0x1a8] sm:$0xf] %v2612
      %2741 = vst [vmem:[%s282 + $0x1ac] sm:$0xf] %v2613
      %2742 = vst [vmem:[%s282 + $0x1b0] sm:$0xf] %v2614
      %2743 = vst [vmem:[%s282 + $0x1b4] sm:$0xf] %v2615
      %2744 = vst [vmem:[%s282 + $0x1b8] sm:$0xf] %v2616
      %2745 = vst [vmem:[%s282 + $0x1bc] sm:$0xf] %v2617
      %2746 = vst [vmem:[%s282 + $0x1c0] sm:$0xf] %v2618
      %2747 = vst [vmem:[%s282 + $0x1c4] sm:$0xf] %v2619
      %2748 = vst [vmem:[%s282 + $0x1c8] sm:$0xf] %v2620
      %2749 = vst [vmem:[%s282 + $0x1cc] sm:$0xf] %v2621
      %2750 = vst [vmem:[%s282 + $0x1d0] sm:$0xf] %v2622
      %2751 = vst [vmem:[%s282 + $0x1d4] sm:$0xf] %v2623
      %2752 = vst [vmem:[%s282 + $0x1d8] sm:$0xf] %v2624
      %2753 = vst [vmem:[%s282 + $0x1dc] sm:$0xf] %v2625
      %2754 = vst [vmem:[%s282 + $0x1e0] sm:$0xf] %v2626
      %2755 = vst [vmem:[%s282 + $0x1e4] sm:$0xf] %v2627
      %2756 = vst [vmem:[%s282 + $0x1e8] sm:$0xf] %v2628
      %2757 = vst [vmem:[%s282 + $0x1ec] sm:$0xf] %v2629
      %2758 = vst [vmem:[%s282 + $0x1f0] sm:$0xf] %v2630
      %2759 = vst [vmem:[%s282 + $0x1f4] sm:$0xf] %v2631
      %2760 = vst [vmem:[%s282 + $0x1f8] sm:$0xf] %v2632
      %2761 = vst [vmem:[%s282 + $0x1fc] sm:$0xf] %v2633
      %s2762 = smul.u32 128, %s16
      %p2763 = scmp.lt.s32.totalorder %s2762, 255
      %s2764 = scalar_select %p2763, %s2762, 255
      %s2765 = smul.addr %s2764, 4
      %s2766 = scalar_lea.vmem %s5, %s2765
      // Predicated region
      $region41: #{convt_block.3} parent=39 // pred_check
        %p2767 = pneg %p153
      $region42: #{convt_block.3} parent=39 // pred_check_branch
        %2769 = sbr.rel (%p2767) target = $region44
      $region43: #{convt_block.3} parent=39 // pred_region
        %s2770 = smul.u32 128, %s16
      $region44: #{convt_block.3} parent=39 // pred_fallthru
        _
    $region40: #{convt_block.3} parent=5 // pred_fallthru
      _
    %p2771 = scmp.le.s32.totalorder 2, %s11
    // Predicated region
    $region45: #{convt_block.3} parent=5 // pred_check
      %p2772 = pneg %p2771
    $region46: #{convt_block.3} parent=5 // pred_check_branch
      %2774 = sbr.rel (%p2772) target = $region48
    $region47: #{convt_block.3} parent=5 // pred_region
      %s2775 = ssub.s32 %s11, 2
      // Predicated region
      $region49: #{convt_block.3} parent=47 // pred_check
        %p2776 = pneg %p159
      $region50: #{convt_block.3} parent=47 // pred_check_branch
        %2778 = sbr.rel (%p2776) target = $region52
      $region51: #{convt_block.3} parent=47 // pred_region
        %s2779 = smul.u32 128, %s17
        %p2780 = scmp.lt.s32.totalorder %s2779, 255
        %s2781 = scalar_select %p2780, %s2779, 255
        %s2782 = smul.addr %s2781, 4
        %s2783 = scalar_lea.vmem %s5, %s2782
      $region52: #{convt_block.3} parent=47 // pred_fallthru
        _
    $region48: #{convt_block.3} parent=5 // pred_fallthru
      _
  $region6: #{convt_block.3} parent=0 // loop_footer
    %s15 = sadd.s32 1, %s11
  $region7: #{convt_block.3} parent=0 // loop_footer_branch
    %10 = sbr.rel target = $region3
  $region8: #{convt_block.3} parent=0 // loop_exit
    _

</llo_original>
